<compile_context>
chip_gen: v7x
topology: tpu7x:2x2x1
jax: 0.10.0
libtpu: 0.0.40
codegen_flags: <defaults>
</compile_context>

<pallas_src>
import jax
import jax.numpy as jnp
from jax.experimental import pallas as pl
from jax.experimental.pallas import tpu as pltpu


# ----------------------------------------------------------------------------
# VMEM budget / tile selection
# ----------------------------------------------------------------------------
def _vmem_budget():
    """(budget_bytes, capacity_bytes) — budget ~60% of physical VMEM."""
    cap = 64 << 20                       # v7x-safe fallback (64 MiB physical)
    try:
        info_fn = getattr(pltpu, "get_tpu_info", None)
        if info_fn is not None:
            cap = int(getattr(info_fn(), "vmem_capacity_bytes", cap))
    except Exception:
        pass
    budget = min((cap * 3) // 5, 96 << 20)
    return budget, cap


def _pick_tile(extent, target):
    """Largest multiple-of-128 divisor of `extent` (a multiple of 128) <= target."""
    if extent <= target:
        return extent
    units = extent // 128
    best = 1
    for q in range(1, units + 1):
        if units % q == 0 and 128 * q <= target:
            best = q
    return 128 * best


def _choose_tiles(np_, m, fin, out_bytes, budget):
    """Pick (tn, tk, vmem_need) for the fused layer kernel, fitting `budget`."""
    tn_t, tk_t = 4096, 1024
    while True:
        tn = _pick_tile(np_, tn_t)
        tk = _pick_tile(np_, tk_t)
        need = (2 * 2 * (m * fin + fin * np_)       # W^T, X^T resident (bf16, x2 bufs)
                + 2 * 4 * np_                        # g row (f32, x2 bufs)
                + m * np_ * (2 + 4)                  # xw (bf16) + t (f32) scratch
                + m * tn * 4                         # f32 accumulator
                + 2 * 2 * 2 * tk * tn                # PhiInv^T + Phi^T tiles, x2 bufs, bf16
                + 2 * m * tn * out_bytes)            # output tile, x2 bufs
        if need <= budget or (tn_t <= 128 and tk_t <= 128):
            return tn, tk, need
        if tn_t >= 2 * tk_t:
            tn_t = max(tn_t // 2, 128)
        else:
            tk_t = max(tk_t // 2, 128)


# ----------------------------------------------------------------------------
# Fused per-layer kernel:
#   out[M, Np] = epilogue( (g_row * ((W^T @ In^T) @ PhiInv^T)) @ Phi^T )
# Grid = (phase=2, Np // tn, Np // tk)
# ----------------------------------------------------------------------------
def _make_fused_layer_kernel(tn, tk, epilogue):
    def kernel(w_ref, in_ref, pinv_ref, phi_ref, g_ref, o_ref,
               xw_ref, t_ref, acc_ref):
        p = pl.program_id(0)
        j = pl.program_id(1)
        k = pl.program_id(2)
        last_k = pl.num_programs(2) - 1

        # One-time tiny weight matmul (X W)^T = W^T @ X^T into resident VMEM.
        @pl.when((p == 0) & (j == 0) & (k == 0))
        def _():
            xw_ref[...] = jnp.dot(
                w_ref[...], in_ref[...],
                preferred_element_type=jnp.float32).astype(xw_ref.dtype)

        @pl.when(k == 0)
        def _():
            acc_ref[...] = jnp.zeros_like(acc_ref)

        ks = pl.multiple_of(k * tk, 128)
        js = pl.multiple_of(j * tn, 128)

        # Phase A: acc += (X W)^T[:, k-tile] @ PhiInv^T[k-tile, j-tile]
        @pl.when(p == 0)
        def _():
            acc_ref[...] += jnp.dot(
                xw_ref[:, pl.ds(ks, tk)], pinv_ref[...],
                preferred_element_type=jnp.float32)

        # Phase A finalize: t[:, j-tile] = g[j-tile] * acc   (stays in VMEM, f32)
        @pl.when((p == 0) & (k == last_k))
        def _():
            t_ref[:, pl.ds(js, tn)] = g_ref[:, pl.ds(js, tn)] * acc_ref[...]

        # Phase B: acc += t[:, k-tile] @ Phi^T[k-tile, j-tile]
        @pl.when(p == 1)
        def _():
            lhs = t_ref[:, pl.ds(ks, tk)].astype(phi_ref.dtype)
            acc_ref[...] += jnp.dot(lhs, phi_ref[...],
                                    preferred_element_type=jnp.float32)

        # Phase B finalize: epilogue + lane-dense store of the output tile.
        @pl.when((p == 1) & (k == last_k))
        def _():
            r = acc_ref[...]
            if epilogue == "relu":
                r = jnp.maximum(r, 0.0)
            elif epilogue == "log_softmax":
                # class dim is axis 0 in the transposed layout; tile-local.
                mx = jnp.max(r, axis=0, keepdims=True)
                z = r - mx
                r = z - jnp.log(jnp.sum(jnp.exp(z), axis=0, keepdims=True))
            o_ref[...] = r.astype(o_ref.dtype)

    return kernel


def wavelet_layer(w_t, in_t, phi_inv_t, phi_t, g_row, *, epilogue, out_dtype):
    """One full graph-wavelet layer (transposed layout) in a single pallas_call."""
    m, fin = w_t.shape
    fin2, np_ = in_t.shape
    assert fin == fin2
    assert phi_inv_t.shape == (np_, np_) and phi_t.shape == (np_, np_)
    assert g_row.shape == (1, np_)

    out_bytes = jnp.dtype(out_dtype).itemsize
    budget, _cap = _vmem_budget()
    tn, tk, need = _choose_tiles(np_, m, fin, out_bytes, budget)
    nj, nk = np_ // tn, np_ // tk
    grid = (2, nj, nk)
    vmem_limit = int(min(max(2 * need, 32 << 20), max(budget, need)))

    kernel = _make_fused_layer_kernel(tn, tk, epilogue)

    return pl.pallas_call(
        kernel,
        out_shape=jax.ShapeDtypeStruct((m, np_), out_dtype),
        grid_spec=pltpu.PrefetchScalarGridSpec(
            num_scalar_prefetch=0,
            grid=grid,
            in_specs=[
                # W^T : fully resident
                pl.BlockSpec((m, fin), lambda p, j, k: (0, 0)),
                # X^T (or H1^T) : fully resident
                pl.BlockSpec((fin, np_), lambda p, j, k: (0, 0)),
                # PhiInv^T : streamed in phase 0, frozen at (0,0) in phase 1
                pl.BlockSpec((tk, tn),
                             lambda p, j, k: (k * (1 - p), j * (1 - p))),
                # Phi^T : frozen at (0,0) in phase 0, streamed in phase 1
                pl.BlockSpec((tk, tn), lambda p, j, k: (k * p, j * p)),
                # g row : fully resident, sliced in-kernel
                pl.BlockSpec((1, np_), lambda p, j, k: (0, 0)),
            ],
            out_specs=pl.BlockSpec((m, tn), lambda p, j, k: (0, j * p)),
            scratch_shapes=[
                pltpu.VMEM((m, np_), jnp.bfloat16),   # (X W)^T
                pltpu.VMEM((m, np_), jnp.float32),    # t = g*(PhiInv X W)^T
                pltpu.VMEM((m, tn), jnp.float32),     # per-tile accumulator
            ]),
        compiler_params=pltpu.CompilerParams(
            # Phase 1 depends on all of phase 0's t scratch -> no parallel axis.
            dimension_semantics=("arbitrary", "arbitrary", "arbitrary"),
            vmem_limit_bytes=vmem_limit),
    )(w_t, in_t, phi_inv_t, phi_t, g_row)


# ----------------------------------------------------------------------------
# GWNN forward: two fused layer calls in transposed layout.
# ----------------------------------------------------------------------------
def _pad_axis(a, axis, target):
    if a.shape[axis] == target:
        return a
    pads = [(0, 0)] * a.ndim
    pads[axis] = (0, target - a.shape[axis])
    return jnp.pad(a, pads)


def prepare_gwnn_operands(phi, phi_inv, x, w1, g1, w2, g2):
    """One-time layout plumbing (transpose / pad / bf16 cast), hoisted out of
    the forward so repeated calls never re-pay the O(N^2) Phi/PhiInv reformat."""
    N = x.shape[0]
    n_pad = ((N + 127) // 128) * 128
    bf = jnp.bfloat16
    phi_t = _pad_axis(_pad_axis(phi.T.astype(bf), 0, n_pad), 1, n_pad)
    phi_inv_t = _pad_axis(_pad_axis(phi_inv.T.astype(bf), 0, n_pad), 1, n_pad)
    x_t = _pad_axis(x.T.astype(bf), 1, n_pad)                 # [F, Np]
    w1_t = w1.T.astype(bf)                                    # [K, F]
    w2_t = w2.T.astype(bf)                                    # [C, K]
    g1_row = _pad_axis(g1.reshape(1, N).astype(jnp.float32), 1, n_pad)
    g2_row = _pad_axis(g2.reshape(1, N).astype(jnp.float32), 1, n_pad)
    return phi_t, phi_inv_t, x_t, w1_t, g1_row, w2_t, g2_row


def gwnn_forward(phi_t, phi_inv_t, x_t, w1_t, g1_row, w2_t, g2_row, *, n_nodes):
    # Layer 1 (SparseGraphWaveletLayer): relu(Phi diag(g1) PhiInv (X W1))^T
    h1_t = wavelet_layer(w1_t, x_t, phi_inv_t, phi_t, g1_row,
                         epilogue="relu", out_dtype=jnp.bfloat16)
    # TODO(synk): inter-layer dropout is identity in eval mode.

    # Layer 2 (DenseGraphWaveletLayer) + log_softmax over the class dim.
    out_t = wavelet_layer(w2_t, h1_t, phi_inv_t, phi_t, g2_row,
                          epilogue="log_softmax", out_dtype=jnp.float32)
    return out_t[:, :n_nodes].T                               # [N, C]


# ----------------------------------------------------------------------------
# References and demo
# ----------------------------------------------------------------------------
def xavier_uniform(key, fan_in, fan_out):
    bound = (6.0 / (fan_in + fan_out)) ** 0.5
    return jax.random.uniform(key, (fan_in, fan_out), jnp.float32,
                              minval=-bound, maxval=bound)


def reference_forward_f32(phi, phi_inv, x, w1, g1, w2, g2):
    h1 = jax.nn.relu(phi @ (g1 * (phi_inv @ (x @ w1))))
    h2 = phi @ (g2 * (phi_inv @ (h1 @ w2)))
    return jax.nn.log_softmax(h2, axis=1)


def reference_forward_bf16(phi, phi_inv, x, w1, g1, w2, g2):
    """Mirror of the kernel precision policy (bf16 MXU inputs, f32 accum,
    f32-resident t, bf16 inter-layer activations)."""
    bf = jnp.bfloat16

    def mm(a, b):
        return jnp.dot(a.astype(bf), b.astype(bf),
                       preferred_element_type=jnp.float32)

    xw1 = mm(x, w1).astype(bf)
    t1 = g1 * mm(phi_inv, xw1)                    # f32
    h1 = jnp.maximum(mm(phi, t1), 0.0).astype(bf)
    xw2 = mm(h1, w2).astype(bf)
    t2 = g2 * mm(phi_inv, xw2)                    # f32
    return jax.nn.log_softmax(mm(phi, t2), axis=1)


if __name__ == "__main__":
    # Small shapes consistent with the module: N nodes (non-multiple of 128 to
    # exercise lane padding), F features, K filters, C classes.
    N, F, K, C = 300, 64, 32, 16

    key = jax.random.PRNGKey(0)
    k_phi, k_phiinv, k_x, k_w1, k_g1, k_w2, k_g2 = jax.random.split(key, 7)

    # Dense stand-ins for the sparse wavelet / inverse-wavelet matrices and
    # the sparse feature matrix (glue-side densification).
    phi = jax.random.normal(k_phi, (N, N), jnp.float32) * 0.05 + jnp.eye(N)
    phi_inv = jax.random.normal(k_phiinv, (N, N), jnp.float32) * 0.05 + jnp.eye(N)
    x = jax.random.normal(k_x, (N, F), jnp.float32)

    # Parameters, initialized like GraphWaveletLayer.init_parameters().
    w1 = xavier_uniform(k_w1, F, K)
    g1 = jax.random.uniform(k_g1, (N, 1), jnp.float32, minval=0.9, maxval=1.1)
    w2 = xavier_uniform(k_w2, K, C)
    g2 = jax.random.uniform(k_g2, (N, 1), jnp.float32, minval=0.9, maxval=1.1)

    # One-time transpose/pad/cast, reused across forward calls.
    prepared = prepare_gwnn_operands(phi, phi_inv, x, w1, g1, w2, g2)

    fwd = jax.jit(gwnn_forward, static_argnames=("n_nodes",))
    out = jax.block_until_ready(fwd(*prepared, n_nodes=N))

    ref_bf16 = reference_forward_bf16(phi, phi_inv, x, w1, g1, w2, g2)
    ref_f32 = reference_forward_f32(phi, phi_inv, x, w1, g1, w2, g2)

    assert out.shape == (N, C)
    assert bool(jnp.all(jnp.isfinite(out)))
    assert bool(jnp.allclose(out, ref_bf16, atol=3e-2, rtol=3e-2)), \
        "mismatch vs precision-matched (bf16) JAX reference"
    assert float(jnp.max(jnp.abs(out - ref_f32))) < 0.35, \
        "mismatch vs float32 JAX reference"

    print("KERNEL_OK")
</pallas_src>

<mosaic_0001>
module attributes {stable_mosaic.version = 11 : i64} {
  func.func @kernel(%arg0: i32, %arg1: i32, %arg2: i32, %arg3: memref<16x32xbf16, #tpu.memory_space<vmem>>, %arg4: memref<32x384xbf16, #tpu.memory_space<vmem>>, %arg5: memref<384x384xbf16, #tpu.memory_space<vmem>>, %arg6: memref<384x384xbf16, #tpu.memory_space<vmem>>, %arg7: memref<1x384xf32, #tpu.memory_space<vmem>>, %arg8: memref<16x384xf32, #tpu.memory_space<vmem>>, %arg9: memref<16x384xbf16, #tpu.memory_space<vmem>>, %arg10: memref<16x384xf32, #tpu.memory_space<vmem>>, %arg11: memref<16x384xf32, #tpu.memory_space<vmem>>) attributes {dimension_semantics = [#tpu.dimension_semantics<arbitrary>, #tpu.dimension_semantics<arbitrary>, #tpu.dimension_semantics<arbitrary>], iteration_bounds = array<i64: 2, 1, 1>, scalar_prefetch = 0 : i64, scratch_operands = 3 : i64, tpu.core_type = #tpu.core_type<tc>, window_params = [{pipeline_mode = #tpu.pipeline_mode<synchronous>, transform_indices = @transform_0, window_bounds = array<i64: 16, 32>}, {pipeline_mode = #tpu.pipeline_mode<synchronous>, transform_indices = @transform_1, window_bounds = array<i64: 32, 384>}, {transform_indices = @transform_2, window_bounds = array<i64: 384, 384>}, {transform_indices = @transform_3, window_bounds = array<i64: 384, 384>}, {pipeline_mode = #tpu.pipeline_mode<synchronous>, transform_indices = @transform_4, window_bounds = array<i64: 1, 384>}, {transform_indices = @transform_5, window_bounds = array<i64: 16, 384>}]} {
    %c0_i32 = arith.constant 0 : i32
    %0 = arith.cmpi eq, %arg0, %c0_i32 : i32
    %c0_i32_0 = arith.constant 0 : i32
    %1 = arith.cmpi eq, %arg1, %c0_i32_0 : i32
    %2 = arith.andi %0, %1 : i1
    %c0_i32_1 = arith.constant 0 : i32
    %3 = arith.cmpi eq, %arg2, %c0_i32_1 : i32
    %4 = arith.andi %2, %3 : i1
    %5 = arith.extui %4 : i1 to i32
    %c0_i32_2 = arith.constant 0 : i32
    %6 = arith.cmpi ne, %5, %c0_i32_2 : i32
    scf.if %6 {
      %c0 = arith.constant 0 : index
      %c0_15 = arith.constant 0 : index
      %30 = vector.load %arg3[%c0, %c0_15] : memref<16x32xbf16, #tpu.memory_space<vmem>>, vector<16x32xbf16>
      %c0_16 = arith.constant 0 : index
      %c0_17 = arith.constant 0 : index
      %31 = vector.load %arg4[%c0_16, %c0_17] : memref<32x384xbf16, #tpu.memory_space<vmem>>, vector<32x384xbf16>
      %cst = arith.constant dense<0.000000e+00> : vector<16x384xf32>
      %32 = tpu.matmul %30, %31, %cst {dimension_numbers = #tpu.dot_dimension_numbers<[1], [0], [0], [1], [0, 0, 1, 1], [], []>} : vector<16x32xbf16>, vector<32x384xbf16>, vector<16x384xf32> -> vector<16x384xf32>
      %33 = arith.truncf %32 : vector<16x384xf32> to vector<16x384xbf16>
      %c0_18 = arith.constant 0 : index
      %c0_19 = arith.constant 0 : index
      %34 = vector.load %arg9[%c0_18, %c0_19] : memref<16x384xbf16, #tpu.memory_space<vmem>>, vector<16x384xbf16>
      tpu.vector_store %arg9[%c0_18, %c0_19], %33 {strides = array<i32>} : memref<16x384xbf16, #tpu.memory_space<vmem>>, vector<16x384xbf16>,
    } else {
    }
    %c0_i32_3 = arith.constant 0 : i32
    %7 = arith.cmpi eq, %arg2, %c0_i32_3 : i32
    %8 = arith.extui %7 : i1 to i32
    %c0_i32_4 = arith.constant 0 : i32
    %9 = arith.cmpi ne, %8, %c0_i32_4 : i32
    scf.if %9 {
      %cst = arith.constant 0.000000e+00 : f32
      %30 = vector.broadcast %cst : f32 to vector<16x384xf32>
      %c0 = arith.constant 0 : index
      %c0_15 = arith.constant 0 : index
      %31 = vector.load %arg11[%c0, %c0_15] : memref<16x384xf32, #tpu.memory_space<vmem>>, vector<16x384xf32>
      tpu.vector_store %arg11[%c0, %c0_15], %30 {strides = array<i32>} : memref<16x384xf32, #tpu.memory_space<vmem>>, vector<16x384xf32>,
    } else {
    }
    %c384_i32 = arith.constant 384 : i32
    %10 = arith.muli %arg2, %c384_i32 : i32
    %11 = tpu.assume_multiple %10, 128 : i32
    %c384_i32_5 = arith.constant 384 : i32
    %12 = arith.muli %arg1, %c384_i32_5 : i32
    %13 = tpu.assume_multiple %12, 128 : i32
    %c0_i32_6 = arith.constant 0 : i32
    %14 = arith.cmpi eq, %arg0, %c0_i32_6 : i32
    %15 = arith.extui %14 : i1 to i32
    %c0_i32_7 = arith.constant 0 : i32
    %16 = arith.cmpi ne, %15, %c0_i32_7 : i32
    scf.if %16 {
      %c0 = arith.constant 0 : index
      %c0_15 = arith.constant 0 : index
      %30 = vector.load %arg11[%c0, %c0_15] : memref<16x384xf32, #tpu.memory_space<vmem>>, vector<16x384xf32>
      %c0_16 = arith.constant 0 : index
      %31 = arith.index_cast %11 : i32 to index
      %32 = vector.load %arg9[%c0_16, %31] : memref<16x384xbf16, #tpu.memory_space<vmem>>, vector<16x384xbf16>
      %c0_17 = arith.constant 0 : index
      %c0_18 = arith.constant 0 : index
      %33 = vector.load %arg5[%c0_17, %c0_18] : memref<384x384xbf16, #tpu.memory_space<vmem>>, vector<384x384xbf16>
      %cst = arith.constant dense<0.000000e+00> : vector<16x384xf32>
      %34 = tpu.matmul %32, %33, %cst {dimension_numbers = #tpu.dot_dimension_numbers<[1], [0], [0], [1], [0, 0, 1, 1], [], []>} : vector<16x384xbf16>, vector<384x384xbf16>, vector<16x384xf32> -> vector<16x384xf32>
      %35 = arith.addf %30, %34 : vector<16x384xf32>
      %c0_19 = arith.constant 0 : index
      %c0_20 = arith.constant 0 : index
      %36 = vector.load %arg11[%c0_19, %c0_20] : memref<16x384xf32, #tpu.memory_space<vmem>>, vector<16x384xf32>
      tpu.vector_store %arg11[%c0_19, %c0_20], %35 {strides = array<i32>} : memref<16x384xf32, #tpu.memory_space<vmem>>, vector<16x384xf32>,
    } else {
    }
    %c0_i32_8 = arith.constant 0 : i32
    %17 = arith.cmpi eq, %arg0, %c0_i32_8 : i32
    %c0_i32_9 = arith.constant 0 : i32
    %18 = arith.cmpi eq, %arg2, %c0_i32_9 : i32
    %19 = arith.andi %17, %18 : i1
    %20 = arith.extui %19 : i1 to i32
    %c0_i32_10 = arith.constant 0 : i32
    %21 = arith.cmpi ne, %20, %c0_i32_10 : i32
    scf.if %21 {
      %c0 = arith.constant 0 : index
      %30 = arith.index_cast %13 : i32 to index
      %31 = vector.load %arg7[%c0, %30] : memref<1x384xf32, #tpu.memory_space<vmem>>, vector<1x384xf32>
      %c0_15 = arith.constant 0 : index
      %c0_16 = arith.constant 0 : index
      %32 = vector.load %arg11[%c0_15, %c0_16] : memref<16x384xf32, #tpu.memory_space<vmem>>, vector<16x384xf32>
      %33 = vector.broadcast %31 : vector<1x384xf32> to vector<16x384xf32>
      %34 = arith.mulf %33, %32 : vector<16x384xf32>
      %c0_17 = arith.constant 0 : index
      %35 = arith.index_cast %13 : i32 to index
      %36 = vector.load %arg10[%c0_17, %35] : memref<16x384xf32, #tpu.memory_space<vmem>>, vector<16x384xf32>
      tpu.vector_store %arg10[%c0_17, %35], %34 {strides = array<i32>} : memref<16x384xf32, #tpu.memory_space<vmem>>, vector<16x384xf32>,
    } else {
    }
    %c1_i32 = arith.constant 1 : i32
    %22 = arith.cmpi eq, %arg0, %c1_i32 : i32
    %23 = arith.extui %22 : i1 to i32
    %c0_i32_11 = arith.constant 0 : i32
    %24 = arith.cmpi ne, %23, %c0_i32_11 : i32
    scf.if %24 {
      %c0 = arith.constant 0 : index
      %30 = arith.index_cast %11 : i32 to index
      %31 = vector.load %arg10[%c0, %30] : memref<16x384xf32, #tpu.memory_space<vmem>>, vector<16x384xf32>
      %32 = arith.truncf %31 : vector<16x384xf32> to vector<16x384xbf16>
      %c0_15 = arith.constant 0 : index
      %c0_16 = arith.constant 0 : index
      %33 = vector.load %arg11[%c0_15, %c0_16] : memref<16x384xf32, #tpu.memory_space<vmem>>, vector<16x384xf32>
      %c0_17 = arith.constant 0 : index
      %c0_18 = arith.constant 0 : index
      %34 = vector.load %arg6[%c0_17, %c0_18] : memref<384x384xbf16, #tpu.memory_space<vmem>>, vector<384x384xbf16>
      %cst = arith.constant dense<0.000000e+00> : vector<16x384xf32>
      %35 = tpu.matmul %32, %34, %cst {dimension_numbers = #tpu.dot_dimension_numbers<[1], [0], [0], [1], [0, 0, 1, 1], [], []>} : vector<16x384xbf16>, vector<384x384xbf16>, vector<16x384xf32> -> vector<16x384xf32>
      %36 = arith.addf %33, %35 : vector<16x384xf32>
      %c0_19 = arith.constant 0 : index
      %c0_20 = arith.constant 0 : index
      %37 = vector.load %arg11[%c0_19, %c0_20] : memref<16x384xf32, #tpu.memory_space<vmem>>, vector<16x384xf32>
      tpu.vector_store %arg11[%c0_19, %c0_20], %36 {strides = array<i32>} : memref<16x384xf32, #tpu.memory_space<vmem>>, vector<16x384xf32>,
    } else {
    }
    %c1_i32_12 = arith.constant 1 : i32
    %25 = arith.cmpi eq, %arg0, %c1_i32_12 : i32
    %c0_i32_13 = arith.constant 0 : i32
    %26 = arith.cmpi eq, %arg2, %c0_i32_13 : i32
    %27 = arith.andi %25, %26 : i1
    %28 = arith.extui %27 : i1 to i32
    %c0_i32_14 = arith.constant 0 : i32
    %29 = arith.cmpi ne, %28, %c0_i32_14 : i32
    scf.if %29 {
      %c0 = arith.constant 0 : index
      %c0_15 = arith.constant 0 : index
      %30 = vector.load %arg11[%c0, %c0_15] : memref<16x384xf32, #tpu.memory_space<vmem>>, vector<16x384xf32>
      %cst = arith.constant dense<0xFF800000> : vector<384xf32>
      %31 = vector.multi_reduction <maximumf>, %30, %cst [0] : vector<16x384xf32> to vector<384xf32>
      %32 = vector.shape_cast %31 : vector<384xf32> to vector<1x384xf32>
      %33 = vector.broadcast %32 : vector<1x384xf32> to vector<16x384xf32>
      %34 = arith.subf %30, %33 : vector<16x384xf32>
      %35 = math.exp %34 : vector<16x384xf32>
      %cst_16 = arith.constant dense<0.000000e+00> : vector<384xf32>
      %36 = vector.multi_reduction <add>, %35, %cst_16 [0] : vector<16x384xf32> to vector<384xf32>
      %37 = vector.shape_cast %36 : vector<384xf32> to vector<1x384xf32>
      %38 = math.log %37 : vector<1x384xf32>
      %39 = vector.broadcast %38 : vector<1x384xf32> to vector<16x384xf32>
      %40 = arith.subf %34, %39 : vector<16x384xf32>
      %c0_17 = arith.constant 0 : index
      %c0_18 = arith.constant 0 : index
      %41 = vector.load %arg8[%c0_17, %c0_18] : memref<16x384xf32, #tpu.memory_space<vmem>>, vector<16x384xf32>
      tpu.vector_store %arg8[%c0_17, %c0_18], %40 {strides = array<i32>} : memref<16x384xf32, #tpu.memory_space<vmem>>, vector<16x384xf32>,
    } else {
    }
    return
  }
  func.func @transform_0(%arg0: i32, %arg1: i32, %arg2: i32) -> (i32, i32) {
    %c0_i32 = arith.constant 0 : i32
    %c0_i32_0 = arith.constant 0 : i32
    %c0_i32_1 = arith.constant 0 : i32
    return %c0_i32, %c0_i32_0 : i32, i32
  }
  func.func @transform_1(%arg0: i32, %arg1: i32, %arg2: i32) -> (i32, i32) {
    %c0_i32 = arith.constant 0 : i32
    %c0_i32_0 = arith.constant 0 : i32
    %c0_i32_1 = arith.constant 0 : i32
    return %c0_i32, %c0_i32_0 : i32, i32
  }
  func.func @transform_2(%arg0: i32, %arg1: i32, %arg2: i32) -> (i32, i32) {
    %c1_i32 = arith.constant 1 : i32
    %0 = arith.subi %c1_i32, %arg0 : i32
    %1 = arith.muli %arg2, %0 : i32
    %c1_i32_0 = arith.constant 1 : i32
    %2 = arith.subi %c1_i32_0, %arg0 : i32
    %3 = arith.muli %arg1, %2 : i32
    %c0_i32 = arith.constant 0 : i32
    return %1, %3 : i32, i32
  }
  func.func @transform_3(%arg0: i32, %arg1: i32, %arg2: i32) -> (i32, i32) {
    %0 = arith.muli %arg2, %arg0 : i32
    %1 = arith.muli %arg1, %arg0 : i32
    %c0_i32 = arith.constant 0 : i32
    return %0, %1 : i32, i32
  }
  func.func @transform_4(%arg0: i32, %arg1: i32, %arg2: i32) -> (i32, i32) {
    %c0_i32 = arith.constant 0 : i32
    %c0_i32_0 = arith.constant 0 : i32
    %c0_i32_1 = arith.constant 0 : i32
    return %c0_i32, %c0_i32_0 : i32, i32
  }
  func.func @transform_5(%arg0: i32, %arg1: i32, %arg2: i32) -> (i32, i32) {
    %0 = arith.muli %arg1, %arg0 : i32
    %c0_i32 = arith.constant 0 : i32
    %c0_i32_0 = arith.constant 0 : i32
    return %c0_i32, %0 : i32, i32
  }
}

module attributes {stable_mosaic.version = 11 : i64} {
  func.func @kernel(%arg0: i32, %arg1: i32, %arg2: i32, %arg3: memref<32x64xbf16, #tpu.memory_space<vmem>>, %arg4: memref<64x384xbf16, #tpu.memory_space<vmem>>, %arg5: memref<384x384xbf16, #tpu.memory_space<vmem>>, %arg6: memref<384x384xbf16, #tpu.memory_space<vmem>>, %arg7: memref<1x384xf32, #tpu.memory_space<vmem>>, %arg8: memref<32x384xbf16, #tpu.memory_space<vmem>>, %arg9: memref<32x384xbf16, #tpu.memory_space<vmem>>, %arg10: memref<32x384xf32, #tpu.memory_space<vmem>>, %arg11: memref<32x384xf32, #tpu.memory_space<vmem>>) attributes {dimension_semantics = [#tpu.dimension_semantics<arbitrary>, #tpu.dimension_semantics<arbitrary>, #tpu.dimension_semantics<arbitrary>], iteration_bounds = array<i64: 2, 1, 1>, scalar_prefetch = 0 : i64, scratch_operands = 3 : i64, tpu.core_type = #tpu.core_type<tc>, window_params = [{pipeline_mode = #tpu.pipeline_mode<synchronous>, transform_indices = @transform_0, window_bounds = array<i64: 32, 64>}, {pipeline_mode = #tpu.pipeline_mode<synchronous>, transform_indices = @transform_1, window_bounds = array<i64: 64, 384>}, {transform_indices = @transform_2, window_bounds = array<i64: 384, 384>}, {transform_indices = @transform_3, window_bounds = array<i64: 384, 384>}, {pipeline_mode = #tpu.pipeline_mode<synchronous>, transform_indices = @transform_4, window_bounds = array<i64: 1, 384>}, {transform_indices = @transform_5, window_bounds = array<i64: 32, 384>}]} {
    %c0_i32 = arith.constant 0 : i32
    %0 = arith.cmpi eq, %arg0, %c0_i32 : i32
    %c0_i32_0 = arith.constant 0 : i32
    %1 = arith.cmpi eq, %arg1, %c0_i32_0 : i32
    %2 = arith.andi %0, %1 : i1
    %c0_i32_1 = arith.constant 0 : i32
    %3 = arith.cmpi eq, %arg2, %c0_i32_1 : i32
    %4 = arith.andi %2, %3 : i1
    %5 = arith.extui %4 : i1 to i32
    %c0_i32_2 = arith.constant 0 : i32
    %6 = arith.cmpi ne, %5, %c0_i32_2 : i32
    scf.if %6 {
      %c0 = arith.constant 0 : index
      %c0_15 = arith.constant 0 : index
      %30 = vector.load %arg3[%c0, %c0_15] : memref<32x64xbf16, #tpu.memory_space<vmem>>, vector<32x64xbf16>
      %c0_16 = arith.constant 0 : index
      %c0_17 = arith.constant 0 : index
      %31 = vector.load %arg4[%c0_16, %c0_17] : memref<64x384xbf16, #tpu.memory_space<vmem>>, vector<64x384xbf16>
      %cst = arith.constant dense<0.000000e+00> : vector<32x384xf32>
      %32 = tpu.matmul %30, %31, %cst {dimension_numbers = #tpu.dot_dimension_numbers<[1], [0], [0], [1], [0, 0, 1, 1], [], []>} : vector<32x64xbf16>, vector<64x384xbf16>, vector<32x384xf32> -> vector<32x384xf32>
      %33 = arith.truncf %32 : vector<32x384xf32> to vector<32x384xbf16>
      %c0_18 = arith.constant 0 : index
      %c0_19 = arith.constant 0 : index
      %34 = vector.load %arg9[%c0_18, %c0_19] : memref<32x384xbf16, #tpu.memory_space<vmem>>, vector<32x384xbf16>
      tpu.vector_store %arg9[%c0_18, %c0_19], %33 {strides = array<i32>} : memref<32x384xbf16, #tpu.memory_space<vmem>>, vector<32x384xbf16>,
    } else {
    }
    %c0_i32_3 = arith.constant 0 : i32
    %7 = arith.cmpi eq, %arg2, %c0_i32_3 : i32
    %8 = arith.extui %7 : i1 to i32
    %c0_i32_4 = arith.constant 0 : i32
    %9 = arith.cmpi ne, %8, %c0_i32_4 : i32
    scf.if %9 {
      %cst = arith.constant 0.000000e+00 : f32
      %30 = vector.broadcast %cst : f32 to vector<32x384xf32>
      %c0 = arith.constant 0 : index
      %c0_15 = arith.constant 0 : index
      %31 = vector.load %arg11[%c0, %c0_15] : memref<32x384xf32, #tpu.memory_space<vmem>>, vector<32x384xf32>
      tpu.vector_store %arg11[%c0, %c0_15], %30 {strides = array<i32>} : memref<32x384xf32, #tpu.memory_space<vmem>>, vector<32x384xf32>,
    } else {
    }
    %c384_i32 = arith.constant 384 : i32
    %10 = arith.muli %arg2, %c384_i32 : i32
    %11 = tpu.assume_multiple %10, 128 : i32
    %c384_i32_5 = arith.constant 384 : i32
    %12 = arith.muli %arg1, %c384_i32_5 : i32
    %13 = tpu.assume_multiple %12, 128 : i32
    %c0_i32_6 = arith.constant 0 : i32
    %14 = arith.cmpi eq, %arg0, %c0_i32_6 : i32
    %15 = arith.extui %14 : i1 to i32
    %c0_i32_7 = arith.constant 0 : i32
    %16 = arith.cmpi ne, %15, %c0_i32_7 : i32
    scf.if %16 {
      %c0 = arith.constant 0 : index
      %c0_15 = arith.constant 0 : index
      %30 = vector.load %arg11[%c0, %c0_15] : memref<32x384xf32, #tpu.memory_space<vmem>>, vector<32x384xf32>
      %c0_16 = arith.constant 0 : index
      %31 = arith.index_cast %11 : i32 to index
      %32 = vector.load %arg9[%c0_16, %31] : memref<32x384xbf16, #tpu.memory_space<vmem>>, vector<32x384xbf16>
      %c0_17 = arith.constant 0 : index
      %c0_18 = arith.constant 0 : index
      %33 = vector.load %arg5[%c0_17, %c0_18] : memref<384x384xbf16, #tpu.memory_space<vmem>>, vector<384x384xbf16>
      %cst = arith.constant dense<0.000000e+00> : vector<32x384xf32>
      %34 = tpu.matmul %32, %33, %cst {dimension_numbers = #tpu.dot_dimension_numbers<[1], [0], [0], [1], [0, 0, 1, 1], [], []>} : vector<32x384xbf16>, vector<384x384xbf16>, vector<32x384xf32> -> vector<32x384xf32>
      %35 = arith.addf %30, %34 : vector<32x384xf32>
      %c0_19 = arith.constant 0 : index
      %c0_20 = arith.constant 0 : index
      %36 = vector.load %arg11[%c0_19, %c0_20] : memref<32x384xf32, #tpu.memory_space<vmem>>, vector<32x384xf32>
      tpu.vector_store %arg11[%c0_19, %c0_20], %35 {strides = array<i32>} : memref<32x384xf32, #tpu.memory_space<vmem>>, vector<32x384xf32>,
    } else {
    }
    %c0_i32_8 = arith.constant 0 : i32
    %17 = arith.cmpi eq, %arg0, %c0_i32_8 : i32
    %c0_i32_9 = arith.constant 0 : i32
    %18 = arith.cmpi eq, %arg2, %c0_i32_9 : i32
    %19 = arith.andi %17, %18 : i1
    %20 = arith.extui %19 : i1 to i32
    %c0_i32_10 = arith.constant 0 : i32
    %21 = arith.cmpi ne, %20, %c0_i32_10 : i32
    scf.if %21 {
      %c0 = arith.constant 0 : index
      %30 = arith.index_cast %13 : i32 to index
      %31 = vector.load %arg7[%c0, %30] : memref<1x384xf32, #tpu.memory_space<vmem>>, vector<1x384xf32>
      %c0_15 = arith.constant 0 : index
      %c0_16 = arith.constant 0 : index
      %32 = vector.load %arg11[%c0_15, %c0_16] : memref<32x384xf32, #tpu.memory_space<vmem>>, vector<32x384xf32>
      %33 = vector.broadcast %31 : vector<1x384xf32> to vector<32x384xf32>
      %34 = arith.mulf %33, %32 : vector<32x384xf32>
      %c0_17 = arith.constant 0 : index
      %35 = arith.index_cast %13 : i32 to index
      %36 = vector.load %arg10[%c0_17, %35] : memref<32x384xf32, #tpu.memory_space<vmem>>, vector<32x384xf32>
      tpu.vector_store %arg10[%c0_17, %35], %34 {strides = array<i32>} : memref<32x384xf32, #tpu.memory_space<vmem>>, vector<32x384xf32>,
    } else {
    }
    %c1_i32 = arith.constant 1 : i32
    %22 = arith.cmpi eq, %arg0, %c1_i32 : i32
    %23 = arith.extui %22 : i1 to i32
    %c0_i32_11 = arith.constant 0 : i32
    %24 = arith.cmpi ne, %23, %c0_i32_11 : i32
    scf.if %24 {
      %c0 = arith.constant 0 : index
      %30 = arith.index_cast %11 : i32 to index
      %31 = vector.load %arg10[%c0, %30] : memref<32x384xf32, #tpu.memory_space<vmem>>, vector<32x384xf32>
      %32 = arith.truncf %31 : vector<32x384xf32> to vector<32x384xbf16>
      %c0_15 = arith.constant 0 : index
      %c0_16 = arith.constant 0 : index
      %33 = vector.load %arg11[%c0_15, %c0_16] : memref<32x384xf32, #tpu.memory_space<vmem>>, vector<32x384xf32>
      %c0_17 = arith.constant 0 : index
      %c0_18 = arith.constant 0 : index
      %34 = vector.load %arg6[%c0_17, %c0_18] : memref<384x384xbf16, #tpu.memory_space<vmem>>, vector<384x384xbf16>
      %cst = arith.constant dense<0.000000e+00> : vector<32x384xf32>
      %35 = tpu.matmul %32, %34, %cst {dimension_numbers = #tpu.dot_dimension_numbers<[1], [0], [0], [1], [0, 0, 1, 1], [], []>} : vector<32x384xbf16>, vector<384x384xbf16>, vector<32x384xf32> -> vector<32x384xf32>
      %36 = arith.addf %33, %35 : vector<32x384xf32>
      %c0_19 = arith.constant 0 : index
      %c0_20 = arith.constant 0 : index
      %37 = vector.load %arg11[%c0_19, %c0_20] : memref<32x384xf32, #tpu.memory_space<vmem>>, vector<32x384xf32>
      tpu.vector_store %arg11[%c0_19, %c0_20], %36 {strides = array<i32>} : memref<32x384xf32, #tpu.memory_space<vmem>>, vector<32x384xf32>,
    } else {
    }
    %c1_i32_12 = arith.constant 1 : i32
    %25 = arith.cmpi eq, %arg0, %c1_i32_12 : i32
    %c0_i32_13 = arith.constant 0 : i32
    %26 = arith.cmpi eq, %arg2, %c0_i32_13 : i32
    %27 = arith.andi %25, %26 : i1
    %28 = arith.extui %27 : i1 to i32
    %c0_i32_14 = arith.constant 0 : i32
    %29 = arith.cmpi ne, %28, %c0_i32_14 : i32
    scf.if %29 {
      %c0 = arith.constant 0 : index
      %c0_15 = arith.constant 0 : index
      %30 = vector.load %arg11[%c0, %c0_15] : memref<32x384xf32, #tpu.memory_space<vmem>>, vector<32x384xf32>
      %cst = arith.constant 0.000000e+00 : f32
      %31 = vector.broadcast %cst : f32 to vector<32x384xf32>
      %32 = arith.maximumf %30, %31 : vector<32x384xf32>
      %33 = arith.truncf %32 : vector<32x384xf32> to vector<32x384xbf16>
      %c0_16 = arith.constant 0 : index
      %c0_17 = arith.constant 0 : index
      %34 = vector.load %arg8[%c0_16, %c0_17] : memref<32x384xbf16, #tpu.memory_space<vmem>>, vector<32x384xbf16>
      tpu.vector_store %arg8[%c0_16, %c0_17], %33 {strides = array<i32>} : memref<32x384xbf16, #tpu.memory_space<vmem>>, vector<32x384xbf16>,
    } else {
    }
    return
  }
  func.func @transform_0(%arg0: i32, %arg1: i32, %arg2: i32) -> (i32, i32) {
    %c0_i32 = arith.constant 0 : i32
    %c0_i32_0 = arith.constant 0 : i32
    %c0_i32_1 = arith.constant 0 : i32
    return %c0_i32, %c0_i32_0 : i32, i32
  }
  func.func @transform_1(%arg0: i32, %arg1: i32, %arg2: i32) -> (i32, i32) {
    %c0_i32 = arith.constant 0 : i32
    %c0_i32_0 = arith.constant 0 : i32
    %c0_i32_1 = arith.constant 0 : i32
    return %c0_i32, %c0_i32_0 : i32, i32
  }
  func.func @transform_2(%arg0: i32, %arg1: i32, %arg2: i32) -> (i32, i32) {
    %c1_i32 = arith.constant 1 : i32
    %0 = arith.subi %c1_i32, %arg0 : i32
    %1 = arith.muli %arg2, %0 : i32
    %c1_i32_0 = arith.constant 1 : i32
    %2 = arith.subi %c1_i32_0, %arg0 : i32
    %3 = arith.muli %arg1, %2 : i32
    %c0_i32 = arith.constant 0 : i32
    return %1, %3 : i32, i32
  }
  func.func @transform_3(%arg0: i32, %arg1: i32, %arg2: i32) -> (i32, i32) {
    %0 = arith.muli %arg2, %arg0 : i32
    %1 = arith.muli %arg1, %arg0 : i32
    %c0_i32 = arith.constant 0 : i32
    return %0, %1 : i32, i32
  }
  func.func @transform_4(%arg0: i32, %arg1: i32, %arg2: i32) -> (i32, i32) {
    %c0_i32 = arith.constant 0 : i32
    %c0_i32_0 = arith.constant 0 : i32
    %c0_i32_1 = arith.constant 0 : i32
    return %c0_i32, %c0_i32_0 : i32, i32
  }
  func.func @transform_5(%arg0: i32, %arg1: i32, %arg2: i32) -> (i32, i32) {
    %0 = arith.muli %arg1, %arg0 : i32
    %c0_i32 = arith.constant 0 : i32
    %c0_i32_0 = arith.constant 0 : i32
    return %c0_i32, %0 : i32, i32
  }
}

</mosaic_0001>

<llo_original>
// kernel: gwnn_forward.3
$region0: #{gwnn_forward.3}
  #allocation0 [shape = 'u32[]', space=smem, size = 0x4, offset = 0x4, fixed_abs, tag = 'smem constant byte address 0x4 - core index']
  #allocation1 [shape = 'u32[144,128]{1,0:T(1,128)}', space=vmem, size = 0x12000, scoped, tag = 'internal scratch']
  #allocation2 [shape = 'bf16[16,384]{1,0:T(16,128)(2,1)}', space=vmem, size = 0x3000, scoped, tag = 'scratch operand']
  #allocation3 [shape = 'f32[16,384]{1,0:T(8,128)}', space=vmem, size = 0x6000, scoped, tag = 'scratch operand']
  #allocation4 [shape = 'f32[16,384]{1,0:T(8,128)}', space=vmem, size = 0x6000, scoped, tag = 'scratch operand']
  %s0 = inlined_call_operand.vmem [shape: bf16[16,32], index: 0, kind: input, shape index: {}]
  %s1 = inlined_call_operand.vmem [shape: bf16[32,384], index: 1, kind: input, shape index: {}]
  %s2 = inlined_call_operand.vmem [shape: bf16[384,384], index: 2, kind: input, shape index: {}]
  %s3 = inlined_call_operand.vmem [shape: bf16[384,384], index: 3, kind: input, shape index: {}]
  %s4 = inlined_call_operand.vmem [shape: f32[1,384], index: 4, kind: input, shape index: {}]
  %s5 = inlined_call_operand.vmem [shape: f32[16,384], index: 5, kind: output, shape index: {}]
  %s6 = sld [smem:[#allocation0]]
  $region77: #{gwnn_forward.3} parent=0
    _
  %s8 = ssub.s32 1, %s6
  %s9 = scalar_select 0, %s8, %s6
  loop: start=0, step=1, limit=4
  $region2: #{gwnn_forward.3} parent=0 // loop_pre_header
    _
  $region3: #{gwnn_forward.3} parent=0 // loop_header
    %s11 = sphi 0, %s15
    %p12 = scmp.ge.s32.totalorder %s11, 4
    %s18 = sphi 0, %s37
    %s19 = sphi 0, %s33
    %s20 = sphi 0, %s29
    %s21 = sphi 0, %s18
    %s22 = sphi 0, %s19
    %s23 = sphi 0, %s20
    %s24 = sphi 0, %s21
    %s25 = sphi 0, %s22
    %s26 = sphi 0, %s23
    %s38 = sphi 0, %s38
    %s40 = sphi 0, %s38
    %s41 = sphi 0, %s40
    %s55 = sphi 0, %s41
    %s59 = sphi 0, %s59
    %s61 = sphi 0, %s59
    %s62 = sphi 0, %s61
    %s76 = sphi 0, %s62
    %s90 = sphi 0, %s92
    %s93 = sphi 0, %s90
    %s94 = sphi 0, %s93
    %s110 = sphi 0, %s94
    %s122 = sphi 0, %s124
    %s125 = sphi 0, %s122
    %s126 = sphi 0, %s125
    %s142 = sphi 0, %s126
    %s146 = sphi 0, %s146
    %s148 = sphi 0, %s146
    %s149 = sphi 0, %s148
    %s163 = sphi 0, %s149
    %s171 = sphi 0, %s173
    %s174 = sphi 0, %s171
    %s175 = sphi 0, %s174
    %s191 = sphi 0, %s175
  $region4: #{gwnn_forward.3} parent=0 // loop_header_branch
    %14 = sbr.rel (%p12) target = $region8
  $region5: #{gwnn_forward.3} parent=0 // loop_body
    %s16 = ssub.s32 %s11, 1
    %s17 = ssub.s32 %s11, 2
    %s27 = sadd.s32 1, %s20
    %p28 = scmp.ge.s32.totalorder %s27, 1
    %s29 = scalar_select %p28, 0, %s27
    %s30 = sadd.s32 1, %s19
    %s31 = scalar_select %p28, %s30, %s19
    %p32 = scmp.ge.s32.totalorder %s31, 1
    %s33 = scalar_select %p32, 0, %s31
    %s34 = sadd.s32 1, %s18
    %s35 = scalar_select %p32, %s34, %s18
    %p36 = scmp.ge.s32.totalorder %s35, 2
    %s37 = scalar_select %p36, 0, %s35
    %s39 = sadd.s32 %s38, 1
    %p42 = scmp.eq.s32.totalorder %s11, 1
    %p43 = scmp.ne.s32.totalorder %s38, %s40
    %p44 = scmp.eq.s32.totalorder %s11, 0
    %p45 = por %p43, %p44
    %p46 = scmp.ne.s32.totalorder %s38, %s40
    %p47 = scmp.eq.s32.totalorder %s16, 1
    %p48 = por %p46, %p47
    %p49 = scmp.ne.s32.totalorder %s40, %s41
    %p50 = scmp.eq.s32.totalorder %s16, 0
    %p51 = por %p49, %p50
    %p52 = scmp.ne.s32.totalorder %s40, %s41
    %p53 = scmp.eq.s32.totalorder %s17, 1
    %p54 = por %p52, %p53
    %p56 = scmp.ne.s32.totalorder %s41, %s55
    %p57 = scmp.eq.s32.totalorder %s17, 0
    %p58 = por %p56, %p57
    %s60 = sadd.s32 %s59, 1
    %p63 = scmp.eq.s32.totalorder %s11, 1
    %p64 = scmp.ne.s32.totalorder %s59, %s61
    %p65 = scmp.eq.s32.totalorder %s11, 0
    %p66 = por %p64, %p65
    %p67 = scmp.ne.s32.totalorder %s59, %s61
    %p68 = scmp.eq.s32.totalorder %s16, 1
    %p69 = por %p67, %p68
    %p70 = scmp.ne.s32.totalorder %s61, %s62
    %p71 = scmp.eq.s32.totalorder %s16, 0
    %p72 = por %p70, %p71
    %p73 = scmp.ne.s32.totalorder %s61, %s62
    %p74 = scmp.eq.s32.totalorder %s17, 1
    %p75 = por %p73, %p74
    %p77 = scmp.ne.s32.totalorder %s62, %s76
    %p78 = scmp.eq.s32.totalorder %s17, 0
    %p79 = por %p77, %p78
    %s80 = ssub.s32 1, %s18
    %s81 = smul.u32 %s20, %s80
    %s82 = smul.u32 %s19, %s80
    %s83 = ssub.s32 1, %s37
    %s84 = smul.u32 %s29, %s83
    %s85 = smul.u32 %s33, %s83
    %s86 = ssub.s32 %s81, %s84
    %s87 = ssub.s32 %s82, %s85
    %s88 = sor.u32 %s86, %s87
    %p89 = scmp.eq.s32.totalorder %s88, 0
    %s91 = sadd.s32 %s90, 1
    %s92 = scalar_select %p89, %s90, %s91
    %p95 = pneg %p89
    %p96 = scmp.eq.s32.totalorder %s11, 1
    %p97 = por %p95, %p96
    %p98 = scmp.ne.s32.totalorder %s90, %s93
    %p99 = scmp.eq.s32.totalorder %s11, 0
    %p100 = por %p98, %p99
    %p101 = scmp.ne.s32.totalorder %s90, %s93
    %p102 = scmp.eq.s32.totalorder %s16, 1
    %p103 = por %p101, %p102
    %p104 = scmp.ne.s32.totalorder %s93, %s94
    %p105 = scmp.eq.s32.totalorder %s16, 0
    %p106 = por %p104, %p105
    %p107 = scmp.ne.s32.totalorder %s93, %s94
    %p108 = scmp.eq.s32.totalorder %s17, 1
    %p109 = por %p107, %p108
    %p111 = scmp.ne.s32.totalorder %s94, %s110
    %p112 = scmp.eq.s32.totalorder %s17, 0
    %p113 = por %p111, %p112
    %s114 = smul.u32 %s20, %s18
    %s115 = smul.u32 %s19, %s18
    %s116 = smul.u32 %s29, %s37
    %s117 = smul.u32 %s33, %s37
    %s118 = ssub.s32 %s114, %s116
    %s119 = ssub.s32 %s115, %s117
    %s120 = sor.u32 %s118, %s119
    %p121 = scmp.eq.s32.totalorder %s120, 0
    %s123 = sadd.s32 %s122, 1
    %s124 = scalar_select %p121, %s122, %s123
    %p127 = pneg %p121
    %p128 = scmp.eq.s32.totalorder %s11, 1
    %p129 = por %p127, %p128
    %p130 = scmp.ne.s32.totalorder %s122, %s125
    %p131 = scmp.eq.s32.totalorder %s11, 0
    %p132 = por %p130, %p131
    %p133 = scmp.ne.s32.totalorder %s122, %s125
    %p134 = scmp.eq.s32.totalorder %s16, 1
    %p135 = por %p133, %p134
    %p136 = scmp.ne.s32.totalorder %s125, %s126
    %p137 = scmp.eq.s32.totalorder %s16, 0
    %p138 = por %p136, %p137
    %p139 = scmp.ne.s32.totalorder %s125, %s126
    %p140 = scmp.eq.s32.totalorder %s17, 1
    %p141 = por %p139, %p140
    %p143 = scmp.ne.s32.totalorder %s126, %s142
    %p144 = scmp.eq.s32.totalorder %s17, 0
    %p145 = por %p143, %p144
    %s147 = sadd.s32 %s146, 1
    %p150 = scmp.eq.s32.totalorder %s11, 1
    %p151 = scmp.ne.s32.totalorder %s146, %s148
    %p152 = scmp.eq.s32.totalorder %s11, 0
    %p153 = por %p151, %p152
    %p154 = scmp.ne.s32.totalorder %s146, %s148
    %p155 = scmp.eq.s32.totalorder %s16, 1
    %p156 = por %p154, %p155
    %p157 = scmp.ne.s32.totalorder %s148, %s149
    %p158 = scmp.eq.s32.totalorder %s16, 0
    %p159 = por %p157, %p158
    %p160 = scmp.ne.s32.totalorder %s148, %s149
    %p161 = scmp.eq.s32.totalorder %s17, 1
    %p162 = por %p160, %p161
    %p164 = scmp.ne.s32.totalorder %s149, %s163
    %p165 = scmp.eq.s32.totalorder %s17, 0
    %p166 = por %p164, %p165
    %s167 = smul.u32 %s19, %s18
    %s168 = smul.u32 %s33, %s37
    %s169 = ssub.s32 %s167, %s168
    %p170 = scmp.eq.s32.totalorder %s169, 0
    %s172 = sadd.s32 %s171, 1
    %s173 = scalar_select %p170, %s171, %s172
    %p176 = pneg %p170
    %p177 = scmp.eq.s32.totalorder %s11, 1
    %p178 = por %p176, %p177
    %p179 = scmp.ne.s32.totalorder %s171, %s174
    %p180 = scmp.eq.s32.totalorder %s11, 0
    %p181 = por %p179, %p180
    %p182 = scmp.ne.s32.totalorder %s171, %s174
    %p183 = scmp.eq.s32.totalorder %s16, 1
    %p184 = por %p182, %p183
    %p185 = scmp.ne.s32.totalorder %s174, %s175
    %p186 = scmp.eq.s32.totalorder %s16, 0
    %p187 = por %p185, %p186
    %p188 = scmp.ne.s32.totalorder %s174, %s175
    %p189 = scmp.eq.s32.totalorder %s17, 1
    %p190 = por %p188, %p189
    %p192 = scmp.ne.s32.totalorder %s175, %s191
    %p193 = scmp.eq.s32.totalorder %s17, 0
    %p194 = por %p192, %p193
    %p195 = scmp.le.s32.totalorder 1, %s11
    %p196 = scmp.lt.s32.totalorder %s11, 3
    %p197 = pnand %p195, %p196
    %p198 = pneg %p197
    // Predicated region
    $region9: #{gwnn_forward.3} parent=5 // pred_check
      _
    $region10: #{gwnn_forward.3} parent=5 // pred_check_branch
      %200 = sbr.rel (%p197) target = $region12
    $region11: #{gwnn_forward.3} parent=5 // pred_region
      %s201 = ssub.s32 %s11, 1
      // Predicated region
      $region13: #{gwnn_forward.3} parent=11 // pred_check
        %p202 = pneg %p51
      $region14: #{gwnn_forward.3} parent=11 // pred_check_branch
        %204 = sbr.rel (%p202) target = $region16
      $region15: #{gwnn_forward.3} parent=11 // pred_region
        _
      $region16: #{gwnn_forward.3} parent=11 // pred_fallthru
        _
      // Predicated region
      $region17: #{gwnn_forward.3} parent=11 // pred_check
        %p205 = pneg %p72
      $region18: #{gwnn_forward.3} parent=11 // pred_check_branch
        %207 = sbr.rel (%p205) target = $region20
      $region19: #{gwnn_forward.3} parent=11 // pred_region
        _
      $region20: #{gwnn_forward.3} parent=11 // pred_fallthru
        _
      // Predicated region
      $region21: #{gwnn_forward.3} parent=11 // pred_check
        %p208 = pneg %p159
      $region22: #{gwnn_forward.3} parent=11 // pred_check_branch
        %210 = sbr.rel (%p208) target = $region24
      $region23: #{gwnn_forward.3} parent=11 // pred_region
        _
      $region24: #{gwnn_forward.3} parent=11 // pred_fallthru
        _
    $region12: #{gwnn_forward.3} parent=5 // pred_fallthru
      _
    %p211 = scmp.lt.s32.totalorder %s11, 2
    // Predicated region
    $region25: #{gwnn_forward.3} parent=5 // pred_check
      %p212 = pneg %p211
    $region26: #{gwnn_forward.3} parent=5 // pred_check_branch
      %214 = sbr.rel (%p212) target = $region28
    $region27: #{gwnn_forward.3} parent=5 // pred_region
      // Predicated region
      $region29: #{gwnn_forward.3} parent=27 // pred_check
        %p215 = pneg %p100
      $region30: #{gwnn_forward.3} parent=27 // pred_check_branch
        %217 = sbr.rel (%p215) target = $region32
      $region31: #{gwnn_forward.3} parent=27 // pred_region
        %s218 = ssub.s32 1, %s18
        %s219 = smul.u32 %s20, %s218
        %s220 = smul.u32 %s19, %s218
        %s221 = smul.u32 48, %s219
        %s222 = smul.u32 3, %s220
        %p223 = scmp.lt.s32.totalorder %s221, 47
        %s224 = scalar_select %p223, %s221, 47
        %p225 = scmp.lt.s32.totalorder %s222, 2
        %s226 = scalar_select %p225, %s222, 2
        %s227 = smul.addr %s224, 3
        %s228 = sadd.s32 %s226, %s227
        %s229 = smul.addr %s228, 4
        %s230 = scalar_lea.vmem %s2, %s229
        %s231 = ssub.s32 1, %s18
        %s232 = smul.u32 %s20, %s231
        %s233 = smul.u32 %s19, %s231
        %s234 = smul.u32 48, %s232
        %s235 = smul.u32 3, %s233
      $region32: #{gwnn_forward.3} parent=27 // pred_fallthru
        _
      // Predicated region
      $region33: #{gwnn_forward.3} parent=27 // pred_check
        %p236 = pneg %p132
      $region34: #{gwnn_forward.3} parent=27 // pred_check_branch
        %238 = sbr.rel (%p236) target = $region36
      $region35: #{gwnn_forward.3} parent=27 // pred_region
        %s239 = smul.u32 %s20, %s18
        %s240 = smul.u32 %s19, %s18
        %s241 = smul.u32 48, %s239
        %s242 = smul.u32 3, %s240
        %p243 = scmp.lt.s32.totalorder %s241, 47
        %s244 = scalar_select %p243, %s241, 47
        %p245 = scmp.lt.s32.totalorder %s242, 2
        %s246 = scalar_select %p245, %s242, 2
        %s247 = smul.addr %s244, 3
        %s248 = sadd.s32 %s246, %s247
        %s249 = smul.addr %s248, 4
        %s250 = scalar_lea.vmem %s3, %s249
        %s251 = smul.u32 %s20, %s18
        %s252 = smul.u32 %s19, %s18
        %s253 = smul.u32 48, %s251
        %s254 = smul.u32 3, %s252
      $region36: #{gwnn_forward.3} parent=27 // pred_fallthru
        _
    $region28: #{gwnn_forward.3} parent=5 // pred_fallthru
      _
    %p255 = scmp.le.s32.totalorder 1, %s11
    %p256 = scmp.lt.s32.totalorder %s11, 3
    %p257 = pnand %p255, %p256
    %p258 = pneg %p257
    // Predicated region
    $region37: #{gwnn_forward.3} parent=5 // pred_check
      _
    $region38: #{gwnn_forward.3} parent=5 // pred_check_branch
      %260 = sbr.rel (%p257) target = $region40
    $region39: #{gwnn_forward.3} parent=5 // pred_region
      %s261 = ssub.s32 %s11, 1
      %p262 = pneg %p51
      %p263 = pneg %p48
      %p264 = pneg %p72
      %p265 = pneg %p69
      %s266 = ssub.s32 1, %s21
      %s267 = smul.u32 %s23, %s266
      %s268 = smul.u32 %s22, %s266
      %s269 = smul.u32 48, %s267
      %s270 = smul.u32 3, %s268
      %p271 = scmp.lt.s32.totalorder %s269, 47
      %s272 = scalar_select %p271, %s269, 47
      %p273 = scmp.lt.s32.totalorder %s270, 2
      %s274 = scalar_select %p273, %s270, 2
      %s275 = smul.addr %s272, 3
      %s276 = sadd.s32 %s274, %s275
      %s277 = smul.addr %s276, 4
      %s278 = scalar_lea.vmem %s2, %s277
      %p279 = pneg %p106
      %p280 = pneg %p103
      %s281 = smul.u32 %s23, %s21
      %s282 = smul.u32 %s22, %s21
      %s283 = smul.u32 48, %s281
      %s284 = smul.u32 3, %s282
      %p285 = scmp.lt.s32.totalorder %s283, 47
      %s286 = scalar_select %p285, %s283, 47
      %p287 = scmp.lt.s32.totalorder %s284, 2
      %s288 = scalar_select %p287, %s284, 2
      %s289 = smul.addr %s286, 3
      %s290 = sadd.s32 %s288, %s289
      %s291 = smul.addr %s290, 4
      %s292 = scalar_lea.vmem %s3, %s291
      %p293 = pneg %p138
      %p294 = pneg %p135
      %p295 = pneg %p159
      %p296 = pneg %p156
      %p297 = pneg %p187
      %p298 = pneg %p184
      %s299 = smul.u32 %s22, %s21
      %s300 = smul.u32 3, %s299
      %p301 = scmp.lt.s32.totalorder %s300, 2
      %s302 = scalar_select %p301, %s300, 2
      %s303 = smul.addr %s302, 8
      %s304 = scalar_lea.vmem %s5, %s303
      %s305 = ssub.s32 1, %s21
      %s306 = smul.u32 %s23, %s305
      %s307 = smul.u32 %s22, %s305
      %s308 = smul.u32 48, %s306
      %s309 = smul.u32 3, %s307
      %p310 = scmp.lt.s32.totalorder %s308, 47
      %s311 = scalar_select %p310, %s308, 47
      %p312 = scmp.lt.s32.totalorder %s309, 2
      %s313 = scalar_select %p312, %s309, 2
      %s314 = smul.addr %s311, 3
      %s315 = sadd.s32 %s313, %s314
      %s316 = smul.addr %s315, 4
      %s317 = scalar_lea.vmem %s2, %s316
      %s318 = ssub.s32 1, %s21
      %s319 = smul.u32 %s23, %s318
      %s320 = smul.u32 %s22, %s318
      %s321 = smul.u32 48, %s319
      %s322 = smul.u32 3, %s320
      %s323 = smul.u32 %s23, %s21
      %s324 = smul.u32 %s22, %s21
      %s325 = smul.u32 48, %s323
      %s326 = smul.u32 3, %s324
      %p327 = scmp.lt.s32.totalorder %s325, 47
      %s328 = scalar_select %p327, %s325, 47
      %p329 = scmp.lt.s32.totalorder %s326, 2
      %s330 = scalar_select %p329, %s326, 2
      %s331 = smul.addr %s328, 3
      %s332 = sadd.s32 %s330, %s331
      %s333 = smul.addr %s332, 4
      %s334 = scalar_lea.vmem %s3, %s333
      %s335 = smul.u32 %s23, %s21
      %s336 = smul.u32 %s22, %s21
      %s337 = smul.u32 48, %s335
      %s338 = smul.u32 3, %s336
      %s339 = smul.u32 %s22, %s21
      %s340 = smul.u32 3, %s339
      %p341 = scmp.lt.s32.totalorder %s340, 2
      %s342 = scalar_select %p341, %s340, 2
      %s343 = smul.addr %s342, 8
      %s344 = scalar_lea.vmem %s5, %s343
      %s345 = smul.u32 %s22, %s21
      %s346 = smul.u32 3, %s345
      %p348 = scmp.eq.s32.totalorder %s21, 0
      %p349 = scmp.eq.s32.totalorder %s22, 0
      %p350 = pnand %p348, %p349
      %p351 = pneg %p350
      %p352 = scmp.eq.s32.totalorder %s23, 0
      %p353 = pnand %p351, %p352
      %p354 = pneg %p353
      // Predicated region
      $region41: #{gwnn_forward.3} parent=39 // pred_check
        _
      $region42: #{gwnn_forward.3} parent=39 // pred_check_branch
        %356 = sbr.rel (%p353) target = $region44
      $region43: #{gwnn_forward.3} parent=39 // pred_region
        %v357 = vld [vmem:[%s0] sm:$0xf]
        %v358 = vld [vmem:[%s0 + $0x4] sm:$0xf]
        %v359 = vld [vmem:[%s1] sm:$0xff]
        %v360 = vld [vmem:[%s1 + $0x8] sm:$0xf]
        %v361 = vld [vmem:[%s1 + $0xc] sm:$0xff]
        %v362 = vld [vmem:[%s1 + $0x14] sm:$0xf]
        %v363 = vld [vmem:[%s1 + $0x18] sm:$0xff]
        %v364 = vld [vmem:[%s1 + $0x20] sm:$0xf]
        %v365 = vld [vmem:[%s1 + $0x24] sm:$0xff]
        %v366 = vld [vmem:[%s1 + $0x2c] sm:$0xf]
        %v369 = vunpack.c.l.b16 %v357
        %v370 = vunpack.c.l.b16 %v358
        %v371 = vpack.c.b16 %v370, %v369
        %v380 = vunpack.c.l.b16 %v359
        %v381 = vunpack.c.h.b16 %v359
        %v382 = vunpack.c.l.b16 %v360
        %v383 = vunpack.c.l.b16 %v361
        %v384 = vunpack.c.h.b16 %v361
        %v385 = vunpack.c.l.b16 %v362
        %v386 = vunpack.c.l.b16 %v363
        %v387 = vunpack.c.h.b16 %v363
        %v388 = vunpack.c.l.b16 %v364
        %v389 = vunpack.c.l.b16 %v365
        %v390 = vunpack.c.h.b16 %v365
        %v391 = vunpack.c.l.b16 %v366
        %v392 = vpack.c.b16 %v383, %v380
        %v393 = vpack.c.b16 %v384, %v381
        %v394 = vpack.c.b16 %v385, %v382
        %v395 = vpack.c.b16 %v389, %v386
        %v396 = vpack.c.b16 %v390, %v387
        %v397 = vpack.c.b16 %v391, %v388
        %vm404 = vcmask 261120
        %v406 = vsel %vm404, %v371, 0
        %408 = vmatprep.subr.bf16.mxu0 %v393
        %409 = vmatpush1.bf16.msra.mxu0 %v392
        %410 = vmatprep.subr.bf16.mxu0 %v396
        %411 = vmatpush1.bf16.msra.mxu0 %v395
        %412 = vmatprep.subr.bf16.mxu0 0
        %413 = vmatpush1.bf16.msra.mxu0 0
        %414 = vmatprep.subr.bf16.mxu0 0
        %415 = vmatpush1.bf16.msra.mxu0 0
        %416 = vmatprep.subr.bf16.mxu0 0
        %417 = vmatpush1.bf16.msra.mxu0 0
        %418 = vmatprep.subr.bf16.mxu0 0
        %419 = vmatpush1.bf16.msra.mxu0 0
        %420 = vmatprep.subr.bf16.mxu0 0
        %421 = vmatpush1.bf16.msra.mxu0 0
        %422 = vmatprep.subr.bf16.mxu0 0
        %423 = vmatpush1.bf16.msra.mxu0 0
        %424 = vmatprep.subr.bf16.mxu0 0
        %425 = vmatpush1.bf16.msra.mxu0 0
        %426 = vmatprep.subr.bf16.mxu0 0
        %427 = vmatpush1.bf16.msra.mxu0 0
        %428 = vmatprep.subr.bf16.mxu0 0
        %429 = vmatpush1.bf16.msra.mxu0 0
        %430 = vmatprep.subr.bf16.mxu0 0
        %431 = vmatpush1.bf16.msra.mxu0 0
        %432 = vmatprep.subr.bf16.mxu0 0
        %433 = vmatpush1.bf16.msra.mxu0 0
        %434 = vmatprep.subr.bf16.mxu0 0
        %435 = vmatpush1.bf16.msra.mxu0 0
        %436 = vmatprep.subr.bf16.mxu0 0
        %437 = vmatpush1.bf16.msra.mxu0 0
        %438 = vmatprep.subr.bf16.mxu0 0
        %439 = vmatpush1.bf16.msra.mxu0 0
        %440 = vmatprep.mubr.bf16.mxu0 0
        %441 = vmatmul.mubr.bf16.gmra.mrb[0].mxu0 %v406
        %v442 = vpop.f32.mrb[0].mxu0
        %v443 = vadd.f32 0.0, %v442
        %v444 = vpop.f32.mrb[0].mxu0
        %v445 = vadd.f32 0.0, %v444
        %v446 = vpop.f32.mrb[0].mxu0
        %v447 = vadd.f32 0.0, %v446
        %v448 = vpop.f32.mrb[0].mxu0
        %v449 = vadd.f32 0.0, %v448
        %450 = vdwg.mxu0
        %451 = vmatprep.subr.bf16.mxu0 0
        %452 = vmatpush1.bf16.msra.mxu0 %v394
        %453 = vmatprep.subr.bf16.mxu0 0
        %454 = vmatpush1.bf16.msra.mxu0 %v397
        %455 = vmatprep.subr.bf16.mxu0 0
        %456 = vmatpush1.bf16.msra.mxu0 0
        %457 = vmatprep.subr.bf16.mxu0 0
        %458 = vmatpush1.bf16.msra.mxu0 0
        %459 = vmatprep.subr.bf16.mxu0 0
        %460 = vmatpush1.bf16.msra.mxu0 0
        %461 = vmatprep.subr.bf16.mxu0 0
        %462 = vmatpush1.bf16.msra.mxu0 0
        %463 = vmatprep.subr.bf16.mxu0 0
        %464 = vmatpush1.bf16.msra.mxu0 0
        %465 = vmatprep.subr.bf16.mxu0 0
        %466 = vmatpush1.bf16.msra.mxu0 0
        %467 = vmatprep.subr.bf16.mxu0 0
        %468 = vmatpush1.bf16.msra.mxu0 0
        %469 = vmatprep.subr.bf16.mxu0 0
        %470 = vmatpush1.bf16.msra.mxu0 0
        %471 = vmatprep.subr.bf16.mxu0 0
        %472 = vmatpush1.bf16.msra.mxu0 0
        %473 = vmatprep.subr.bf16.mxu0 0
        %474 = vmatpush1.bf16.msra.mxu0 0
        %475 = vmatprep.subr.bf16.mxu0 0
        %476 = vmatpush1.bf16.msra.mxu0 0
        %477 = vmatprep.subr.bf16.mxu0 0
        %478 = vmatpush1.bf16.msra.mxu0 0
        %479 = vmatprep.subr.bf16.mxu0 0
        %480 = vmatpush1.bf16.msra.mxu0 0
        %481 = vmatprep.subr.bf16.mxu0 0
        %482 = vmatpush1.bf16.msra.mxu0 0
        %483 = vmatprep.mubr.bf16.mxu0 0
        %484 = vmatmul.mubr.bf16.gmra.mrb[0].mxu0 %v406
        %v485 = vpop.f32.mrb[0].mxu0
        %v486 = vadd.f32 0.0, %v485
        %v487 = vpop.f32.mrb[0].mxu0
        %v488 = vpop.f32.mrb[0].mxu0
        %v489 = vadd.f32 0.0, %v488
        %v490 = vpop.f32.mrb[0].mxu0
        %491 = vdwg.mxu0
        %v492 = vpack.c.bf16 %v447, %v443
        %v493 = vpack.c.bf16 %v449, %v445
        %v494 = vpack.c.bf16 %v489, %v486
        %495 = vst [vmem:[#allocation2] sm:$0xff] %v492
        %496 = vst [vmem:[#allocation2 + $0x8] sm:$0xff] %v493
        %497 = vst [vmem:[#allocation2 + $0x10] sm:$0xff] %v494
      $region44: #{gwnn_forward.3} parent=39 // pred_fallthru
        _
      // Predicated region
      $region45: #{gwnn_forward.3} parent=39 // pred_check
        %p498 = pneg %p352
      $region46: #{gwnn_forward.3} parent=39 // pred_check_branch
        %500 = sbr.rel (%p498) target = $region48
      $region47: #{gwnn_forward.3} parent=39 // pred_region
        %501 = vst [vmem:[#allocation4] sm:$0xff] 0.0
        %502 = vst [vmem:[#allocation4 + $0x8] sm:$0xff] 0.0
        %503 = vst [vmem:[#allocation4 + $0x10] sm:$0xff] 0.0
        %504 = vst [vmem:[#allocation4 + $0x18] sm:$0xff] 0.0
        %505 = vst [vmem:[#allocation4 + $0x20] sm:$0xff] 0.0
        %506 = vst [vmem:[#allocation4 + $0x28] sm:$0xff] 0.0
      $region48: #{gwnn_forward.3} parent=39 // pred_fallthru
        _
      %s507 = smul.u32 %s23, 384
      %s508 = smul.u32 %s22, 384
      // Predicated region
      $region49: #{gwnn_forward.3} parent=39 // pred_check
        %p509 = pneg %p348
      $region50: #{gwnn_forward.3} parent=39 // pred_check_branch
        %511 = sbr.rel (%p509) target = $region52
      $region51: #{gwnn_forward.3} parent=39 // pred_region
        %v512 = vld [vmem:[#allocation4] sm:$0xff]
        %v513 = vld [vmem:[#allocation4 + $0x8] sm:$0xff]
        %v514 = vld [vmem:[#allocation4 + $0x10] sm:$0xff]
        %v515 = vld [vmem:[#allocation4 + $0x18] sm:$0xff]
        %v516 = vld [vmem:[#allocation4 + $0x20] sm:$0xff]
        %v517 = vld [vmem:[#allocation4 + $0x28] sm:$0xff]
        %s518 = sshra.s32 %s507, 7
        %s519 = sand.u32 %s507, 127
        %s520 = smul.addr %s518, 8
        %s521 = scalar_lea.vmem [#allocation2], %s520
        %v522 = vld [vmem:[%s521] sm:$0xff]
        %v523 = vld [vmem:[%s521 + $0x8] sm:$0xff]
        %v524 = vld [vmem:[%s521 + $0x10] sm:$0xff]
        %v525 = vld [vmem:[%s317] sm:$0xff]
        %v526 = vld [vmem:[%s317 + $0x8] sm:$0xf]
        %v527 = vld [vmem:[%s317 + $0xc] sm:$0xff]
        %v528 = vld [vmem:[%s317 + $0x14] sm:$0xf]
        %v529 = vld [vmem:[%s317 + $0x18] sm:$0xff]
        %v530 = vld [vmem:[%s317 + $0x20] sm:$0xf]
        %v531 = vld [vmem:[%s317 + $0x24] sm:$0xff]
        %v532 = vld [vmem:[%s317 + $0x2c] sm:$0xf]
        %v533 = vld [vmem:[%s317 + $0x30] sm:$0xff]
        %v534 = vld [vmem:[%s317 + $0x38] sm:$0xf]
        %v535 = vld [vmem:[%s317 + $0x3c] sm:$0xff]
        %v536 = vld [vmem:[%s317 + $0x44] sm:$0xf]
        %v537 = vld [vmem:[%s317 + $0x48] sm:$0xff]
        %v538 = vld [vmem:[%s317 + $0x50] sm:$0xf]
        %v539 = vld [vmem:[%s317 + $0x54] sm:$0xff]
        %v540 = vld [vmem:[%s317 + $0x5c] sm:$0xf]
        %v541 = vld [vmem:[%s317 + $0x60] sm:$0xff]
        %v542 = vld [vmem:[%s317 + $0x68] sm:$0xf]
        %v543 = vld [vmem:[%s317 + $0x6c] sm:$0xff]
        %v544 = vld [vmem:[%s317 + $0x74] sm:$0xf]
        %v545 = vld [vmem:[%s317 + $0x78] sm:$0xff]
        %v546 = vld [vmem:[%s317 + $0x80] sm:$0xf]
        %v547 = vld [vmem:[%s317 + $0x84] sm:$0xff]
        %v548 = vld [vmem:[%s317 + $0x8c] sm:$0xf]
        %v549 = vld [vmem:[%s317 + $0x90] sm:$0xff]
        %v550 = vld [vmem:[%s317 + $0x98] sm:$0xf]
        %v551 = vld [vmem:[%s317 + $0x9c] sm:$0xff]
        %v552 = vld [vmem:[%s317 + $0xa4] sm:$0xf]
        %v553 = vld [vmem:[%s317 + $0xa8] sm:$0xff]
        %v554 = vld [vmem:[%s317 + $0xb0] sm:$0xf]
        %v555 = vld [vmem:[%s317 + $0xb4] sm:$0xff]
        %v556 = vld [vmem:[%s317 + $0xbc] sm:$0xf]
        %v557 = vld [vmem:[%s317 + $0xc0] sm:$0xff]
        %v558 = vld [vmem:[%s317 + $0xc8] sm:$0xf]
        %v559 = vld [vmem:[%s317 + $0xcc] sm:$0xff]
        %v560 = vld [vmem:[%s317 + $0xd4] sm:$0xf]
        %v561 = vld [vmem:[%s317 + $0xd8] sm:$0xff]
        %v562 = vld [vmem:[%s317 + $0xe0] sm:$0xf]
        %v563 = vld [vmem:[%s317 + $0xe4] sm:$0xff]
        %v564 = vld [vmem:[%s317 + $0xec] sm:$0xf]
        %v565 = vld [vmem:[%s317 + $0xf0] sm:$0xff]
        %v566 = vld [vmem:[%s317 + $0xf8] sm:$0xf]
        %v567 = vld [vmem:[%s317 + $0xfc] sm:$0xff]
        %v568 = vld [vmem:[%s317 + $0x104] sm:$0xf]
        %v569 = vld [vmem:[%s317 + $0x108] sm:$0xff]
        %v570 = vld [vmem:[%s317 + $0x110] sm:$0xf]
        %v571 = vld [vmem:[%s317 + $0x114] sm:$0xff]
        %v572 = vld [vmem:[%s317 + $0x11c] sm:$0xf]
        %v573 = vld [vmem:[%s317 + $0x120] sm:$0xff]
        %v574 = vld [vmem:[%s317 + $0x128] sm:$0xf]
        %v575 = vld [vmem:[%s317 + $0x12c] sm:$0xff]
        %v576 = vld [vmem:[%s317 + $0x134] sm:$0xf]
        %v577 = vld [vmem:[%s317 + $0x138] sm:$0xff]
        %v578 = vld [vmem:[%s317 + $0x140] sm:$0xf]
        %v579 = vld [vmem:[%s317 + $0x144] sm:$0xff]
        %v580 = vld [vmem:[%s317 + $0x14c] sm:$0xf]
        %v581 = vld [vmem:[%s317 + $0x150] sm:$0xff]
        %v582 = vld [vmem:[%s317 + $0x158] sm:$0xf]
        %v583 = vld [vmem:[%s317 + $0x15c] sm:$0xff]
        %v584 = vld [vmem:[%s317 + $0x164] sm:$0xf]
        %v585 = vld [vmem:[%s317 + $0x168] sm:$0xff]
        %v586 = vld [vmem:[%s317 + $0x170] sm:$0xf]
        %v587 = vld [vmem:[%s317 + $0x174] sm:$0xff]
        %v588 = vld [vmem:[%s317 + $0x17c] sm:$0xf]
        %v589 = vld [vmem:[%s317 + $0x180] sm:$0xff]
        %v590 = vld [vmem:[%s317 + $0x188] sm:$0xf]
        %v591 = vld [vmem:[%s317 + $0x18c] sm:$0xff]
        %v592 = vld [vmem:[%s317 + $0x194] sm:$0xf]
        %v593 = vld [vmem:[%s317 + $0x198] sm:$0xff]
        %v594 = vld [vmem:[%s317 + $0x1a0] sm:$0xf]
        %v595 = vld [vmem:[%s317 + $0x1a4] sm:$0xff]
        %v596 = vld [vmem:[%s317 + $0x1ac] sm:$0xf]
        %v597 = vld [vmem:[%s317 + $0x1b0] sm:$0xff]
        %v598 = vld [vmem:[%s317 + $0x1b8] sm:$0xf]
        %v599 = vld [vmem:[%s317 + $0x1bc] sm:$0xff]
        %v600 = vld [vmem:[%s317 + $0x1c4] sm:$0xf]
        %v601 = vld [vmem:[%s317 + $0x1c8] sm:$0xff]
        %v602 = vld [vmem:[%s317 + $0x1d0] sm:$0xf]
        %v603 = vld [vmem:[%s317 + $0x1d4] sm:$0xff]
        %v604 = vld [vmem:[%s317 + $0x1dc] sm:$0xf]
        %v605 = vld [vmem:[%s317 + $0x1e0] sm:$0xff]
        %v606 = vld [vmem:[%s317 + $0x1e8] sm:$0xf]
        %v607 = vld [vmem:[%s317 + $0x1ec] sm:$0xff]
        %v608 = vld [vmem:[%s317 + $0x1f4] sm:$0xf]
        %v609 = vld [vmem:[%s317 + $0x1f8] sm:$0xff]
        %v610 = vld [vmem:[%s317 + $0x200] sm:$0xf]
        %v611 = vld [vmem:[%s317 + $0x204] sm:$0xff]
        %v612 = vld [vmem:[%s317 + $0x20c] sm:$0xf]
        %v613 = vld [vmem:[%s317 + $0x210] sm:$0xff]
        %v614 = vld [vmem:[%s317 + $0x218] sm:$0xf]
        %v615 = vld [vmem:[%s317 + $0x21c] sm:$0xff]
        %v616 = vld [vmem:[%s317 + $0x224] sm:$0xf]
        %v617 = vld [vmem:[%s317 + $0x228] sm:$0xff]
        %v618 = vld [vmem:[%s317 + $0x230] sm:$0xf]
        %v619 = vld [vmem:[%s317 + $0x234] sm:$0xff]
        %v620 = vld [vmem:[%s317 + $0x23c] sm:$0xf]
        %v717 = vunpack.c.l.b16 %v525
        %v718 = vunpack.c.h.b16 %v525
        %v719 = vunpack.c.l.b16 %v526
        %v720 = vunpack.c.l.b16 %v527
        %v721 = vunpack.c.h.b16 %v527
        %v722 = vunpack.c.l.b16 %v528
        %v723 = vunpack.c.l.b16 %v529
        %v724 = vunpack.c.h.b16 %v529
        %v725 = vunpack.c.l.b16 %v530
        %v726 = vunpack.c.l.b16 %v531
        %v727 = vunpack.c.h.b16 %v531
        %v728 = vunpack.c.l.b16 %v532
        %v729 = vunpack.c.l.b16 %v533
        %v730 = vunpack.c.h.b16 %v533
        %v731 = vunpack.c.l.b16 %v534
        %v732 = vunpack.c.l.b16 %v535
        %v733 = vunpack.c.h.b16 %v535
        %v734 = vunpack.c.l.b16 %v536
        %v735 = vunpack.c.l.b16 %v537
        %v736 = vunpack.c.h.b16 %v537
        %v737 = vunpack.c.l.b16 %v538
        %v738 = vunpack.c.l.b16 %v539
        %v739 = vunpack.c.h.b16 %v539
        %v740 = vunpack.c.l.b16 %v540
        %v741 = vunpack.c.l.b16 %v541
        %v742 = vunpack.c.h.b16 %v541
        %v743 = vunpack.c.l.b16 %v542
        %v744 = vunpack.c.l.b16 %v543
        %v745 = vunpack.c.h.b16 %v543
        %v746 = vunpack.c.l.b16 %v544
        %v747 = vunpack.c.l.b16 %v545
        %v748 = vunpack.c.h.b16 %v545
        %v749 = vunpack.c.l.b16 %v546
        %v750 = vunpack.c.l.b16 %v547
        %v751 = vunpack.c.h.b16 %v547
        %v752 = vunpack.c.l.b16 %v548
        %v753 = vunpack.c.l.b16 %v549
        %v754 = vunpack.c.h.b16 %v549
        %v755 = vunpack.c.l.b16 %v550
        %v756 = vunpack.c.l.b16 %v551
        %v757 = vunpack.c.h.b16 %v551
        %v758 = vunpack.c.l.b16 %v552
        %v759 = vunpack.c.l.b16 %v553
        %v760 = vunpack.c.h.b16 %v553
        %v761 = vunpack.c.l.b16 %v554
        %v762 = vunpack.c.l.b16 %v555
        %v763 = vunpack.c.h.b16 %v555
        %v764 = vunpack.c.l.b16 %v556
        %v765 = vunpack.c.l.b16 %v557
        %v766 = vunpack.c.h.b16 %v557
        %v767 = vunpack.c.l.b16 %v558
        %v768 = vunpack.c.l.b16 %v559
        %v769 = vunpack.c.h.b16 %v559
        %v770 = vunpack.c.l.b16 %v560
        %v771 = vunpack.c.l.b16 %v561
        %v772 = vunpack.c.h.b16 %v561
        %v773 = vunpack.c.l.b16 %v562
        %v774 = vunpack.c.l.b16 %v563
        %v775 = vunpack.c.h.b16 %v563
        %v776 = vunpack.c.l.b16 %v564
        %v777 = vunpack.c.l.b16 %v565
        %v778 = vunpack.c.h.b16 %v565
        %v779 = vunpack.c.l.b16 %v566
        %v780 = vunpack.c.l.b16 %v567
        %v781 = vunpack.c.h.b16 %v567
        %v782 = vunpack.c.l.b16 %v568
        %v783 = vunpack.c.l.b16 %v569
        %v784 = vunpack.c.h.b16 %v569
        %v785 = vunpack.c.l.b16 %v570
        %v786 = vunpack.c.l.b16 %v571
        %v787 = vunpack.c.h.b16 %v571
        %v788 = vunpack.c.l.b16 %v572
        %v789 = vunpack.c.l.b16 %v573
        %v790 = vunpack.c.h.b16 %v573
        %v791 = vunpack.c.l.b16 %v574
        %v792 = vunpack.c.l.b16 %v575
        %v793 = vunpack.c.h.b16 %v575
        %v794 = vunpack.c.l.b16 %v576
        %v795 = vunpack.c.l.b16 %v577
        %v796 = vunpack.c.h.b16 %v577
        %v797 = vunpack.c.l.b16 %v578
        %v798 = vunpack.c.l.b16 %v579
        %v799 = vunpack.c.h.b16 %v579
        %v800 = vunpack.c.l.b16 %v580
        %v801 = vunpack.c.l.b16 %v581
        %v802 = vunpack.c.h.b16 %v581
        %v803 = vunpack.c.l.b16 %v582
        %v804 = vunpack.c.l.b16 %v583
        %v805 = vunpack.c.h.b16 %v583
        %v806 = vunpack.c.l.b16 %v584
        %v807 = vunpack.c.l.b16 %v585
        %v808 = vunpack.c.h.b16 %v585
        %v809 = vunpack.c.l.b16 %v586
        %v810 = vunpack.c.l.b16 %v587
        %v811 = vunpack.c.h.b16 %v587
        %v812 = vunpack.c.l.b16 %v588
        %v813 = vunpack.c.l.b16 %v589
        %v814 = vunpack.c.h.b16 %v589
        %v815 = vunpack.c.l.b16 %v590
        %v816 = vunpack.c.l.b16 %v591
        %v817 = vunpack.c.h.b16 %v591
        %v818 = vunpack.c.l.b16 %v592
        %v819 = vunpack.c.l.b16 %v593
        %v820 = vunpack.c.h.b16 %v593
        %v821 = vunpack.c.l.b16 %v594
        %v822 = vunpack.c.l.b16 %v595
        %v823 = vunpack.c.h.b16 %v595
        %v824 = vunpack.c.l.b16 %v596
        %v825 = vunpack.c.l.b16 %v597
        %v826 = vunpack.c.h.b16 %v597
        %v827 = vunpack.c.l.b16 %v598
        %v828 = vunpack.c.l.b16 %v599
        %v829 = vunpack.c.h.b16 %v599
        %v830 = vunpack.c.l.b16 %v600
        %v831 = vunpack.c.l.b16 %v601
        %v832 = vunpack.c.h.b16 %v601
        %v833 = vunpack.c.l.b16 %v602
        %v834 = vunpack.c.l.b16 %v603
        %v835 = vunpack.c.h.b16 %v603
        %v836 = vunpack.c.l.b16 %v604
        %v837 = vunpack.c.l.b16 %v605
        %v838 = vunpack.c.h.b16 %v605
        %v839 = vunpack.c.l.b16 %v606
        %v840 = vunpack.c.l.b16 %v607
        %v841 = vunpack.c.h.b16 %v607
        %v842 = vunpack.c.l.b16 %v608
        %v843 = vunpack.c.l.b16 %v609
        %v844 = vunpack.c.h.b16 %v609
        %v845 = vunpack.c.l.b16 %v610
        %v846 = vunpack.c.l.b16 %v611
        %v847 = vunpack.c.h.b16 %v611
        %v848 = vunpack.c.l.b16 %v612
        %v849 = vunpack.c.l.b16 %v613
        %v850 = vunpack.c.h.b16 %v613
        %v851 = vunpack.c.l.b16 %v614
        %v852 = vunpack.c.l.b16 %v615
        %v853 = vunpack.c.h.b16 %v615
        %v854 = vunpack.c.l.b16 %v616
        %v855 = vunpack.c.l.b16 %v617
        %v856 = vunpack.c.h.b16 %v617
        %v857 = vunpack.c.l.b16 %v618
        %v858 = vunpack.c.l.b16 %v619
        %v859 = vunpack.c.h.b16 %v619
        %v860 = vunpack.c.l.b16 %v620
        %v861 = vpack.c.b16 %v720, %v717
        %v862 = vpack.c.b16 %v721, %v718
        %v863 = vpack.c.b16 %v722, %v719
        %v864 = vpack.c.b16 %v726, %v723
        %v865 = vpack.c.b16 %v727, %v724
        %v866 = vpack.c.b16 %v728, %v725
        %v867 = vpack.c.b16 %v732, %v729
        %v868 = vpack.c.b16 %v733, %v730
        %v869 = vpack.c.b16 %v734, %v731
        %v870 = vpack.c.b16 %v738, %v735
        %v871 = vpack.c.b16 %v739, %v736
        %v872 = vpack.c.b16 %v740, %v737
        %v873 = vpack.c.b16 %v744, %v741
        %v874 = vpack.c.b16 %v745, %v742
        %v875 = vpack.c.b16 %v746, %v743
        %v876 = vpack.c.b16 %v750, %v747
        %v877 = vpack.c.b16 %v751, %v748
        %v878 = vpack.c.b16 %v752, %v749
        %v879 = vpack.c.b16 %v756, %v753
        %v880 = vpack.c.b16 %v757, %v754
        %v881 = vpack.c.b16 %v758, %v755
        %v882 = vpack.c.b16 %v762, %v759
        %v883 = vpack.c.b16 %v763, %v760
        %v884 = vpack.c.b16 %v764, %v761
        %v885 = vpack.c.b16 %v768, %v765
        %v886 = vpack.c.b16 %v769, %v766
        %v887 = vpack.c.b16 %v770, %v767
        %v888 = vpack.c.b16 %v774, %v771
        %v889 = vpack.c.b16 %v775, %v772
        %v890 = vpack.c.b16 %v776, %v773
        %v891 = vpack.c.b16 %v780, %v777
        %v892 = vpack.c.b16 %v781, %v778
        %v893 = vpack.c.b16 %v782, %v779
        %v894 = vpack.c.b16 %v786, %v783
        %v895 = vpack.c.b16 %v787, %v784
        %v896 = vpack.c.b16 %v788, %v785
        %v897 = vpack.c.b16 %v792, %v789
        %v898 = vpack.c.b16 %v793, %v790
        %v899 = vpack.c.b16 %v794, %v791
        %v900 = vpack.c.b16 %v798, %v795
        %v901 = vpack.c.b16 %v799, %v796
        %v902 = vpack.c.b16 %v800, %v797
        %v903 = vpack.c.b16 %v804, %v801
        %v904 = vpack.c.b16 %v805, %v802
        %v905 = vpack.c.b16 %v806, %v803
        %v906 = vpack.c.b16 %v810, %v807
        %v907 = vpack.c.b16 %v811, %v808
        %v908 = vpack.c.b16 %v812, %v809
        %v909 = vpack.c.b16 %v816, %v813
        %v910 = vpack.c.b16 %v817, %v814
        %v911 = vpack.c.b16 %v818, %v815
        %v912 = vpack.c.b16 %v822, %v819
        %v913 = vpack.c.b16 %v823, %v820
        %v914 = vpack.c.b16 %v824, %v821
        %v915 = vpack.c.b16 %v828, %v825
        %v916 = vpack.c.b16 %v829, %v826
        %v917 = vpack.c.b16 %v830, %v827
        %v918 = vpack.c.b16 %v834, %v831
        %v919 = vpack.c.b16 %v835, %v832
        %v920 = vpack.c.b16 %v836, %v833
        %v921 = vpack.c.b16 %v840, %v837
        %v922 = vpack.c.b16 %v841, %v838
        %v923 = vpack.c.b16 %v842, %v839
        %v924 = vpack.c.b16 %v846, %v843
        %v925 = vpack.c.b16 %v847, %v844
        %v926 = vpack.c.b16 %v848, %v845
        %v927 = vpack.c.b16 %v852, %v849
        %v928 = vpack.c.b16 %v853, %v850
        %v929 = vpack.c.b16 %v854, %v851
        %v930 = vpack.c.b16 %v858, %v855
        %v931 = vpack.c.b16 %v859, %v856
        %v932 = vpack.c.b16 %v860, %v857
        %1005 = vmatprep.subr.bf16.mxu0 %v862
        %1006 = vmatpush1.bf16.msra.mxu0 %v861
        %1007 = vmatprep.subr.bf16.mxu0 %v865
        %1008 = vmatpush1.bf16.msra.mxu0 %v864
        %1009 = vmatprep.subr.bf16.mxu0 %v868
        %1010 = vmatpush1.bf16.msra.mxu0 %v867
        %1011 = vmatprep.subr.bf16.mxu0 %v871
        %1012 = vmatpush1.bf16.msra.mxu0 %v870
        %1013 = vmatprep.subr.bf16.mxu0 %v874
        %1014 = vmatpush1.bf16.msra.mxu0 %v873
        %1015 = vmatprep.subr.bf16.mxu0 %v877
        %1016 = vmatpush1.bf16.msra.mxu0 %v876
        %1017 = vmatprep.subr.bf16.mxu0 %v880
        %1018 = vmatpush1.bf16.msra.mxu0 %v879
        %1019 = vmatprep.subr.bf16.mxu0 %v883
        %1020 = vmatpush1.bf16.msra.mxu0 %v882
        %1021 = vmatprep.subr.bf16.mxu0 %v886
        %1022 = vmatpush1.bf16.msra.mxu0 %v885
        %1023 = vmatprep.subr.bf16.mxu0 %v889
        %1024 = vmatpush1.bf16.msra.mxu0 %v888
        %1025 = vmatprep.subr.bf16.mxu0 %v892
        %1026 = vmatpush1.bf16.msra.mxu0 %v891
        %1027 = vmatprep.subr.bf16.mxu0 %v895
        %1028 = vmatpush1.bf16.msra.mxu0 %v894
        %1029 = vmatprep.subr.bf16.mxu0 %v898
        %1030 = vmatpush1.bf16.msra.mxu0 %v897
        %1031 = vmatprep.subr.bf16.mxu0 %v901
        %1032 = vmatpush1.bf16.msra.mxu0 %v900
        %1033 = vmatprep.subr.bf16.mxu0 %v904
        %1034 = vmatpush1.bf16.msra.mxu0 %v903
        %1035 = vmatprep.subr.bf16.mxu0 %v907
        %1036 = vmatpush1.bf16.msra.mxu0 %v906
        %1037 = vmatprep.mubr.bf16.mxu0 %v523
        %1038 = vmatmul.mubr.bf16.gmra.mrb[0].mxu0 %v522
        %v1039 = vpop.f32.mrb[0].mxu0
        %v1040 = vadd.f32 0.0, %v1039
        %v1041 = vpop.f32.mrb[0].mxu0
        %v1042 = vadd.f32 0.0, %v1041
        %v1043 = vpop.f32.mrb[0].mxu0
        %v1044 = vadd.f32 0.0, %v1043
        %v1045 = vpop.f32.mrb[0].mxu0
        %v1046 = vadd.f32 0.0, %v1045
        %1047 = vdwg.mxu0
        %1048 = vmatprep.subr.bf16.mxu0 %v910
        %1049 = vmatpush1.bf16.msra.mxu0 %v909
        %1050 = vmatprep.subr.bf16.mxu0 %v913
        %1051 = vmatpush1.bf16.msra.mxu0 %v912
        %1052 = vmatprep.subr.bf16.mxu0 %v916
        %1053 = vmatpush1.bf16.msra.mxu0 %v915
        %1054 = vmatprep.subr.bf16.mxu0 %v919
        %1055 = vmatpush1.bf16.msra.mxu0 %v918
        %1056 = vmatprep.subr.bf16.mxu0 %v922
        %1057 = vmatpush1.bf16.msra.mxu0 %v921
        %1058 = vmatprep.subr.bf16.mxu0 %v925
        %1059 = vmatpush1.bf16.msra.mxu0 %v924
        %1060 = vmatprep.subr.bf16.mxu0 %v928
        %1061 = vmatpush1.bf16.msra.mxu0 %v927
        %1062 = vmatprep.subr.bf16.mxu0 %v931
        %1063 = vmatpush1.bf16.msra.mxu0 %v930
        %1064 = vmatprep.subr.bf16.mxu0 0
        %1065 = vmatpush1.bf16.msra.mxu0 0
        %1066 = vmatprep.subr.bf16.mxu0 0
        %1067 = vmatpush1.bf16.msra.mxu0 0
        %1068 = vmatprep.subr.bf16.mxu0 0
        %1069 = vmatpush1.bf16.msra.mxu0 0
        %1070 = vmatprep.subr.bf16.mxu0 0
        %1071 = vmatpush1.bf16.msra.mxu0 0
        %1072 = vmatprep.subr.bf16.mxu0 0
        %1073 = vmatpush1.bf16.msra.mxu0 0
        %1074 = vmatprep.subr.bf16.mxu0 0
        %1075 = vmatpush1.bf16.msra.mxu0 0
        %1076 = vmatprep.subr.bf16.mxu0 0
        %1077 = vmatpush1.bf16.msra.mxu0 0
        %1078 = vmatprep.subr.bf16.mxu0 0
        %1079 = vmatpush1.bf16.msra.mxu0 0
        %1080 = vmatprep.mubr.bf16.mxu0 0
        %1081 = vmatmul.mubr.bf16.gmra.mrb[0].mxu0 %v524
        %v1082 = vpop.f32.mrb[0].mxu0
        %v1083 = vadd.f32 %v1040, %v1082
        %v1084 = vpop.f32.mrb[0].mxu0
        %v1085 = vadd.f32 %v1042, %v1084
        %v1086 = vpop.f32.mrb[0].mxu0
        %v1087 = vadd.f32 %v1044, %v1086
        %v1088 = vpop.f32.mrb[0].mxu0
        %v1089 = vadd.f32 %v1046, %v1088
        %1090 = vdwg.mxu0
        %1091 = vmatprep.subr.bf16.mxu0 0
        %1092 = vmatpush1.bf16.msra.mxu0 %v863
        %1093 = vmatprep.subr.bf16.mxu0 0
        %1094 = vmatpush1.bf16.msra.mxu0 %v866
        %1095 = vmatprep.subr.bf16.mxu0 0
        %1096 = vmatpush1.bf16.msra.mxu0 %v869
        %1097 = vmatprep.subr.bf16.mxu0 0
        %1098 = vmatpush1.bf16.msra.mxu0 %v872
        %1099 = vmatprep.subr.bf16.mxu0 0
        %1100 = vmatpush1.bf16.msra.mxu0 %v875
        %1101 = vmatprep.subr.bf16.mxu0 0
        %1102 = vmatpush1.bf16.msra.mxu0 %v878
        %1103 = vmatprep.subr.bf16.mxu0 0
        %1104 = vmatpush1.bf16.msra.mxu0 %v881
        %1105 = vmatprep.subr.bf16.mxu0 0
        %1106 = vmatpush1.bf16.msra.mxu0 %v884
        %1107 = vmatprep.subr.bf16.mxu0 0
        %1108 = vmatpush1.bf16.msra.mxu0 %v887
        %1109 = vmatprep.subr.bf16.mxu0 0
        %1110 = vmatpush1.bf16.msra.mxu0 %v890
        %1111 = vmatprep.subr.bf16.mxu0 0
        %1112 = vmatpush1.bf16.msra.mxu0 %v893
        %1113 = vmatprep.subr.bf16.mxu0 0
        %1114 = vmatpush1.bf16.msra.mxu0 %v896
        %1115 = vmatprep.subr.bf16.mxu0 0
        %1116 = vmatpush1.bf16.msra.mxu0 %v899
        %1117 = vmatprep.subr.bf16.mxu0 0
        %1118 = vmatpush1.bf16.msra.mxu0 %v902
        %1119 = vmatprep.subr.bf16.mxu0 0
        %1120 = vmatpush1.bf16.msra.mxu0 %v905
        %1121 = vmatprep.subr.bf16.mxu0 0
        %1122 = vmatpush1.bf16.msra.mxu0 %v908
        %1123 = vmatprep.mubr.bf16.mxu0 %v523
        %1124 = vmatmul.mubr.bf16.gmra.mrb[0].mxu0 %v522
        %v1125 = vpop.f32.mrb[0].mxu0
        %v1126 = vadd.f32 0.0, %v1125
        %v1127 = vpop.f32.mrb[0].mxu0
        %v1128 = vpop.f32.mrb[0].mxu0
        %v1129 = vadd.f32 0.0, %v1128
        %v1130 = vpop.f32.mrb[0].mxu0
        %1131 = vdwg.mxu0
        %1132 = vmatprep.subr.bf16.mxu0 0
        %1133 = vmatpush1.bf16.msra.mxu0 %v911
        %1134 = vmatprep.subr.bf16.mxu0 0
        %1135 = vmatpush1.bf16.msra.mxu0 %v914
        %1136 = vmatprep.subr.bf16.mxu0 0
        %1137 = vmatpush1.bf16.msra.mxu0 %v917
        %1138 = vmatprep.subr.bf16.mxu0 0
        %1139 = vmatpush1.bf16.msra.mxu0 %v920
        %1140 = vmatprep.subr.bf16.mxu0 0
        %1141 = vmatpush1.bf16.msra.mxu0 %v923
        %1142 = vmatprep.subr.bf16.mxu0 0
        %1143 = vmatpush1.bf16.msra.mxu0 %v926
        %1144 = vmatprep.subr.bf16.mxu0 0
        %1145 = vmatpush1.bf16.msra.mxu0 %v929
        %1146 = vmatprep.subr.bf16.mxu0 0
        %1147 = vmatpush1.bf16.msra.mxu0 %v932
        %1148 = vmatprep.subr.bf16.mxu0 0
        %1149 = vmatpush1.bf16.msra.mxu0 0
        %1150 = vmatprep.subr.bf16.mxu0 0
        %1151 = vmatpush1.bf16.msra.mxu0 0
        %1152 = vmatprep.subr.bf16.mxu0 0
        %1153 = vmatpush1.bf16.msra.mxu0 0
        %1154 = vmatprep.subr.bf16.mxu0 0
        %1155 = vmatpush1.bf16.msra.mxu0 0
        %1156 = vmatprep.subr.bf16.mxu0 0
        %1157 = vmatpush1.bf16.msra.mxu0 0
        %1158 = vmatprep.subr.bf16.mxu0 0
        %1159 = vmatpush1.bf16.msra.mxu0 0
        %1160 = vmatprep.subr.bf16.mxu0 0
        %1161 = vmatpush1.bf16.msra.mxu0 0
        %1162 = vmatprep.subr.bf16.mxu0 0
        %1163 = vmatpush1.bf16.msra.mxu0 0
        %1164 = vmatprep.mubr.bf16.mxu0 0
        %1165 = vmatmul.mubr.bf16.gmra.mrb[0].mxu0 %v524
        %v1166 = vpop.f32.mrb[0].mxu0
        %v1167 = vadd.f32 %v1126, %v1166
        %v1168 = vpop.f32.mrb[0].mxu0
        %v1169 = vpop.f32.mrb[0].mxu0
        %v1170 = vadd.f32 %v1129, %v1169
        %v1171 = vpop.f32.mrb[0].mxu0
        %1172 = vdwg.mxu0
        %v1173 = vadd.f32 %v512, %v1083
        %v1174 = vadd.f32 %v513, %v1085
        %v1175 = vadd.f32 %v514, %v1167
        %v1176 = vadd.f32 %v515, %v1087
        %v1177 = vadd.f32 %v516, %v1089
        %v1178 = vadd.f32 %v517, %v1170
        %1179 = vst [vmem:[#allocation4] sm:$0xff] %v1173
        %1180 = vst [vmem:[#allocation4 + $0x8] sm:$0xff] %v1174
        %1181 = vst [vmem:[#allocation4 + $0x10] sm:$0xff] %v1175
        %1182 = vst [vmem:[#allocation4 + $0x18] sm:$0xff] %v1176
        %1183 = vst [vmem:[#allocation4 + $0x20] sm:$0xff] %v1177
        %1184 = vst [vmem:[#allocation4 + $0x28] sm:$0xff] %v1178
      $region52: #{gwnn_forward.3} parent=39 // pred_fallthru
        _
      %p1185 = pnand %p348, %p352
      %p1186 = pneg %p1185
      // Predicated region
      $region53: #{gwnn_forward.3} parent=39 // pred_check
        _
      $region54: #{gwnn_forward.3} parent=39 // pred_check_branch
        %1188 = sbr.rel (%p1185) target = $region56
      $region55: #{gwnn_forward.3} parent=39 // pred_region
        %s1189 = sshra.s32 %s508, 7
        %s1190 = sand.u32 %s508, 127
        %s1191 = scalar_lea.vmem %s4, %s1189
        %v1192 = vld [vmem:[%s1191] sm:$0x7]
        %v1193 = vld [vmem:[#allocation4] sm:$0xff]
        %v1194 = vld [vmem:[#allocation4 + $0x8] sm:$0xff]
        %v1195 = vld [vmem:[#allocation4 + $0x10] sm:$0xff]
        %v1196 = vld [vmem:[#allocation4 + $0x18] sm:$0xff]
        %v1197 = vld [vmem:[#allocation4 + $0x20] sm:$0xff]
        %v1198 = vld [vmem:[#allocation4 + $0x28] sm:$0xff]
        %v1200 = vlaneseq
        %v1201 = vshrl.u32 %v1200, 7
        %v1202 = vsub.s32 0, %v1201
        %v1203 = vrot.slane %v1192, %v1202
        %v1204 = vlaneseq
        %v1205 = vshrl.u32 %v1204, 7
        %v1206 = vsub.s32 1, %v1205
        %v1207 = vrot.slane %v1192, %v1206
        %v1208 = vlaneseq
        %v1209 = vshrl.u32 %v1208, 7
        %v1210 = vsub.s32 2, %v1209
        %v1211 = vrot.slane %v1192, %v1210
        %v1215 = vmul.f32 %v1203, %v1193
        %v1216 = vmul.f32 %v1207, %v1194
        %v1217 = vmul.f32 %v1211, %v1195
        %v1218 = vmul.f32 %v1203, %v1196
        %v1219 = vmul.f32 %v1207, %v1197
        %v1220 = vmul.f32 %v1211, %v1198
        %s1221 = smul.addr %s1189, 8
        %s1222 = scalar_lea.vmem [#allocation3], %s1221
        %1223 = vst [vmem:[%s1222] sm:$0xff] %v1215
        %1224 = vst [vmem:[%s1222 + $0x8] sm:$0xff] %v1216
        %1225 = vst [vmem:[%s1222 + $0x10] sm:$0xff] %v1217
        %1226 = vst [vmem:[%s1222 + $0x18] sm:$0xff] %v1218
        %1227 = vst [vmem:[%s1222 + $0x20] sm:$0xff] %v1219
        %1228 = vst [vmem:[%s1222 + $0x28] sm:$0xff] %v1220
      $region56: #{gwnn_forward.3} parent=39 // pred_fallthru
        _
      %p1229 = scmp.eq.s32.totalorder %s21, 1
      // Predicated region
      $region57: #{gwnn_forward.3} parent=39 // pred_check
        %p1230 = pneg %p1229
      $region58: #{gwnn_forward.3} parent=39 // pred_check_branch
        %1232 = sbr.rel (%p1230) target = $region60
      $region59: #{gwnn_forward.3} parent=39 // pred_region
        %s1233 = sshra.s32 %s507, 7
        %s1234 = sand.u32 %s507, 127
        %s1235 = smul.addr %s1233, 8
        %s1236 = scalar_lea.vmem [#allocation3], %s1235
        %v1237 = vld [vmem:[%s1236] sm:$0xff]
        %v1238 = vld [vmem:[%s1236 + $0x8] sm:$0xff]
        %v1239 = vld [vmem:[%s1236 + $0x10] sm:$0xff]
        %v1240 = vld [vmem:[%s1236 + $0x18] sm:$0xff]
        %v1241 = vld [vmem:[%s1236 + $0x20] sm:$0xff]
        %v1242 = vld [vmem:[%s1236 + $0x28] sm:$0xff]
        %v1243 = vpack.c.bf16 %v1240, %v1237
        %v1244 = vpack.c.bf16 %v1241, %v1238
        %v1245 = vpack.c.bf16 %v1242, %v1239
        %v1246 = vld [vmem:[#allocation4] sm:$0xff]
        %v1247 = vld [vmem:[#allocation4 + $0x8] sm:$0xff]
        %v1248 = vld [vmem:[#allocation4 + $0x10] sm:$0xff]
        %v1249 = vld [vmem:[#allocation4 + $0x18] sm:$0xff]
        %v1250 = vld [vmem:[#allocation4 + $0x20] sm:$0xff]
        %v1251 = vld [vmem:[#allocation4 + $0x28] sm:$0xff]
        %v1252 = vld [vmem:[%s334] sm:$0xff]
        %v1253 = vld [vmem:[%s334 + $0x8] sm:$0xf]
        %v1254 = vld [vmem:[%s334 + $0xc] sm:$0xff]
        %v1255 = vld [vmem:[%s334 + $0x14] sm:$0xf]
        %v1256 = vld [vmem:[%s334 + $0x18] sm:$0xff]
        %v1257 = vld [vmem:[%s334 + $0x20] sm:$0xf]
        %v1258 = vld [vmem:[%s334 + $0x24] sm:$0xff]
        %v1259 = vld [vmem:[%s334 + $0x2c] sm:$0xf]
        %v1260 = vld [vmem:[%s334 + $0x30] sm:$0xff]
        %v1261 = vld [vmem:[%s334 + $0x38] sm:$0xf]
        %v1262 = vld [vmem:[%s334 + $0x3c] sm:$0xff]
        %v1263 = vld [vmem:[%s334 + $0x44] sm:$0xf]
        %v1264 = vld [vmem:[%s334 + $0x48] sm:$0xff]
        %v1265 = vld [vmem:[%s334 + $0x50] sm:$0xf]
        %v1266 = vld [vmem:[%s334 + $0x54] sm:$0xff]
        %v1267 = vld [vmem:[%s334 + $0x5c] sm:$0xf]
        %v1268 = vld [vmem:[%s334 + $0x60] sm:$0xff]
        %v1269 = vld [vmem:[%s334 + $0x68] sm:$0xf]
        %v1270 = vld [vmem:[%s334 + $0x6c] sm:$0xff]
        %v1271 = vld [vmem:[%s334 + $0x74] sm:$0xf]
        %v1272 = vld [vmem:[%s334 + $0x78] sm:$0xff]
        %v1273 = vld [vmem:[%s334 + $0x80] sm:$0xf]
        %v1274 = vld [vmem:[%s334 + $0x84] sm:$0xff]
        %v1275 = vld [vmem:[%s334 + $0x8c] sm:$0xf]
        %v1276 = vld [vmem:[%s334 + $0x90] sm:$0xff]
        %v1277 = vld [vmem:[%s334 + $0x98] sm:$0xf]
        %v1278 = vld [vmem:[%s334 + $0x9c] sm:$0xff]
        %v1279 = vld [vmem:[%s334 + $0xa4] sm:$0xf]
        %v1280 = vld [vmem:[%s334 + $0xa8] sm:$0xff]
        %v1281 = vld [vmem:[%s334 + $0xb0] sm:$0xf]
        %v1282 = vld [vmem:[%s334 + $0xb4] sm:$0xff]
        %v1283 = vld [vmem:[%s334 + $0xbc] sm:$0xf]
        %v1284 = vld [vmem:[%s334 + $0xc0] sm:$0xff]
        %v1285 = vld [vmem:[%s334 + $0xc8] sm:$0xf]
        %v1286 = vld [vmem:[%s334 + $0xcc] sm:$0xff]
        %v1287 = vld [vmem:[%s334 + $0xd4] sm:$0xf]
        %v1288 = vld [vmem:[%s334 + $0xd8] sm:$0xff]
        %v1289 = vld [vmem:[%s334 + $0xe0] sm:$0xf]
        %v1290 = vld [vmem:[%s334 + $0xe4] sm:$0xff]
        %v1291 = vld [vmem:[%s334 + $0xec] sm:$0xf]
        %v1292 = vld [vmem:[%s334 + $0xf0] sm:$0xff]
        %v1293 = vld [vmem:[%s334 + $0xf8] sm:$0xf]
        %v1294 = vld [vmem:[%s334 + $0xfc] sm:$0xff]
        %v1295 = vld [vmem:[%s334 + $0x104] sm:$0xf]
        %v1296 = vld [vmem:[%s334 + $0x108] sm:$0xff]
        %v1297 = vld [vmem:[%s334 + $0x110] sm:$0xf]
        %v1298 = vld [vmem:[%s334 + $0x114] sm:$0xff]
        %v1299 = vld [vmem:[%s334 + $0x11c] sm:$0xf]
        %v1300 = vld [vmem:[%s334 + $0x120] sm:$0xff]
        %v1301 = vld [vmem:[%s334 + $0x128] sm:$0xf]
        %v1302 = vld [vmem:[%s334 + $0x12c] sm:$0xff]
        %v1303 = vld [vmem:[%s334 + $0x134] sm:$0xf]
        %v1304 = vld [vmem:[%s334 + $0x138] sm:$0xff]
        %v1305 = vld [vmem:[%s334 + $0x140] sm:$0xf]
        %v1306 = vld [vmem:[%s334 + $0x144] sm:$0xff]
        %v1307 = vld [vmem:[%s334 + $0x14c] sm:$0xf]
        %v1308 = vld [vmem:[%s334 + $0x150] sm:$0xff]
        %v1309 = vld [vmem:[%s334 + $0x158] sm:$0xf]
        %v1310 = vld [vmem:[%s334 + $0x15c] sm:$0xff]
        %v1311 = vld [vmem:[%s334 + $0x164] sm:$0xf]
        %v1312 = vld [vmem:[%s334 + $0x168] sm:$0xff]
        %v1313 = vld [vmem:[%s334 + $0x170] sm:$0xf]
        %v1314 = vld [vmem:[%s334 + $0x174] sm:$0xff]
        %v1315 = vld [vmem:[%s334 + $0x17c] sm:$0xf]
        %v1316 = vld [vmem:[%s334 + $0x180] sm:$0xff]
        %v1317 = vld [vmem:[%s334 + $0x188] sm:$0xf]
        %v1318 = vld [vmem:[%s334 + $0x18c] sm:$0xff]
        %v1319 = vld [vmem:[%s334 + $0x194] sm:$0xf]
        %v1320 = vld [vmem:[%s334 + $0x198] sm:$0xff]
        %v1321 = vld [vmem:[%s334 + $0x1a0] sm:$0xf]
        %v1322 = vld [vmem:[%s334 + $0x1a4] sm:$0xff]
        %v1323 = vld [vmem:[%s334 + $0x1ac] sm:$0xf]
        %v1324 = vld [vmem:[%s334 + $0x1b0] sm:$0xff]
        %v1325 = vld [vmem:[%s334 + $0x1b8] sm:$0xf]
        %v1326 = vld [vmem:[%s334 + $0x1bc] sm:$0xff]
        %v1327 = vld [vmem:[%s334 + $0x1c4] sm:$0xf]
        %v1328 = vld [vmem:[%s334 + $0x1c8] sm:$0xff]
        %v1329 = vld [vmem:[%s334 + $0x1d0] sm:$0xf]
        %v1330 = vld [vmem:[%s334 + $0x1d4] sm:$0xff]
        %v1331 = vld [vmem:[%s334 + $0x1dc] sm:$0xf]
        %v1332 = vld [vmem:[%s334 + $0x1e0] sm:$0xff]
        %v1333 = vld [vmem:[%s334 + $0x1e8] sm:$0xf]
        %v1334 = vld [vmem:[%s334 + $0x1ec] sm:$0xff]
        %v1335 = vld [vmem:[%s334 + $0x1f4] sm:$0xf]
        %v1336 = vld [vmem:[%s334 + $0x1f8] sm:$0xff]
        %v1337 = vld [vmem:[%s334 + $0x200] sm:$0xf]
        %v1338 = vld [vmem:[%s334 + $0x204] sm:$0xff]
        %v1339 = vld [vmem:[%s334 + $0x20c] sm:$0xf]
        %v1340 = vld [vmem:[%s334 + $0x210] sm:$0xff]
        %v1341 = vld [vmem:[%s334 + $0x218] sm:$0xf]
        %v1342 = vld [vmem:[%s334 + $0x21c] sm:$0xff]
        %v1343 = vld [vmem:[%s334 + $0x224] sm:$0xf]
        %v1344 = vld [vmem:[%s334 + $0x228] sm:$0xff]
        %v1345 = vld [vmem:[%s334 + $0x230] sm:$0xf]
        %v1346 = vld [vmem:[%s334 + $0x234] sm:$0xff]
        %v1347 = vld [vmem:[%s334 + $0x23c] sm:$0xf]
        %v1444 = vunpack.c.l.b16 %v1252
        %v1445 = vunpack.c.h.b16 %v1252
        %v1446 = vunpack.c.l.b16 %v1253
        %v1447 = vunpack.c.l.b16 %v1254
        %v1448 = vunpack.c.h.b16 %v1254
        %v1449 = vunpack.c.l.b16 %v1255
        %v1450 = vunpack.c.l.b16 %v1256
        %v1451 = vunpack.c.h.b16 %v1256
        %v1452 = vunpack.c.l.b16 %v1257
        %v1453 = vunpack.c.l.b16 %v1258
        %v1454 = vunpack.c.h.b16 %v1258
        %v1455 = vunpack.c.l.b16 %v1259
        %v1456 = vunpack.c.l.b16 %v1260
        %v1457 = vunpack.c.h.b16 %v1260
        %v1458 = vunpack.c.l.b16 %v1261
        %v1459 = vunpack.c.l.b16 %v1262
        %v1460 = vunpack.c.h.b16 %v1262
        %v1461 = vunpack.c.l.b16 %v1263
        %v1462 = vunpack.c.l.b16 %v1264
        %v1463 = vunpack.c.h.b16 %v1264
        %v1464 = vunpack.c.l.b16 %v1265
        %v1465 = vunpack.c.l.b16 %v1266
        %v1466 = vunpack.c.h.b16 %v1266
        %v1467 = vunpack.c.l.b16 %v1267
        %v1468 = vunpack.c.l.b16 %v1268
        %v1469 = vunpack.c.h.b16 %v1268
        %v1470 = vunpack.c.l.b16 %v1269
        %v1471 = vunpack.c.l.b16 %v1270
        %v1472 = vunpack.c.h.b16 %v1270
        %v1473 = vunpack.c.l.b16 %v1271
        %v1474 = vunpack.c.l.b16 %v1272
        %v1475 = vunpack.c.h.b16 %v1272
        %v1476 = vunpack.c.l.b16 %v1273
        %v1477 = vunpack.c.l.b16 %v1274
        %v1478 = vunpack.c.h.b16 %v1274
        %v1479 = vunpack.c.l.b16 %v1275
        %v1480 = vunpack.c.l.b16 %v1276
        %v1481 = vunpack.c.h.b16 %v1276
        %v1482 = vunpack.c.l.b16 %v1277
        %v1483 = vunpack.c.l.b16 %v1278
        %v1484 = vunpack.c.h.b16 %v1278
        %v1485 = vunpack.c.l.b16 %v1279
        %v1486 = vunpack.c.l.b16 %v1280
        %v1487 = vunpack.c.h.b16 %v1280
        %v1488 = vunpack.c.l.b16 %v1281
        %v1489 = vunpack.c.l.b16 %v1282
        %v1490 = vunpack.c.h.b16 %v1282
        %v1491 = vunpack.c.l.b16 %v1283
        %v1492 = vunpack.c.l.b16 %v1284
        %v1493 = vunpack.c.h.b16 %v1284
        %v1494 = vunpack.c.l.b16 %v1285
        %v1495 = vunpack.c.l.b16 %v1286
        %v1496 = vunpack.c.h.b16 %v1286
        %v1497 = vunpack.c.l.b16 %v1287
        %v1498 = vunpack.c.l.b16 %v1288
        %v1499 = vunpack.c.h.b16 %v1288
        %v1500 = vunpack.c.l.b16 %v1289
        %v1501 = vunpack.c.l.b16 %v1290
        %v1502 = vunpack.c.h.b16 %v1290
        %v1503 = vunpack.c.l.b16 %v1291
        %v1504 = vunpack.c.l.b16 %v1292
        %v1505 = vunpack.c.h.b16 %v1292
        %v1506 = vunpack.c.l.b16 %v1293
        %v1507 = vunpack.c.l.b16 %v1294
        %v1508 = vunpack.c.h.b16 %v1294
        %v1509 = vunpack.c.l.b16 %v1295
        %v1510 = vunpack.c.l.b16 %v1296
        %v1511 = vunpack.c.h.b16 %v1296
        %v1512 = vunpack.c.l.b16 %v1297
        %v1513 = vunpack.c.l.b16 %v1298
        %v1514 = vunpack.c.h.b16 %v1298
        %v1515 = vunpack.c.l.b16 %v1299
        %v1516 = vunpack.c.l.b16 %v1300
        %v1517 = vunpack.c.h.b16 %v1300
        %v1518 = vunpack.c.l.b16 %v1301
        %v1519 = vunpack.c.l.b16 %v1302
        %v1520 = vunpack.c.h.b16 %v1302
        %v1521 = vunpack.c.l.b16 %v1303
        %v1522 = vunpack.c.l.b16 %v1304
        %v1523 = vunpack.c.h.b16 %v1304
        %v1524 = vunpack.c.l.b16 %v1305
        %v1525 = vunpack.c.l.b16 %v1306
        %v1526 = vunpack.c.h.b16 %v1306
        %v1527 = vunpack.c.l.b16 %v1307
        %v1528 = vunpack.c.l.b16 %v1308
        %v1529 = vunpack.c.h.b16 %v1308
        %v1530 = vunpack.c.l.b16 %v1309
        %v1531 = vunpack.c.l.b16 %v1310
        %v1532 = vunpack.c.h.b16 %v1310
        %v1533 = vunpack.c.l.b16 %v1311
        %v1534 = vunpack.c.l.b16 %v1312
        %v1535 = vunpack.c.h.b16 %v1312
        %v1536 = vunpack.c.l.b16 %v1313
        %v1537 = vunpack.c.l.b16 %v1314
        %v1538 = vunpack.c.h.b16 %v1314
        %v1539 = vunpack.c.l.b16 %v1315
        %v1540 = vunpack.c.l.b16 %v1316
        %v1541 = vunpack.c.h.b16 %v1316
        %v1542 = vunpack.c.l.b16 %v1317
        %v1543 = vunpack.c.l.b16 %v1318
        %v1544 = vunpack.c.h.b16 %v1318
        %v1545 = vunpack.c.l.b16 %v1319
        %v1546 = vunpack.c.l.b16 %v1320
        %v1547 = vunpack.c.h.b16 %v1320
        %v1548 = vunpack.c.l.b16 %v1321
        %v1549 = vunpack.c.l.b16 %v1322
        %v1550 = vunpack.c.h.b16 %v1322
        %v1551 = vunpack.c.l.b16 %v1323
        %v1552 = vunpack.c.l.b16 %v1324
        %v1553 = vunpack.c.h.b16 %v1324
        %v1554 = vunpack.c.l.b16 %v1325
        %v1555 = vunpack.c.l.b16 %v1326
        %v1556 = vunpack.c.h.b16 %v1326
        %v1557 = vunpack.c.l.b16 %v1327
        %v1558 = vunpack.c.l.b16 %v1328
        %v1559 = vunpack.c.h.b16 %v1328
        %v1560 = vunpack.c.l.b16 %v1329
        %v1561 = vunpack.c.l.b16 %v1330
        %v1562 = vunpack.c.h.b16 %v1330
        %v1563 = vunpack.c.l.b16 %v1331
        %v1564 = vunpack.c.l.b16 %v1332
        %v1565 = vunpack.c.h.b16 %v1332
        %v1566 = vunpack.c.l.b16 %v1333
        %v1567 = vunpack.c.l.b16 %v1334
        %v1568 = vunpack.c.h.b16 %v1334
        %v1569 = vunpack.c.l.b16 %v1335
        %v1570 = vunpack.c.l.b16 %v1336
        %v1571 = vunpack.c.h.b16 %v1336
        %v1572 = vunpack.c.l.b16 %v1337
        %v1573 = vunpack.c.l.b16 %v1338
        %v1574 = vunpack.c.h.b16 %v1338
        %v1575 = vunpack.c.l.b16 %v1339
        %v1576 = vunpack.c.l.b16 %v1340
        %v1577 = vunpack.c.h.b16 %v1340
        %v1578 = vunpack.c.l.b16 %v1341
        %v1579 = vunpack.c.l.b16 %v1342
        %v1580 = vunpack.c.h.b16 %v1342
        %v1581 = vunpack.c.l.b16 %v1343
        %v1582 = vunpack.c.l.b16 %v1344
        %v1583 = vunpack.c.h.b16 %v1344
        %v1584 = vunpack.c.l.b16 %v1345
        %v1585 = vunpack.c.l.b16 %v1346
        %v1586 = vunpack.c.h.b16 %v1346
        %v1587 = vunpack.c.l.b16 %v1347
        %v1588 = vpack.c.b16 %v1447, %v1444
        %v1589 = vpack.c.b16 %v1448, %v1445
        %v1590 = vpack.c.b16 %v1449, %v1446
        %v1591 = vpack.c.b16 %v1453, %v1450
        %v1592 = vpack.c.b16 %v1454, %v1451
        %v1593 = vpack.c.b16 %v1455, %v1452
        %v1594 = vpack.c.b16 %v1459, %v1456
        %v1595 = vpack.c.b16 %v1460, %v1457
        %v1596 = vpack.c.b16 %v1461, %v1458
        %v1597 = vpack.c.b16 %v1465, %v1462
        %v1598 = vpack.c.b16 %v1466, %v1463
        %v1599 = vpack.c.b16 %v1467, %v1464
        %v1600 = vpack.c.b16 %v1471, %v1468
        %v1601 = vpack.c.b16 %v1472, %v1469
        %v1602 = vpack.c.b16 %v1473, %v1470
        %v1603 = vpack.c.b16 %v1477, %v1474
        %v1604 = vpack.c.b16 %v1478, %v1475
        %v1605 = vpack.c.b16 %v1479, %v1476
        %v1606 = vpack.c.b16 %v1483, %v1480
        %v1607 = vpack.c.b16 %v1484, %v1481
        %v1608 = vpack.c.b16 %v1485, %v1482
        %v1609 = vpack.c.b16 %v1489, %v1486
        %v1610 = vpack.c.b16 %v1490, %v1487
        %v1611 = vpack.c.b16 %v1491, %v1488
        %v1612 = vpack.c.b16 %v1495, %v1492
        %v1613 = vpack.c.b16 %v1496, %v1493
        %v1614 = vpack.c.b16 %v1497, %v1494
        %v1615 = vpack.c.b16 %v1501, %v1498
        %v1616 = vpack.c.b16 %v1502, %v1499
        %v1617 = vpack.c.b16 %v1503, %v1500
        %v1618 = vpack.c.b16 %v1507, %v1504
        %v1619 = vpack.c.b16 %v1508, %v1505
        %v1620 = vpack.c.b16 %v1509, %v1506
        %v1621 = vpack.c.b16 %v1513, %v1510
        %v1622 = vpack.c.b16 %v1514, %v1511
        %v1623 = vpack.c.b16 %v1515, %v1512
        %v1624 = vpack.c.b16 %v1519, %v1516
        %v1625 = vpack.c.b16 %v1520, %v1517
        %v1626 = vpack.c.b16 %v1521, %v1518
        %v1627 = vpack.c.b16 %v1525, %v1522
        %v1628 = vpack.c.b16 %v1526, %v1523
        %v1629 = vpack.c.b16 %v1527, %v1524
        %v1630 = vpack.c.b16 %v1531, %v1528
        %v1631 = vpack.c.b16 %v1532, %v1529
        %v1632 = vpack.c.b16 %v1533, %v1530
        %v1633 = vpack.c.b16 %v1537, %v1534
        %v1634 = vpack.c.b16 %v1538, %v1535
        %v1635 = vpack.c.b16 %v1539, %v1536
        %v1636 = vpack.c.b16 %v1543, %v1540
        %v1637 = vpack.c.b16 %v1544, %v1541
        %v1638 = vpack.c.b16 %v1545, %v1542
        %v1639 = vpack.c.b16 %v1549, %v1546
        %v1640 = vpack.c.b16 %v1550, %v1547
        %v1641 = vpack.c.b16 %v1551, %v1548
        %v1642 = vpack.c.b16 %v1555, %v1552
        %v1643 = vpack.c.b16 %v1556, %v1553
        %v1644 = vpack.c.b16 %v1557, %v1554
        %v1645 = vpack.c.b16 %v1561, %v1558
        %v1646 = vpack.c.b16 %v1562, %v1559
        %v1647 = vpack.c.b16 %v1563, %v1560
        %v1648 = vpack.c.b16 %v1567, %v1564
        %v1649 = vpack.c.b16 %v1568, %v1565
        %v1650 = vpack.c.b16 %v1569, %v1566
        %v1651 = vpack.c.b16 %v1573, %v1570
        %v1652 = vpack.c.b16 %v1574, %v1571
        %v1653 = vpack.c.b16 %v1575, %v1572
        %v1654 = vpack.c.b16 %v1579, %v1576
        %v1655 = vpack.c.b16 %v1580, %v1577
        %v1656 = vpack.c.b16 %v1581, %v1578
        %v1657 = vpack.c.b16 %v1585, %v1582
        %v1658 = vpack.c.b16 %v1586, %v1583
        %v1659 = vpack.c.b16 %v1587, %v1584
        %1732 = vmatprep.subr.bf16.mxu0 %v1589
        %1733 = vmatpush1.bf16.msra.mxu0 %v1588
        %1734 = vmatprep.subr.bf16.mxu0 %v1592
        %1735 = vmatpush1.bf16.msra.mxu0 %v1591
        %1736 = vmatprep.subr.bf16.mxu0 %v1595
        %1737 = vmatpush1.bf16.msra.mxu0 %v1594
        %1738 = vmatprep.subr.bf16.mxu0 %v1598
        %1739 = vmatpush1.bf16.msra.mxu0 %v1597
        %1740 = vmatprep.subr.bf16.mxu0 %v1601
        %1741 = vmatpush1.bf16.msra.mxu0 %v1600
        %1742 = vmatprep.subr.bf16.mxu0 %v1604
        %1743 = vmatpush1.bf16.msra.mxu0 %v1603
        %1744 = vmatprep.subr.bf16.mxu0 %v1607
        %1745 = vmatpush1.bf16.msra.mxu0 %v1606
        %1746 = vmatprep.subr.bf16.mxu0 %v1610
        %1747 = vmatpush1.bf16.msra.mxu0 %v1609
        %1748 = vmatprep.subr.bf16.mxu0 %v1613
        %1749 = vmatpush1.bf16.msra.mxu0 %v1612
        %1750 = vmatprep.subr.bf16.mxu0 %v1616
        %1751 = vmatpush1.bf16.msra.mxu0 %v1615
        %1752 = vmatprep.subr.bf16.mxu0 %v1619
        %1753 = vmatpush1.bf16.msra.mxu0 %v1618
        %1754 = vmatprep.subr.bf16.mxu0 %v1622
        %1755 = vmatpush1.bf16.msra.mxu0 %v1621
        %1756 = vmatprep.subr.bf16.mxu0 %v1625
        %1757 = vmatpush1.bf16.msra.mxu0 %v1624
        %1758 = vmatprep.subr.bf16.mxu0 %v1628
        %1759 = vmatpush1.bf16.msra.mxu0 %v1627
        %1760 = vmatprep.subr.bf16.mxu0 %v1631
        %1761 = vmatpush1.bf16.msra.mxu0 %v1630
        %1762 = vmatprep.subr.bf16.mxu0 %v1634
        %1763 = vmatpush1.bf16.msra.mxu0 %v1633
        %1764 = vmatprep.mubr.bf16.mxu0 %v1244
        %1765 = vmatmul.mubr.bf16.gmra.mrb[0].mxu0 %v1243
        %v1766 = vpop.f32.mrb[0].mxu0
        %v1767 = vadd.f32 0.0, %v1766
        %v1768 = vpop.f32.mrb[0].mxu0
        %v1769 = vadd.f32 0.0, %v1768
        %v1770 = vpop.f32.mrb[0].mxu0
        %v1771 = vadd.f32 0.0, %v1770
        %v1772 = vpop.f32.mrb[0].mxu0
        %v1773 = vadd.f32 0.0, %v1772
        %1774 = vdwg.mxu0
        %1775 = vmatprep.subr.bf16.mxu0 %v1637
        %1776 = vmatpush1.bf16.msra.mxu0 %v1636
        %1777 = vmatprep.subr.bf16.mxu0 %v1640
        %1778 = vmatpush1.bf16.msra.mxu0 %v1639
        %1779 = vmatprep.subr.bf16.mxu0 %v1643
        %1780 = vmatpush1.bf16.msra.mxu0 %v1642
        %1781 = vmatprep.subr.bf16.mxu0 %v1646
        %1782 = vmatpush1.bf16.msra.mxu0 %v1645
        %1783 = vmatprep.subr.bf16.mxu0 %v1649
        %1784 = vmatpush1.bf16.msra.mxu0 %v1648
        %1785 = vmatprep.subr.bf16.mxu0 %v1652
        %1786 = vmatpush1.bf16.msra.mxu0 %v1651
        %1787 = vmatprep.subr.bf16.mxu0 %v1655
        %1788 = vmatpush1.bf16.msra.mxu0 %v1654
        %1789 = vmatprep.subr.bf16.mxu0 %v1658
        %1790 = vmatpush1.bf16.msra.mxu0 %v1657
        %1791 = vmatprep.subr.bf16.mxu0 0
        %1792 = vmatpush1.bf16.msra.mxu0 0
        %1793 = vmatprep.subr.bf16.mxu0 0
        %1794 = vmatpush1.bf16.msra.mxu0 0
        %1795 = vmatprep.subr.bf16.mxu0 0
        %1796 = vmatpush1.bf16.msra.mxu0 0
        %1797 = vmatprep.subr.bf16.mxu0 0
        %1798 = vmatpush1.bf16.msra.mxu0 0
        %1799 = vmatprep.subr.bf16.mxu0 0
        %1800 = vmatpush1.bf16.msra.mxu0 0
        %1801 = vmatprep.subr.bf16.mxu0 0
        %1802 = vmatpush1.bf16.msra.mxu0 0
        %1803 = vmatprep.subr.bf16.mxu0 0
        %1804 = vmatpush1.bf16.msra.mxu0 0
        %1805 = vmatprep.subr.bf16.mxu0 0
        %1806 = vmatpush1.bf16.msra.mxu0 0
        %1807 = vmatprep.mubr.bf16.mxu0 0
        %1808 = vmatmul.mubr.bf16.gmra.mrb[0].mxu0 %v1245
        %v1809 = vpop.f32.mrb[0].mxu0
        %v1810 = vadd.f32 %v1767, %v1809
        %v1811 = vpop.f32.mrb[0].mxu0
        %v1812 = vadd.f32 %v1769, %v1811
        %v1813 = vpop.f32.mrb[0].mxu0
        %v1814 = vadd.f32 %v1771, %v1813
        %v1815 = vpop.f32.mrb[0].mxu0
        %v1816 = vadd.f32 %v1773, %v1815
        %1817 = vdwg.mxu0
        %1818 = vmatprep.subr.bf16.mxu0 0
        %1819 = vmatpush1.bf16.msra.mxu0 %v1590
        %1820 = vmatprep.subr.bf16.mxu0 0
        %1821 = vmatpush1.bf16.msra.mxu0 %v1593
        %1822 = vmatprep.subr.bf16.mxu0 0
        %1823 = vmatpush1.bf16.msra.mxu0 %v1596
        %1824 = vmatprep.subr.bf16.mxu0 0
        %1825 = vmatpush1.bf16.msra.mxu0 %v1599
        %1826 = vmatprep.subr.bf16.mxu0 0
        %1827 = vmatpush1.bf16.msra.mxu0 %v1602
        %1828 = vmatprep.subr.bf16.mxu0 0
        %1829 = vmatpush1.bf16.msra.mxu0 %v1605
        %1830 = vmatprep.subr.bf16.mxu0 0
        %1831 = vmatpush1.bf16.msra.mxu0 %v1608
        %1832 = vmatprep.subr.bf16.mxu0 0
        %1833 = vmatpush1.bf16.msra.mxu0 %v1611
        %1834 = vmatprep.subr.bf16.mxu0 0
        %1835 = vmatpush1.bf16.msra.mxu0 %v1614
        %1836 = vmatprep.subr.bf16.mxu0 0
        %1837 = vmatpush1.bf16.msra.mxu0 %v1617
        %1838 = vmatprep.subr.bf16.mxu0 0
        %1839 = vmatpush1.bf16.msra.mxu0 %v1620
        %1840 = vmatprep.subr.bf16.mxu0 0
        %1841 = vmatpush1.bf16.msra.mxu0 %v1623
        %1842 = vmatprep.subr.bf16.mxu0 0
        %1843 = vmatpush1.bf16.msra.mxu0 %v1626
        %1844 = vmatprep.subr.bf16.mxu0 0
        %1845 = vmatpush1.bf16.msra.mxu0 %v1629
        %1846 = vmatprep.subr.bf16.mxu0 0
        %1847 = vmatpush1.bf16.msra.mxu0 %v1632
        %1848 = vmatprep.subr.bf16.mxu0 0
        %1849 = vmatpush1.bf16.msra.mxu0 %v1635
        %1850 = vmatprep.mubr.bf16.mxu0 %v1244
        %1851 = vmatmul.mubr.bf16.gmra.mrb[0].mxu0 %v1243
        %v1852 = vpop.f32.mrb[0].mxu0
        %v1853 = vadd.f32 0.0, %v1852
        %v1854 = vpop.f32.mrb[0].mxu0
        %v1855 = vpop.f32.mrb[0].mxu0
        %v1856 = vadd.f32 0.0, %v1855
        %v1857 = vpop.f32.mrb[0].mxu0
        %1858 = vdwg.mxu0
        %1859 = vmatprep.subr.bf16.mxu0 0
        %1860 = vmatpush1.bf16.msra.mxu0 %v1638
        %1861 = vmatprep.subr.bf16.mxu0 0
        %1862 = vmatpush1.bf16.msra.mxu0 %v1641
        %1863 = vmatprep.subr.bf16.mxu0 0
        %1864 = vmatpush1.bf16.msra.mxu0 %v1644
        %1865 = vmatprep.subr.bf16.mxu0 0
        %1866 = vmatpush1.bf16.msra.mxu0 %v1647
        %1867 = vmatprep.subr.bf16.mxu0 0
        %1868 = vmatpush1.bf16.msra.mxu0 %v1650
        %1869 = vmatprep.subr.bf16.mxu0 0
        %1870 = vmatpush1.bf16.msra.mxu0 %v1653
        %1871 = vmatprep.subr.bf16.mxu0 0
        %1872 = vmatpush1.bf16.msra.mxu0 %v1656
        %1873 = vmatprep.subr.bf16.mxu0 0
        %1874 = vmatpush1.bf16.msra.mxu0 %v1659
        %1875 = vmatprep.subr.bf16.mxu0 0
        %1876 = vmatpush1.bf16.msra.mxu0 0
        %1877 = vmatprep.subr.bf16.mxu0 0
        %1878 = vmatpush1.bf16.msra.mxu0 0
        %1879 = vmatprep.subr.bf16.mxu0 0
        %1880 = vmatpush1.bf16.msra.mxu0 0
        %1881 = vmatprep.subr.bf16.mxu0 0
        %1882 = vmatpush1.bf16.msra.mxu0 0
        %1883 = vmatprep.subr.bf16.mxu0 0
        %1884 = vmatpush1.bf16.msra.mxu0 0
        %1885 = vmatprep.subr.bf16.mxu0 0
        %1886 = vmatpush1.bf16.msra.mxu0 0
        %1887 = vmatprep.subr.bf16.mxu0 0
        %1888 = vmatpush1.bf16.msra.mxu0 0
        %1889 = vmatprep.subr.bf16.mxu0 0
        %1890 = vmatpush1.bf16.msra.mxu0 0
        %1891 = vmatprep.mubr.bf16.mxu0 0
        %1892 = vmatmul.mubr.bf16.gmra.mrb[0].mxu0 %v1245
        %v1893 = vpop.f32.mrb[0].mxu0
        %v1894 = vadd.f32 %v1853, %v1893
        %v1895 = vpop.f32.mrb[0].mxu0
        %v1896 = vpop.f32.mrb[0].mxu0
        %v1897 = vadd.f32 %v1856, %v1896
        %v1898 = vpop.f32.mrb[0].mxu0
        %1899 = vdwg.mxu0
        %v1900 = vadd.f32 %v1246, %v1810
        %v1901 = vadd.f32 %v1247, %v1812
        %v1902 = vadd.f32 %v1248, %v1894
        %v1903 = vadd.f32 %v1249, %v1814
        %v1904 = vadd.f32 %v1250, %v1816
        %v1905 = vadd.f32 %v1251, %v1897
        %1906 = vst [vmem:[#allocation4] sm:$0xff] %v1900
        %1907 = vst [vmem:[#allocation4 + $0x8] sm:$0xff] %v1901
        %1908 = vst [vmem:[#allocation4 + $0x10] sm:$0xff] %v1902
        %1909 = vst [vmem:[#allocation4 + $0x18] sm:$0xff] %v1903
        %1910 = vst [vmem:[#allocation4 + $0x20] sm:$0xff] %v1904
        %1911 = vst [vmem:[#allocation4 + $0x28] sm:$0xff] %v1905
      $region60: #{gwnn_forward.3} parent=39 // pred_fallthru
        _
      %p1912 = pnand %p1229, %p352
      %p1913 = pneg %p1912
      // Predicated region
      $region61: #{gwnn_forward.3} parent=39 // pred_check
        _
      $region62: #{gwnn_forward.3} parent=39 // pred_check_branch
        %1915 = sbr.rel (%p1912) target = $region64
      $region63: #{gwnn_forward.3} parent=39 // pred_region
        %v1916 = vld [vmem:[#allocation4] sm:$0xff]
        %v1917 = vld [vmem:[#allocation4 + $0x8] sm:$0xff]
        %v1918 = vld [vmem:[#allocation4 + $0x10] sm:$0xff]
        %v1919 = vld [vmem:[#allocation4 + $0x18] sm:$0xff]
        %v1920 = vld [vmem:[#allocation4 + $0x20] sm:$0xff]
        %v1921 = vld [vmem:[#allocation4 + $0x28] sm:$0xff]
        %v1922 = vmax.f32 %v1916, %v1919
        %v1923 = vrot.slane %v1922, 4
        %v1924 = vmax.f32 %v1922, %v1923
        %v1925 = vrot.slane %v1924, 2
        %v1926 = vmax.f32 %v1924, %v1925
        %v1927 = vrot.slane %v1926, 1
        %v1928 = vmax.f32 %v1926, %v1927
        %v1929 = vmax.f32 %v1917, %v1920
        %v1930 = vrot.slane %v1929, 4
        %v1931 = vmax.f32 %v1929, %v1930
        %v1932 = vrot.slane %v1931, 2
        %v1933 = vmax.f32 %v1931, %v1932
        %v1934 = vrot.slane %v1933, 1
        %v1935 = vmax.f32 %v1933, %v1934
        %v1936 = vmax.f32 %v1918, %v1921
        %v1937 = vrot.slane %v1936, 4
        %v1938 = vmax.f32 %v1936, %v1937
        %v1939 = vrot.slane %v1938, 2
        %v1940 = vmax.f32 %v1938, %v1939
        %v1941 = vrot.slane %v1940, 1
        %v1942 = vmax.f32 %v1940, %v1941
        %v1943 = vsub.f32 %v1916, %v1928
        %v1944 = vsub.f32 %v1917, %v1935
        %v1945 = vsub.f32 %v1918, %v1942
        %v1946 = vsub.f32 %v1919, %v1928
        %v1947 = vsub.f32 %v1920, %v1935
        %v1948 = vsub.f32 %v1921, %v1942
        %v1949 = vmul.f32 %v1943, 1.442695
        %v1950 = vpow.pop %v1949
        %v1951 = vmul.f32 %v1944, 1.442695
        %v1952 = vpow.pop %v1951
        %v1953 = vmul.f32 %v1945, 1.442695
        %v1954 = vpow.pop %v1953
        %v1955 = vmul.f32 %v1946, 1.442695
        %v1956 = vpow.pop %v1955
        %v1957 = vmul.f32 %v1947, 1.442695
        %v1958 = vpow.pop %v1957
        %v1959 = vmul.f32 %v1948, 1.442695
        %v1960 = vpow.pop %v1959
        %v1961 = vadd.f32 %v1950, %v1956
        %v1962 = vrot.slane %v1961, 4
        %v1963 = vadd.f32 %v1961, %v1962
        %v1964 = vrot.slane %v1963, 2
        %v1965 = vadd.f32 %v1963, %v1964
        %v1966 = vrot.slane %v1965, 1
        %v1967 = vadd.f32 %v1965, %v1966
        %v1968 = vadd.f32 %v1952, %v1958
        %v1969 = vrot.slane %v1968, 4
        %v1970 = vadd.f32 %v1968, %v1969
        %v1971 = vrot.slane %v1970, 2
        %v1972 = vadd.f32 %v1970, %v1971
        %v1973 = vrot.slane %v1972, 1
        %v1974 = vadd.f32 %v1972, %v1973
        %v1975 = vadd.f32 %v1954, %v1960
        %v1976 = vrot.slane %v1975, 4
        %v1977 = vadd.f32 %v1975, %v1976
        %v1978 = vrot.slane %v1977, 2
        %v1979 = vadd.f32 %v1977, %v1978
        %v1980 = vrot.slane %v1979, 1
        %v1981 = vadd.f32 %v1979, %v1980
        %v1982 = vlog2.pop %v1967
        %v1983 = vmul.f32 %v1982, 0.6931472
        %v1984 = vlog2.pop %v1974
        %v1985 = vmul.f32 %v1984, 0.6931472
        %v1986 = vlog2.pop %v1981
        %v1987 = vmul.f32 %v1986, 0.6931472
        %v1988 = vsub.f32 %v1943, %v1983
        %v1989 = vsub.f32 %v1944, %v1985
        %v1990 = vsub.f32 %v1945, %v1987
        %v1991 = vsub.f32 %v1946, %v1983
        %v1992 = vsub.f32 %v1947, %v1985
        %v1993 = vsub.f32 %v1948, %v1987
        %1994 = vst [vmem:[%s344] sm:$0xff] %v1988
        %1995 = vst [vmem:[%s344 + $0x8] sm:$0xff] %v1989
        %1996 = vst [vmem:[%s344 + $0x10] sm:$0xff] %v1990
        %1997 = vst [vmem:[%s344 + $0x18] sm:$0xff] %v1991
        %1998 = vst [vmem:[%s344 + $0x20] sm:$0xff] %v1992
        %1999 = vst [vmem:[%s344 + $0x28] sm:$0xff] %v1993
      $region64: #{gwnn_forward.3} parent=39 // pred_fallthru
        _
      %s2000 = smul.u32 %s22, %s21
      %s2001 = smul.u32 3, %s2000
      %p2002 = scmp.lt.s32.totalorder %s2001, 2
      %s2003 = scalar_select %p2002, %s2001, 2
      %s2004 = smul.addr %s2003, 8
      %s2005 = scalar_lea.vmem %s5, %s2004
      // Predicated region
      $region65: #{gwnn_forward.3} parent=39 // pred_check
        %p2006 = pneg %p184
      $region66: #{gwnn_forward.3} parent=39 // pred_check_branch
        %2008 = sbr.rel (%p2006) target = $region68
      $region67: #{gwnn_forward.3} parent=39 // pred_region
        %s2009 = smul.u32 %s22, %s21
        %s2010 = smul.u32 3, %s2009
      $region68: #{gwnn_forward.3} parent=39 // pred_fallthru
        _
    $region40: #{gwnn_forward.3} parent=5 // pred_fallthru
      _
    %p2011 = scmp.le.s32.totalorder 2, %s11
    // Predicated region
    $region69: #{gwnn_forward.3} parent=5 // pred_check
      %p2012 = pneg %p2011
    $region70: #{gwnn_forward.3} parent=5 // pred_check_branch
      %2014 = sbr.rel (%p2012) target = $region72
    $region71: #{gwnn_forward.3} parent=5 // pred_region
      %s2015 = ssub.s32 %s11, 2
      // Predicated region
      $region73: #{gwnn_forward.3} parent=71 // pred_check
        %p2016 = pneg %p190
      $region74: #{gwnn_forward.3} parent=71 // pred_check_branch
        %2018 = sbr.rel (%p2016) target = $region76
      $region75: #{gwnn_forward.3} parent=71 // pred_region
        %s2019 = smul.u32 %s25, %s24
        %s2020 = smul.u32 3, %s2019
        %p2021 = scmp.lt.s32.totalorder %s2020, 2
        %s2022 = scalar_select %p2021, %s2020, 2
        %s2023 = smul.addr %s2022, 8
        %s2024 = scalar_lea.vmem %s5, %s2023
      $region76: #{gwnn_forward.3} parent=71 // pred_fallthru
        _
    $region72: #{gwnn_forward.3} parent=5 // pred_fallthru
      _
  $region6: #{gwnn_forward.3} parent=0 // loop_footer
    %s15 = sadd.s32 1, %s11
  $region7: #{gwnn_forward.3} parent=0 // loop_footer_branch
    %10 = sbr.rel target = $region3
  $region8: #{gwnn_forward.3} parent=0 // loop_exit
    _

// kernel: gwnn_forward.2
$region0: #{gwnn_forward.2}
  #allocation0 [shape = 'u32[]', space=smem, size = 0x4, offset = 0x4, fixed_abs, tag = 'smem constant byte address 0x4 - core index']
  #allocation1 [shape = 'u32[144,128]{1,0:T(1,128)}', space=vmem, size = 0x12000, scoped, tag = 'internal scratch']
  #allocation2 [shape = 'bf16[32,384]{1,0:T(16,128)(2,1)}', space=vmem, size = 0x6000, scoped, tag = 'scratch operand']
  #allocation3 [shape = 'f32[32,384]{1,0:T(8,128)}', space=vmem, size = 0xc000, scoped, tag = 'scratch operand']
  #allocation4 [shape = 'f32[32,384]{1,0:T(8,128)}', space=vmem, size = 0xc000, scoped, tag = 'scratch operand']
  %s0 = inlined_call_operand.hbm [shape: bf16[32,64], index: 0, kind: input, shape index: {}]
  %s1 = inlined_call_operand.hbm [shape: bf16[64,384], index: 1, kind: input, shape index: {}]
  %s2 = inlined_call_operand.hbm [shape: bf16[384,384], index: 2, kind: input, shape index: {}]
  %s3 = inlined_call_operand.hbm [shape: bf16[384,384], index: 3, kind: input, shape index: {}]
  %s4 = inlined_call_operand.vmem [shape: f32[1,384], index: 4, kind: input, shape index: {}]
  %s5 = inlined_call_operand.vmem [shape: bf16[32,384], index: 5, kind: output, shape index: {}]
  %s6 = sld [smem:[#allocation0]]
  $region93: #{gwnn_forward.2} parent=0
    _
  %s8 = ssub.s32 1, %s6
  %s9 = scalar_select 0, %s8, %s6
  $region1: #{gwnn_forward.2} parent=0
    #allocation5 [shape = 'u8[8192]{0}', space=vmem, size = 0x2000, scoped, tag = 'input window, operand 0, single buffered']
    #allocation6 [shape = 's32[2]{0}', space=sflag, size = 0x8, scoped, tag = 'scoped memory for gwnn_forward.2']
    #allocation7 [shape = 'u8[49152]{0}', space=vmem, size = 0xc000, scoped, tag = 'input window, operand 1, single buffered']
    #allocation8 [shape = 's32[1]{0}', space=sflag, size = 0x4, scoped, tag = 'scoped memory for gwnn_forward.2']
    #allocation9 [shape = 'u8[589824]{0}', space=vmem, size = 0x90000, scoped, tag = 'input window, operand 2']
    #allocation10 [shape = 'u8[589824]{0}', space=vmem, size = 0x90000, scoped, tag = 'input window, operand 3']
    %10 = vsyncpa [#allocation6], 0
    %11 = vsyncpa [#allocation8], 0
    loop: start=0, step=1, limit=4
    $region2: #{gwnn_forward.2} parent=1 // loop_pre_header
      _
    $region3: #{gwnn_forward.2} parent=1 // loop_header
      %s13 = sphi 0, %s17
      %p14 = scmp.ge.s32.totalorder %s13, 4
      %s20 = sphi 0, %s39
      %s21 = sphi 0, %s35
      %s22 = sphi 0, %s31
      %s23 = sphi 0, %s20
      %s24 = sphi 0, %s21
      %s25 = sphi 0, %s22
      %s26 = sphi 0, %s23
      %s27 = sphi 0, %s24
      %s28 = sphi 0, %s25
      %s40 = sphi 0, %s40
      %s42 = sphi 0, %s40
      %s43 = sphi 0, %s42
      %s57 = sphi 0, %s43
      %s61 = sphi 0, %s61
      %s63 = sphi 0, %s61
      %s64 = sphi 0, %s63
      %s78 = sphi 0, %s64
      %s92 = sphi 0, %s94
      %s95 = sphi 0, %s92
      %s96 = sphi 0, %s95
      %s112 = sphi 0, %s96
      %s124 = sphi 0, %s126
      %s127 = sphi 0, %s124
      %s128 = sphi 0, %s127
      %s144 = sphi 0, %s128
      %s148 = sphi 0, %s148
      %s150 = sphi 0, %s148
      %s151 = sphi 0, %s150
      %s165 = sphi 0, %s151
      %s173 = sphi 0, %s175
      %s176 = sphi 0, %s173
      %s177 = sphi 0, %s176
      %s193 = sphi 0, %s177
    $region4: #{gwnn_forward.2} parent=1 // loop_header_branch
      %16 = sbr.rel (%p14) target = $region8
    $region5: #{gwnn_forward.2} parent=1 // loop_body
      %s18 = ssub.s32 %s13, 1
      %s19 = ssub.s32 %s13, 2
      %s29 = sadd.s32 1, %s22
      %p30 = scmp.ge.s32.totalorder %s29, 1
      %s31 = scalar_select %p30, 0, %s29
      %s32 = sadd.s32 1, %s21
      %s33 = scalar_select %p30, %s32, %s21
      %p34 = scmp.ge.s32.totalorder %s33, 1
      %s35 = scalar_select %p34, 0, %s33
      %s36 = sadd.s32 1, %s20
      %s37 = scalar_select %p34, %s36, %s20
      %p38 = scmp.ge.s32.totalorder %s37, 2
      %s39 = scalar_select %p38, 0, %s37
      %s41 = sadd.s32 %s40, 1
      %p44 = scmp.eq.s32.totalorder %s13, 1
      %p45 = scmp.ne.s32.totalorder %s40, %s42
      %p46 = scmp.eq.s32.totalorder %s13, 0
      %p47 = por %p45, %p46
      %p48 = scmp.ne.s32.totalorder %s40, %s42
      %p49 = scmp.eq.s32.totalorder %s18, 1
      %p50 = por %p48, %p49
      %p51 = scmp.ne.s32.totalorder %s42, %s43
      %p52 = scmp.eq.s32.totalorder %s18, 0
      %p53 = por %p51, %p52
      %p54 = scmp.ne.s32.totalorder %s42, %s43
      %p55 = scmp.eq.s32.totalorder %s19, 1
      %p56 = por %p54, %p55
      %p58 = scmp.ne.s32.totalorder %s43, %s57
      %p59 = scmp.eq.s32.totalorder %s19, 0
      %p60 = por %p58, %p59
      %s62 = sadd.s32 %s61, 1
      %p65 = scmp.eq.s32.totalorder %s13, 1
      %p66 = scmp.ne.s32.totalorder %s61, %s63
      %p67 = scmp.eq.s32.totalorder %s13, 0
      %p68 = por %p66, %p67
      %p69 = scmp.ne.s32.totalorder %s61, %s63
      %p70 = scmp.eq.s32.totalorder %s18, 1
      %p71 = por %p69, %p70
      %p72 = scmp.ne.s32.totalorder %s63, %s64
      %p73 = scmp.eq.s32.totalorder %s18, 0
      %p74 = por %p72, %p73
      %p75 = scmp.ne.s32.totalorder %s63, %s64
      %p76 = scmp.eq.s32.totalorder %s19, 1
      %p77 = por %p75, %p76
      %p79 = scmp.ne.s32.totalorder %s64, %s78
      %p80 = scmp.eq.s32.totalorder %s19, 0
      %p81 = por %p79, %p80
      %s82 = ssub.s32 1, %s20
      %s83 = smul.u32 %s22, %s82
      %s84 = smul.u32 %s21, %s82
      %s85 = ssub.s32 1, %s39
      %s86 = smul.u32 %s31, %s85
      %s87 = smul.u32 %s35, %s85
      %s88 = ssub.s32 %s83, %s86
      %s89 = ssub.s32 %s84, %s87
      %s90 = sor.u32 %s88, %s89
      %p91 = scmp.eq.s32.totalorder %s90, 0
      %s93 = sadd.s32 %s92, 1
      %s94 = scalar_select %p91, %s92, %s93
      %p97 = pneg %p91
      %p98 = scmp.eq.s32.totalorder %s13, 1
      %p99 = por %p97, %p98
      %p100 = scmp.ne.s32.totalorder %s92, %s95
      %p101 = scmp.eq.s32.totalorder %s13, 0
      %p102 = por %p100, %p101
      %p103 = scmp.ne.s32.totalorder %s92, %s95
      %p104 = scmp.eq.s32.totalorder %s18, 1
      %p105 = por %p103, %p104
      %p106 = scmp.ne.s32.totalorder %s95, %s96
      %p107 = scmp.eq.s32.totalorder %s18, 0
      %p108 = por %p106, %p107
      %p109 = scmp.ne.s32.totalorder %s95, %s96
      %p110 = scmp.eq.s32.totalorder %s19, 1
      %p111 = por %p109, %p110
      %p113 = scmp.ne.s32.totalorder %s96, %s112
      %p114 = scmp.eq.s32.totalorder %s19, 0
      %p115 = por %p113, %p114
      %s116 = smul.u32 %s22, %s20
      %s117 = smul.u32 %s21, %s20
      %s118 = smul.u32 %s31, %s39
      %s119 = smul.u32 %s35, %s39
      %s120 = ssub.s32 %s116, %s118
      %s121 = ssub.s32 %s117, %s119
      %s122 = sor.u32 %s120, %s121
      %p123 = scmp.eq.s32.totalorder %s122, 0
      %s125 = sadd.s32 %s124, 1
      %s126 = scalar_select %p123, %s124, %s125
      %p129 = pneg %p123
      %p130 = scmp.eq.s32.totalorder %s13, 1
      %p131 = por %p129, %p130
      %p132 = scmp.ne.s32.totalorder %s124, %s127
      %p133 = scmp.eq.s32.totalorder %s13, 0
      %p134 = por %p132, %p133
      %p135 = scmp.ne.s32.totalorder %s124, %s127
      %p136 = scmp.eq.s32.totalorder %s18, 1
      %p137 = por %p135, %p136
      %p138 = scmp.ne.s32.totalorder %s127, %s128
      %p139 = scmp.eq.s32.totalorder %s18, 0
      %p140 = por %p138, %p139
      %p141 = scmp.ne.s32.totalorder %s127, %s128
      %p142 = scmp.eq.s32.totalorder %s19, 1
      %p143 = por %p141, %p142
      %p145 = scmp.ne.s32.totalorder %s128, %s144
      %p146 = scmp.eq.s32.totalorder %s19, 0
      %p147 = por %p145, %p146
      %s149 = sadd.s32 %s148, 1
      %p152 = scmp.eq.s32.totalorder %s13, 1
      %p153 = scmp.ne.s32.totalorder %s148, %s150
      %p154 = scmp.eq.s32.totalorder %s13, 0
      %p155 = por %p153, %p154
      %p156 = scmp.ne.s32.totalorder %s148, %s150
      %p157 = scmp.eq.s32.totalorder %s18, 1
      %p158 = por %p156, %p157
      %p159 = scmp.ne.s32.totalorder %s150, %s151
      %p160 = scmp.eq.s32.totalorder %s18, 0
      %p161 = por %p159, %p160
      %p162 = scmp.ne.s32.totalorder %s150, %s151
      %p163 = scmp.eq.s32.totalorder %s19, 1
      %p164 = por %p162, %p163
      %p166 = scmp.ne.s32.totalorder %s151, %s165
      %p167 = scmp.eq.s32.totalorder %s19, 0
      %p168 = por %p166, %p167
      %s169 = smul.u32 %s21, %s20
      %s170 = smul.u32 %s35, %s39
      %s171 = ssub.s32 %s169, %s170
      %p172 = scmp.eq.s32.totalorder %s171, 0
      %s174 = sadd.s32 %s173, 1
      %s175 = scalar_select %p172, %s173, %s174
      %p178 = pneg %p172
      %p179 = scmp.eq.s32.totalorder %s13, 1
      %p180 = por %p178, %p179
      %p181 = scmp.ne.s32.totalorder %s173, %s176
      %p182 = scmp.eq.s32.totalorder %s13, 0
      %p183 = por %p181, %p182
      %p184 = scmp.ne.s32.totalorder %s173, %s176
      %p185 = scmp.eq.s32.totalorder %s18, 1
      %p186 = por %p184, %p185
      %p187 = scmp.ne.s32.totalorder %s176, %s177
      %p188 = scmp.eq.s32.totalorder %s18, 0
      %p189 = por %p187, %p188
      %p190 = scmp.ne.s32.totalorder %s176, %s177
      %p191 = scmp.eq.s32.totalorder %s19, 1
      %p192 = por %p190, %p191
      %p194 = scmp.ne.s32.totalorder %s177, %s193
      %p195 = scmp.eq.s32.totalorder %s19, 0
      %p196 = por %p194, %p195
      %p197 = scmp.le.s32.totalorder 1, %s13
      %p198 = scmp.lt.s32.totalorder %s13, 3
      %p199 = pnand %p197, %p198
      %p200 = pneg %p199
      // Predicated region
      $region9: #{gwnn_forward.2} parent=5 // pred_check
        _
      $region10: #{gwnn_forward.2} parent=5 // pred_check_branch
        %202 = sbr.rel (%p199) target = $region12
      $region11: #{gwnn_forward.2} parent=5 // pred_region
        %s203 = ssub.s32 %s13, 1
        // Predicated region
        $region13: #{gwnn_forward.2} parent=11 // pred_check
          %p204 = pneg %p53
        $region14: #{gwnn_forward.2} parent=11 // pred_check_branch
          %206 = sbr.rel (%p204) target = $region16
        $region15: #{gwnn_forward.2} parent=11 // pred_region
          %s208 = ssub.s32 256, 256
          %209 = vsyncadd [#allocation6], %s208
          %s210 = sshll.u32 [#allocation5], 4
          %s211 = int_to_ptr.vmem [resolvable:$true] %s210
          %216 = dma.hbm_to_vmem [thread:$0]  %s0, 256, %s211, [#allocation6], 64, 64, 4
        $region16: #{gwnn_forward.2} parent=11 // pred_fallthru
          _
        // Predicated region
        $region17: #{gwnn_forward.2} parent=11 // pred_check
          %p217 = pneg %p74
        $region18: #{gwnn_forward.2} parent=11 // pred_check_branch
          %219 = sbr.rel (%p217) target = $region20
        $region19: #{gwnn_forward.2} parent=11 // pred_region
          %s221 = ssub.s32 1536, 1536
          %222 = vsyncadd [#allocation8], %s221
          %s223 = sshll.u32 [#allocation7], 4
          %s224 = int_to_ptr.vmem [resolvable:$true] %s223
          %229 = dma.hbm_to_vmem [thread:$0]  %s1, 1536, %s224, [#allocation8], 192, 192, 12
        $region20: #{gwnn_forward.2} parent=11 // pred_fallthru
          _
        // Predicated region
        $region21: #{gwnn_forward.2} parent=11 // pred_check
          %p230 = pneg %p161
        $region22: #{gwnn_forward.2} parent=11 // pred_check_branch
          %232 = sbr.rel (%p230) target = $region24
        $region23: #{gwnn_forward.2} parent=11 // pred_region
          _
        $region24: #{gwnn_forward.2} parent=11 // pred_fallthru
          _
      $region12: #{gwnn_forward.2} parent=5 // pred_fallthru
        _
      %p233 = scmp.lt.s32.totalorder %s13, 2
      // Predicated region
      $region25: #{gwnn_forward.2} parent=5 // pred_check
        %p234 = pneg %p233
      $region26: #{gwnn_forward.2} parent=5 // pred_check_branch
        %236 = sbr.rel (%p234) target = $region28
      $region27: #{gwnn_forward.2} parent=5 // pred_region
        // Predicated region
        $region29: #{gwnn_forward.2} parent=27 // pred_check
          %p237 = pneg %p102
        $region30: #{gwnn_forward.2} parent=27 // pred_check_branch
          %239 = sbr.rel (%p237) target = $region32
        $region31: #{gwnn_forward.2} parent=27 // pred_region
          %s240 = sand.u32 %s13, 1
          %s241 = scalar_lea.sflag [#allocation6], %s240
          %s242 = sand.u32 %s92, 1
          %s243 = smul.addr %s242, 576
          %s244 = scalar_lea.vmem [#allocation9], %s243
          %s245 = ssub.s32 1, %s20
          %s246 = smul.u32 %s22, %s245
          %s247 = smul.u32 %s21, %s245
          %s248 = smul.u32 48, %s246
          %s249 = smul.u32 3, %s247
          %s251 = ssub.s32 9216, 9216
          %252 = vsyncadd %s241, %s251
          %s253 = smul.addr %s248, 3
          %s254 = sadd.s32 %s249, %s253
          %s255 = smul.addr %s254, 64
          %s256 = scalar_lea.hbm %s2, %s255
          %s257 = sshll.u32 %s244, 4
          %s258 = int_to_ptr.vmem [resolvable:$true] %s257
          %263 = dma.hbm_to_vmem [thread:$0]  %s256, 9216, %s258, %s241, 192, 192, 12
        $region32: #{gwnn_forward.2} parent=27 // pred_fallthru
          _
        // Predicated region
        $region33: #{gwnn_forward.2} parent=27 // pred_check
          %p264 = pneg %p134
        $region34: #{gwnn_forward.2} parent=27 // pred_check_branch
          %266 = sbr.rel (%p264) target = $region36
        $region35: #{gwnn_forward.2} parent=27 // pred_region
          %s267 = sand.u32 %s13, 1
          %s268 = scalar_lea.sflag [#allocation6], %s267
          %s269 = sand.u32 %s124, 1
          %s270 = smul.addr %s269, 576
          %s271 = scalar_lea.vmem [#allocation10], %s270
          %s272 = smul.u32 %s22, %s20
          %s273 = smul.u32 %s21, %s20
          %s274 = smul.u32 48, %s272
          %s275 = smul.u32 3, %s273
          %s277 = ssub.s32 9216, 9216
          %278 = vsyncadd %s268, %s277
          %s279 = smul.addr %s274, 3
          %s280 = sadd.s32 %s275, %s279
          %s281 = smul.addr %s280, 64
          %s282 = scalar_lea.hbm %s3, %s281
          %s283 = sshll.u32 %s271, 4
          %s284 = int_to_ptr.vmem [resolvable:$true] %s283
          %289 = dma.hbm_to_vmem [thread:$0]  %s282, 9216, %s284, %s268, 192, 192, 12
        $region36: #{gwnn_forward.2} parent=27 // pred_fallthru
          _
      $region28: #{gwnn_forward.2} parent=5 // pred_fallthru
        _
      %p290 = scmp.le.s32.totalorder 1, %s13
      %p291 = scmp.lt.s32.totalorder %s13, 3
      %p292 = pnand %p290, %p291
      %p293 = pneg %p292
      // Predicated region
      $region37: #{gwnn_forward.2} parent=5 // pred_check
        _
      $region38: #{gwnn_forward.2} parent=5 // pred_check_branch
        %295 = sbr.rel (%p292) target = $region40
      $region39: #{gwnn_forward.2} parent=5 // pred_region
        %s296 = ssub.s32 %s13, 1
        // Predicated region
        $region41: #{gwnn_forward.2} parent=39 // pred_check
          %p297 = pneg %p53
        $region42: #{gwnn_forward.2} parent=39 // pred_check_branch
          %299 = sbr.rel (%p297) target = $region44
        $region43: #{gwnn_forward.2} parent=39 // pred_region
          %300 = dma.done [#allocation6], 256
        $region44: #{gwnn_forward.2} parent=39 // pred_fallthru
          _
        // Predicated region
        $region45: #{gwnn_forward.2} parent=39 // pred_check
          %p301 = pneg %p74
        $region46: #{gwnn_forward.2} parent=39 // pred_check_branch
          %303 = sbr.rel (%p301) target = $region48
        $region47: #{gwnn_forward.2} parent=39 // pred_region
          %304 = dma.done [#allocation8], 1536
        $region48: #{gwnn_forward.2} parent=39 // pred_fallthru
          _
        %s305 = sand.u32 %s18, 1
        %s306 = scalar_lea.sflag [#allocation6], %s305
        %s307 = sand.u32 %s95, 1
        %s308 = smul.addr %s307, 576
        %s309 = scalar_lea.vmem [#allocation9], %s308
        // Predicated region
        $region49: #{gwnn_forward.2} parent=39 // pred_check
          %p310 = pneg %p108
        $region50: #{gwnn_forward.2} parent=39 // pred_check_branch
          %312 = sbr.rel (%p310) target = $region52
        $region51: #{gwnn_forward.2} parent=39 // pred_region
          %313 = dma.done %s306, 9216
        $region52: #{gwnn_forward.2} parent=39 // pred_fallthru
          _
        %s314 = sand.u32 %s18, 1
        %s315 = scalar_lea.sflag [#allocation6], %s314
        %s316 = sand.u32 %s127, 1
        %s317 = smul.addr %s316, 576
        %s318 = scalar_lea.vmem [#allocation10], %s317
        // Predicated region
        $region53: #{gwnn_forward.2} parent=39 // pred_check
          %p319 = pneg %p140
        $region54: #{gwnn_forward.2} parent=39 // pred_check_branch
          %321 = sbr.rel (%p319) target = $region56
        $region55: #{gwnn_forward.2} parent=39 // pred_region
          %322 = dma.done %s315, 9216
        $region56: #{gwnn_forward.2} parent=39 // pred_fallthru
          _
        %p323 = pneg %p53
        %p324 = pneg %p50
        %p325 = pneg %p74
        %p326 = pneg %p71
        %s327 = sand.u32 %s18, 1
        %s328 = scalar_lea.sflag [#allocation6], %s327
        %s329 = sand.u32 %s95, 1
        %s330 = smul.addr %s329, 576
        %s331 = scalar_lea.vmem [#allocation9], %s330
        %p332 = pneg %p108
        %p333 = pneg %p105
        %s334 = sand.u32 %s18, 1
        %s335 = scalar_lea.sflag [#allocation6], %s334
        %s336 = sand.u32 %s127, 1
        %s337 = smul.addr %s336, 576
        %s338 = scalar_lea.vmem [#allocation10], %s337
        %p339 = pneg %p140
        %p340 = pneg %p137
        %p341 = pneg %p161
        %p342 = pneg %p158
        %p343 = pneg %p189
        %p344 = pneg %p186
        %s345 = smul.u32 %s24, %s23
        %s346 = smul.u32 3, %s345
        %p347 = scmp.lt.s32.totalorder %s346, 2
        %s348 = scalar_select %p347, %s346, 2
        %s349 = smul.addr %s348, 4
        %s350 = scalar_lea.vmem %s5, %s349
        %s351 = ssub.s32 1, %s23
        %s352 = smul.u32 %s25, %s351
        %s353 = smul.u32 %s24, %s351
        %s354 = smul.u32 48, %s352
        %s355 = smul.u32 3, %s353
        %s356 = smul.u32 %s25, %s23
        %s357 = smul.u32 %s24, %s23
        %s358 = smul.u32 48, %s356
        %s359 = smul.u32 3, %s357
        %s360 = smul.u32 %s24, %s23
        %s361 = smul.u32 3, %s360
        %p362 = scmp.lt.s32.totalorder %s361, 2
        %s363 = scalar_select %p362, %s361, 2
        %s364 = smul.addr %s363, 4
        %s365 = scalar_lea.vmem %s5, %s364
        %s366 = smul.u32 %s24, %s23
        %s367 = smul.u32 3, %s366
        %p369 = scmp.eq.s32.totalorder %s23, 0
        %p370 = scmp.eq.s32.totalorder %s24, 0
        %p371 = pnand %p369, %p370
        %p372 = pneg %p371
        %p373 = scmp.eq.s32.totalorder %s25, 0
        %p374 = pnand %p372, %p373
        %p375 = pneg %p374
        // Predicated region
        $region57: #{gwnn_forward.2} parent=39 // pred_check
          _
        $region58: #{gwnn_forward.2} parent=39 // pred_check_branch
          %377 = sbr.rel (%p374) target = $region60
        $region59: #{gwnn_forward.2} parent=39 // pred_region
          %v378 = vld [vmem:[#allocation5] sm:$0xf]
          %v379 = vld [vmem:[#allocation5 + $0x4] sm:$0xf]
          %v380 = vld [vmem:[#allocation5 + $0x8] sm:$0xf]
          %v381 = vld [vmem:[#allocation5 + $0xc] sm:$0xf]
          %v382 = vld [vmem:[#allocation7] sm:$0xff]
          %v383 = vld [vmem:[#allocation7 + $0x8] sm:$0xf]
          %v384 = vld [vmem:[#allocation7 + $0xc] sm:$0xff]
          %v385 = vld [vmem:[#allocation7 + $0x14] sm:$0xf]
          %v386 = vld [vmem:[#allocation7 + $0x18] sm:$0xff]
          %v387 = vld [vmem:[#allocation7 + $0x20] sm:$0xf]
          %v388 = vld [vmem:[#allocation7 + $0x24] sm:$0xff]
          %v389 = vld [vmem:[#allocation7 + $0x2c] sm:$0xf]
          %v390 = vld [vmem:[#allocation7 + $0x30] sm:$0xff]
          %v391 = vld [vmem:[#allocation7 + $0x38] sm:$0xf]
          %v392 = vld [vmem:[#allocation7 + $0x3c] sm:$0xff]
          %v393 = vld [vmem:[#allocation7 + $0x44] sm:$0xf]
          %v394 = vld [vmem:[#allocation7 + $0x48] sm:$0xff]
          %v395 = vld [vmem:[#allocation7 + $0x50] sm:$0xf]
          %v396 = vld [vmem:[#allocation7 + $0x54] sm:$0xff]
          %v397 = vld [vmem:[#allocation7 + $0x5c] sm:$0xf]
          %v402 = vunpack.c.l.b16 %v378
          %v403 = vunpack.c.l.b16 %v379
          %v404 = vunpack.c.l.b16 %v380
          %v405 = vunpack.c.l.b16 %v381
          %v406 = vpack.c.b16 %v403, %v402
          %v407 = vpack.c.b16 %v405, %v404
          %v424 = vunpack.c.l.b16 %v382
          %v425 = vunpack.c.h.b16 %v382
          %v426 = vunpack.c.l.b16 %v383
          %v427 = vunpack.c.l.b16 %v384
          %v428 = vunpack.c.h.b16 %v384
          %v429 = vunpack.c.l.b16 %v385
          %v430 = vunpack.c.l.b16 %v386
          %v431 = vunpack.c.h.b16 %v386
          %v432 = vunpack.c.l.b16 %v387
          %v433 = vunpack.c.l.b16 %v388
          %v434 = vunpack.c.h.b16 %v388
          %v435 = vunpack.c.l.b16 %v389
          %v436 = vunpack.c.l.b16 %v390
          %v437 = vunpack.c.h.b16 %v390
          %v438 = vunpack.c.l.b16 %v391
          %v439 = vunpack.c.l.b16 %v392
          %v440 = vunpack.c.h.b16 %v392
          %v441 = vunpack.c.l.b16 %v393
          %v442 = vunpack.c.l.b16 %v394
          %v443 = vunpack.c.h.b16 %v394
          %v444 = vunpack.c.l.b16 %v395
          %v445 = vunpack.c.l.b16 %v396
          %v446 = vunpack.c.h.b16 %v396
          %v447 = vunpack.c.l.b16 %v397
          %v448 = vpack.c.b16 %v427, %v424
          %v449 = vpack.c.b16 %v428, %v425
          %v450 = vpack.c.b16 %v429, %v426
          %v451 = vpack.c.b16 %v433, %v430
          %v452 = vpack.c.b16 %v434, %v431
          %v453 = vpack.c.b16 %v435, %v432
          %v454 = vpack.c.b16 %v439, %v436
          %v455 = vpack.c.b16 %v440, %v437
          %v456 = vpack.c.b16 %v441, %v438
          %v457 = vpack.c.b16 %v445, %v442
          %v458 = vpack.c.b16 %v446, %v443
          %v459 = vpack.c.b16 %v447, %v444
          %vm472 = vcmask 523264
          %v474 = vsel %vm472, %v406, 0
          %v477 = vsel %vm472, %v407, 0
          %479 = vmatprep.subr.bf16.mxu0 %v449
          %480 = vmatpush1.bf16.msra.mxu0 %v448
          %481 = vmatprep.subr.bf16.mxu0 %v452
          %482 = vmatpush1.bf16.msra.mxu0 %v451
          %483 = vmatprep.subr.bf16.mxu0 %v455
          %484 = vmatpush1.bf16.msra.mxu0 %v454
          %485 = vmatprep.subr.bf16.mxu0 %v458
          %486 = vmatpush1.bf16.msra.mxu0 %v457
          %487 = vmatprep.subr.bf16.mxu0 0
          %488 = vmatpush1.bf16.msra.mxu0 0
          %489 = vmatprep.subr.bf16.mxu0 0
          %490 = vmatpush1.bf16.msra.mxu0 0
          %491 = vmatprep.subr.bf16.mxu0 0
          %492 = vmatpush1.bf16.msra.mxu0 0
          %493 = vmatprep.subr.bf16.mxu0 0
          %494 = vmatpush1.bf16.msra.mxu0 0
          %495 = vmatprep.subr.bf16.mxu0 0
          %496 = vmatpush1.bf16.msra.mxu0 0
          %497 = vmatprep.subr.bf16.mxu0 0
          %498 = vmatpush1.bf16.msra.mxu0 0
          %499 = vmatprep.subr.bf16.mxu0 0
          %500 = vmatpush1.bf16.msra.mxu0 0
          %501 = vmatprep.subr.bf16.mxu0 0
          %502 = vmatpush1.bf16.msra.mxu0 0
          %503 = vmatprep.subr.bf16.mxu0 0
          %504 = vmatpush1.bf16.msra.mxu0 0
          %505 = vmatprep.subr.bf16.mxu0 0
          %506 = vmatpush1.bf16.msra.mxu0 0
          %507 = vmatprep.subr.bf16.mxu0 0
          %508 = vmatpush1.bf16.msra.mxu0 0
          %509 = vmatprep.subr.bf16.mxu0 0
          %510 = vmatpush1.bf16.msra.mxu0 0
          %511 = vmatprep.mubr.bf16.mxu0 0
          %512 = vmatmul.mubr.bf16.gmra.mrb[0].mxu0 %v474
          %v513 = vpop.f32.mrb[0].mxu0
          %v514 = vadd.f32 0.0, %v513
          %v515 = vpop.f32.mrb[0].mxu0
          %v516 = vadd.f32 0.0, %v515
          %v517 = vpop.f32.mrb[0].mxu0
          %v518 = vadd.f32 0.0, %v517
          %v519 = vpop.f32.mrb[0].mxu0
          %v520 = vadd.f32 0.0, %v519
          %521 = vmatprep.mubr.bf16.mxu0 0
          %522 = vmatmul.mubr.bf16.gmra.mrb[0].mxu0 %v477
          %v523 = vpop.f32.mrb[0].mxu0
          %v524 = vadd.f32 0.0, %v523
          %v525 = vpop.f32.mrb[0].mxu0
          %v526 = vadd.f32 0.0, %v525
          %v527 = vpop.f32.mrb[0].mxu0
          %v528 = vadd.f32 0.0, %v527
          %v529 = vpop.f32.mrb[0].mxu0
          %v530 = vadd.f32 0.0, %v529
          %531 = vdwg.mxu0
          %532 = vmatprep.subr.bf16.mxu0 0
          %533 = vmatpush1.bf16.msra.mxu0 %v450
          %534 = vmatprep.subr.bf16.mxu0 0
          %535 = vmatpush1.bf16.msra.mxu0 %v453
          %536 = vmatprep.subr.bf16.mxu0 0
          %537 = vmatpush1.bf16.msra.mxu0 %v456
          %538 = vmatprep.subr.bf16.mxu0 0
          %539 = vmatpush1.bf16.msra.mxu0 %v459
          %540 = vmatprep.subr.bf16.mxu0 0
          %541 = vmatpush1.bf16.msra.mxu0 0
          %542 = vmatprep.subr.bf16.mxu0 0
          %543 = vmatpush1.bf16.msra.mxu0 0
          %544 = vmatprep.subr.bf16.mxu0 0
          %545 = vmatpush1.bf16.msra.mxu0 0
          %546 = vmatprep.subr.bf16.mxu0 0
          %547 = vmatpush1.bf16.msra.mxu0 0
          %548 = vmatprep.subr.bf16.mxu0 0
          %549 = vmatpush1.bf16.msra.mxu0 0
          %550 = vmatprep.subr.bf16.mxu0 0
          %551 = vmatpush1.bf16.msra.mxu0 0
          %552 = vmatprep.subr.bf16.mxu0 0
          %553 = vmatpush1.bf16.msra.mxu0 0
          %554 = vmatprep.subr.bf16.mxu0 0
          %555 = vmatpush1.bf16.msra.mxu0 0
          %556 = vmatprep.subr.bf16.mxu0 0
          %557 = vmatpush1.bf16.msra.mxu0 0
          %558 = vmatprep.subr.bf16.mxu0 0
          %559 = vmatpush1.bf16.msra.mxu0 0
          %560 = vmatprep.subr.bf16.mxu0 0
          %561 = vmatpush1.bf16.msra.mxu0 0
          %562 = vmatprep.subr.bf16.mxu0 0
          %563 = vmatpush1.bf16.msra.mxu0 0
          %564 = vmatprep.mubr.bf16.mxu0 0
          %565 = vmatmul.mubr.bf16.gmra.mrb[0].mxu0 %v474
          %v566 = vpop.f32.mrb[0].mxu0
          %v567 = vadd.f32 0.0, %v566
          %v568 = vpop.f32.mrb[0].mxu0
          %v569 = vpop.f32.mrb[0].mxu0
          %v570 = vadd.f32 0.0, %v569
          %v571 = vpop.f32.mrb[0].mxu0
          %572 = vmatprep.mubr.bf16.mxu0 0
          %573 = vmatmul.mubr.bf16.gmra.mrb[0].mxu0 %v477
          %v574 = vpop.f32.mrb[0].mxu0
          %v575 = vadd.f32 0.0, %v574
          %v576 = vpop.f32.mrb[0].mxu0
          %v577 = vpop.f32.mrb[0].mxu0
          %v578 = vadd.f32 0.0, %v577
          %v579 = vpop.f32.mrb[0].mxu0
          %580 = vdwg.mxu0
          %v581 = vpack.c.bf16 %v518, %v514
          %v582 = vpack.c.bf16 %v520, %v516
          %v583 = vpack.c.bf16 %v570, %v567
          %v584 = vpack.c.bf16 %v528, %v524
          %v585 = vpack.c.bf16 %v530, %v526
          %v586 = vpack.c.bf16 %v578, %v575
          %587 = vst [vmem:[#allocation2] sm:$0xff] %v581
          %588 = vst [vmem:[#allocation2 + $0x8] sm:$0xff] %v582
          %589 = vst [vmem:[#allocation2 + $0x10] sm:$0xff] %v583
          %590 = vst [vmem:[#allocation2 + $0x18] sm:$0xff] %v584
          %591 = vst [vmem:[#allocation2 + $0x20] sm:$0xff] %v585
          %592 = vst [vmem:[#allocation2 + $0x28] sm:$0xff] %v586
        $region60: #{gwnn_forward.2} parent=39 // pred_fallthru
          _
        // Predicated region
        $region61: #{gwnn_forward.2} parent=39 // pred_check
          %p593 = pneg %p373
        $region62: #{gwnn_forward.2} parent=39 // pred_check_branch
          %595 = sbr.rel (%p593) target = $region64
        $region63: #{gwnn_forward.2} parent=39 // pred_region
          %596 = vst [vmem:[#allocation4] sm:$0xff] 0.0
          %597 = vst [vmem:[#allocation4 + $0x8] sm:$0xff] 0.0
          %598 = vst [vmem:[#allocation4 + $0x10] sm:$0xff] 0.0
          %599 = vst [vmem:[#allocation4 + $0x18] sm:$0xff] 0.0
          %600 = vst [vmem:[#allocation4 + $0x20] sm:$0xff] 0.0
          %601 = vst [vmem:[#allocation4 + $0x28] sm:$0xff] 0.0
          %602 = vst [vmem:[#allocation4 + $0x30] sm:$0xff] 0.0
          %603 = vst [vmem:[#allocation4 + $0x38] sm:$0xff] 0.0
          %604 = vst [vmem:[#allocation4 + $0x40] sm:$0xff] 0.0
          %605 = vst [vmem:[#allocation4 + $0x48] sm:$0xff] 0.0
          %606 = vst [vmem:[#allocation4 + $0x50] sm:$0xff] 0.0
          %607 = vst [vmem:[#allocation4 + $0x58] sm:$0xff] 0.0
        $region64: #{gwnn_forward.2} parent=39 // pred_fallthru
          _
        %s608 = smul.u32 %s25, 384
        %s609 = smul.u32 %s24, 384
        // Predicated region
        $region65: #{gwnn_forward.2} parent=39 // pred_check
          %p610 = pneg %p369
        $region66: #{gwnn_forward.2} parent=39 // pred_check_branch
          %612 = sbr.rel (%p610) target = $region68
        $region67: #{gwnn_forward.2} parent=39 // pred_region
          %v613 = vld [vmem:[#allocation4] sm:$0xff]
          %v614 = vld [vmem:[#allocation4 + $0x8] sm:$0xff]
          %v615 = vld [vmem:[#allocation4 + $0x10] sm:$0xff]
          %v616 = vld [vmem:[#allocation4 + $0x18] sm:$0xff]
          %v617 = vld [vmem:[#allocation4 + $0x20] sm:$0xff]
          %v618 = vld [vmem:[#allocation4 + $0x28] sm:$0xff]
          %v619 = vld [vmem:[#allocation4 + $0x30] sm:$0xff]
          %v620 = vld [vmem:[#allocation4 + $0x38] sm:$0xff]
          %v621 = vld [vmem:[#allocation4 + $0x40] sm:$0xff]
          %v622 = vld [vmem:[#allocation4 + $0x48] sm:$0xff]
          %v623 = vld [vmem:[#allocation4 + $0x50] sm:$0xff]
          %v624 = vld [vmem:[#allocation4 + $0x58] sm:$0xff]
          %s625 = sshra.s32 %s608, 7
          %s626 = sand.u32 %s608, 127
          %s627 = smul.addr %s625, 8
          %s628 = scalar_lea.vmem [#allocation2], %s627
          %v629 = vld [vmem:[%s628] sm:$0xff]
          %v630 = vld [vmem:[%s628 + $0x8] sm:$0xff]
          %v631 = vld [vmem:[%s628 + $0x10] sm:$0xff]
          %v632 = vld [vmem:[%s628 + $0x18] sm:$0xff]
          %v633 = vld [vmem:[%s628 + $0x20] sm:$0xff]
          %v634 = vld [vmem:[%s628 + $0x28] sm:$0xff]
          %v635 = vld [vmem:[%s309] sm:$0xff]
          %v636 = vld [vmem:[%s309 + $0x8] sm:$0xf]
          %v637 = vld [vmem:[%s309 + $0xc] sm:$0xff]
          %v638 = vld [vmem:[%s309 + $0x14] sm:$0xf]
          %v639 = vld [vmem:[%s309 + $0x18] sm:$0xff]
          %v640 = vld [vmem:[%s309 + $0x20] sm:$0xf]
          %v641 = vld [vmem:[%s309 + $0x24] sm:$0xff]
          %v642 = vld [vmem:[%s309 + $0x2c] sm:$0xf]
          %v643 = vld [vmem:[%s309 + $0x30] sm:$0xff]
          %v644 = vld [vmem:[%s309 + $0x38] sm:$0xf]
          %v645 = vld [vmem:[%s309 + $0x3c] sm:$0xff]
          %v646 = vld [vmem:[%s309 + $0x44] sm:$0xf]
          %v647 = vld [vmem:[%s309 + $0x48] sm:$0xff]
          %v648 = vld [vmem:[%s309 + $0x50] sm:$0xf]
          %v649 = vld [vmem:[%s309 + $0x54] sm:$0xff]
          %v650 = vld [vmem:[%s309 + $0x5c] sm:$0xf]
          %v651 = vld [vmem:[%s309 + $0x60] sm:$0xff]
          %v652 = vld [vmem:[%s309 + $0x68] sm:$0xf]
          %v653 = vld [vmem:[%s309 + $0x6c] sm:$0xff]
          %v654 = vld [vmem:[%s309 + $0x74] sm:$0xf]
          %v655 = vld [vmem:[%s309 + $0x78] sm:$0xff]
          %v656 = vld [vmem:[%s309 + $0x80] sm:$0xf]
          %v657 = vld [vmem:[%s309 + $0x84] sm:$0xff]
          %v658 = vld [vmem:[%s309 + $0x8c] sm:$0xf]
          %v659 = vld [vmem:[%s309 + $0x90] sm:$0xff]
          %v660 = vld [vmem:[%s309 + $0x98] sm:$0xf]
          %v661 = vld [vmem:[%s309 + $0x9c] sm:$0xff]
          %v662 = vld [vmem:[%s309 + $0xa4] sm:$0xf]
          %v663 = vld [vmem:[%s309 + $0xa8] sm:$0xff]
          %v664 = vld [vmem:[%s309 + $0xb0] sm:$0xf]
          %v665 = vld [vmem:[%s309 + $0xb4] sm:$0xff]
          %v666 = vld [vmem:[%s309 + $0xbc] sm:$0xf]
          %v667 = vld [vmem:[%s309 + $0xc0] sm:$0xff]
          %v668 = vld [vmem:[%s309 + $0xc8] sm:$0xf]
          %v669 = vld [vmem:[%s309 + $0xcc] sm:$0xff]
          %v670 = vld [vmem:[%s309 + $0xd4] sm:$0xf]
          %v671 = vld [vmem:[%s309 + $0xd8] sm:$0xff]
          %v672 = vld [vmem:[%s309 + $0xe0] sm:$0xf]
          %v673 = vld [vmem:[%s309 + $0xe4] sm:$0xff]
          %v674 = vld [vmem:[%s309 + $0xec] sm:$0xf]
          %v675 = vld [vmem:[%s309 + $0xf0] sm:$0xff]
          %v676 = vld [vmem:[%s309 + $0xf8] sm:$0xf]
          %v677 = vld [vmem:[%s309 + $0xfc] sm:$0xff]
          %v678 = vld [vmem:[%s309 + $0x104] sm:$0xf]
          %v679 = vld [vmem:[%s309 + $0x108] sm:$0xff]
          %v680 = vld [vmem:[%s309 + $0x110] sm:$0xf]
          %v681 = vld [vmem:[%s309 + $0x114] sm:$0xff]
          %v682 = vld [vmem:[%s309 + $0x11c] sm:$0xf]
          %v683 = vld [vmem:[%s309 + $0x120] sm:$0xff]
          %v684 = vld [vmem:[%s309 + $0x128] sm:$0xf]
          %v685 = vld [vmem:[%s309 + $0x12c] sm:$0xff]
          %v686 = vld [vmem:[%s309 + $0x134] sm:$0xf]
          %v687 = vld [vmem:[%s309 + $0x138] sm:$0xff]
          %v688 = vld [vmem:[%s309 + $0x140] sm:$0xf]
          %v689 = vld [vmem:[%s309 + $0x144] sm:$0xff]
          %v690 = vld [vmem:[%s309 + $0x14c] sm:$0xf]
          %v691 = vld [vmem:[%s309 + $0x150] sm:$0xff]
          %v692 = vld [vmem:[%s309 + $0x158] sm:$0xf]
          %v693 = vld [vmem:[%s309 + $0x15c] sm:$0xff]
          %v694 = vld [vmem:[%s309 + $0x164] sm:$0xf]
          %v695 = vld [vmem:[%s309 + $0x168] sm:$0xff]
          %v696 = vld [vmem:[%s309 + $0x170] sm:$0xf]
          %v697 = vld [vmem:[%s309 + $0x174] sm:$0xff]
          %v698 = vld [vmem:[%s309 + $0x17c] sm:$0xf]
          %v699 = vld [vmem:[%s309 + $0x180] sm:$0xff]
          %v700 = vld [vmem:[%s309 + $0x188] sm:$0xf]
          %v701 = vld [vmem:[%s309 + $0x18c] sm:$0xff]
          %v702 = vld [vmem:[%s309 + $0x194] sm:$0xf]
          %v703 = vld [vmem:[%s309 + $0x198] sm:$0xff]
          %v704 = vld [vmem:[%s309 + $0x1a0] sm:$0xf]
          %v705 = vld [vmem:[%s309 + $0x1a4] sm:$0xff]
          %v706 = vld [vmem:[%s309 + $0x1ac] sm:$0xf]
          %v707 = vld [vmem:[%s309 + $0x1b0] sm:$0xff]
          %v708 = vld [vmem:[%s309 + $0x1b8] sm:$0xf]
          %v709 = vld [vmem:[%s309 + $0x1bc] sm:$0xff]
          %v710 = vld [vmem:[%s309 + $0x1c4] sm:$0xf]
          %v711 = vld [vmem:[%s309 + $0x1c8] sm:$0xff]
          %v712 = vld [vmem:[%s309 + $0x1d0] sm:$0xf]
          %v713 = vld [vmem:[%s309 + $0x1d4] sm:$0xff]
          %v714 = vld [vmem:[%s309 + $0x1dc] sm:$0xf]
          %v715 = vld [vmem:[%s309 + $0x1e0] sm:$0xff]
          %v716 = vld [vmem:[%s309 + $0x1e8] sm:$0xf]
          %v717 = vld [vmem:[%s309 + $0x1ec] sm:$0xff]
          %v718 = vld [vmem:[%s309 + $0x1f4] sm:$0xf]
          %v719 = vld [vmem:[%s309 + $0x1f8] sm:$0xff]
          %v720 = vld [vmem:[%s309 + $0x200] sm:$0xf]
          %v721 = vld [vmem:[%s309 + $0x204] sm:$0xff]
          %v722 = vld [vmem:[%s309 + $0x20c] sm:$0xf]
          %v723 = vld [vmem:[%s309 + $0x210] sm:$0xff]
          %v724 = vld [vmem:[%s309 + $0x218] sm:$0xf]
          %v725 = vld [vmem:[%s309 + $0x21c] sm:$0xff]
          %v726 = vld [vmem:[%s309 + $0x224] sm:$0xf]
          %v727 = vld [vmem:[%s309 + $0x228] sm:$0xff]
          %v728 = vld [vmem:[%s309 + $0x230] sm:$0xf]
          %v729 = vld [vmem:[%s309 + $0x234] sm:$0xff]
          %v730 = vld [vmem:[%s309 + $0x23c] sm:$0xf]
          %v827 = vunpack.c.l.b16 %v635
          %v828 = vunpack.c.h.b16 %v635
          %v829 = vunpack.c.l.b16 %v636
          %v830 = vunpack.c.l.b16 %v637
          %v831 = vunpack.c.h.b16 %v637
          %v832 = vunpack.c.l.b16 %v638
          %v833 = vunpack.c.l.b16 %v639
          %v834 = vunpack.c.h.b16 %v639
          %v835 = vunpack.c.l.b16 %v640
          %v836 = vunpack.c.l.b16 %v641
          %v837 = vunpack.c.h.b16 %v641
          %v838 = vunpack.c.l.b16 %v642
          %v839 = vunpack.c.l.b16 %v643
          %v840 = vunpack.c.h.b16 %v643
          %v841 = vunpack.c.l.b16 %v644
          %v842 = vunpack.c.l.b16 %v645
          %v843 = vunpack.c.h.b16 %v645
          %v844 = vunpack.c.l.b16 %v646
          %v845 = vunpack.c.l.b16 %v647
          %v846 = vunpack.c.h.b16 %v647
          %v847 = vunpack.c.l.b16 %v648
          %v848 = vunpack.c.l.b16 %v649
          %v849 = vunpack.c.h.b16 %v649
          %v850 = vunpack.c.l.b16 %v650
          %v851 = vunpack.c.l.b16 %v651
          %v852 = vunpack.c.h.b16 %v651
          %v853 = vunpack.c.l.b16 %v652
          %v854 = vunpack.c.l.b16 %v653
          %v855 = vunpack.c.h.b16 %v653
          %v856 = vunpack.c.l.b16 %v654
          %v857 = vunpack.c.l.b16 %v655
          %v858 = vunpack.c.h.b16 %v655
          %v859 = vunpack.c.l.b16 %v656
          %v860 = vunpack.c.l.b16 %v657
          %v861 = vunpack.c.h.b16 %v657
          %v862 = vunpack.c.l.b16 %v658
          %v863 = vunpack.c.l.b16 %v659
          %v864 = vunpack.c.h.b16 %v659
          %v865 = vunpack.c.l.b16 %v660
          %v866 = vunpack.c.l.b16 %v661
          %v867 = vunpack.c.h.b16 %v661
          %v868 = vunpack.c.l.b16 %v662
          %v869 = vunpack.c.l.b16 %v663
          %v870 = vunpack.c.h.b16 %v663
          %v871 = vunpack.c.l.b16 %v664
          %v872 = vunpack.c.l.b16 %v665
          %v873 = vunpack.c.h.b16 %v665
          %v874 = vunpack.c.l.b16 %v666
          %v875 = vunpack.c.l.b16 %v667
          %v876 = vunpack.c.h.b16 %v667
          %v877 = vunpack.c.l.b16 %v668
          %v878 = vunpack.c.l.b16 %v669
          %v879 = vunpack.c.h.b16 %v669
          %v880 = vunpack.c.l.b16 %v670
          %v881 = vunpack.c.l.b16 %v671
          %v882 = vunpack.c.h.b16 %v671
          %v883 = vunpack.c.l.b16 %v672
          %v884 = vunpack.c.l.b16 %v673
          %v885 = vunpack.c.h.b16 %v673
          %v886 = vunpack.c.l.b16 %v674
          %v887 = vunpack.c.l.b16 %v675
          %v888 = vunpack.c.h.b16 %v675
          %v889 = vunpack.c.l.b16 %v676
          %v890 = vunpack.c.l.b16 %v677
          %v891 = vunpack.c.h.b16 %v677
          %v892 = vunpack.c.l.b16 %v678
          %v893 = vunpack.c.l.b16 %v679
          %v894 = vunpack.c.h.b16 %v679
          %v895 = vunpack.c.l.b16 %v680
          %v896 = vunpack.c.l.b16 %v681
          %v897 = vunpack.c.h.b16 %v681
          %v898 = vunpack.c.l.b16 %v682
          %v899 = vunpack.c.l.b16 %v683
          %v900 = vunpack.c.h.b16 %v683
          %v901 = vunpack.c.l.b16 %v684
          %v902 = vunpack.c.l.b16 %v685
          %v903 = vunpack.c.h.b16 %v685
          %v904 = vunpack.c.l.b16 %v686
          %v905 = vunpack.c.l.b16 %v687
          %v906 = vunpack.c.h.b16 %v687
          %v907 = vunpack.c.l.b16 %v688
          %v908 = vunpack.c.l.b16 %v689
          %v909 = vunpack.c.h.b16 %v689
          %v910 = vunpack.c.l.b16 %v690
          %v911 = vunpack.c.l.b16 %v691
          %v912 = vunpack.c.h.b16 %v691
          %v913 = vunpack.c.l.b16 %v692
          %v914 = vunpack.c.l.b16 %v693
          %v915 = vunpack.c.h.b16 %v693
          %v916 = vunpack.c.l.b16 %v694
          %v917 = vunpack.c.l.b16 %v695
          %v918 = vunpack.c.h.b16 %v695
          %v919 = vunpack.c.l.b16 %v696
          %v920 = vunpack.c.l.b16 %v697
          %v921 = vunpack.c.h.b16 %v697
          %v922 = vunpack.c.l.b16 %v698
          %v923 = vunpack.c.l.b16 %v699
          %v924 = vunpack.c.h.b16 %v699
          %v925 = vunpack.c.l.b16 %v700
          %v926 = vunpack.c.l.b16 %v701
          %v927 = vunpack.c.h.b16 %v701
          %v928 = vunpack.c.l.b16 %v702
          %v929 = vunpack.c.l.b16 %v703
          %v930 = vunpack.c.h.b16 %v703
          %v931 = vunpack.c.l.b16 %v704
          %v932 = vunpack.c.l.b16 %v705
          %v933 = vunpack.c.h.b16 %v705
          %v934 = vunpack.c.l.b16 %v706
          %v935 = vunpack.c.l.b16 %v707
          %v936 = vunpack.c.h.b16 %v707
          %v937 = vunpack.c.l.b16 %v708
          %v938 = vunpack.c.l.b16 %v709
          %v939 = vunpack.c.h.b16 %v709
          %v940 = vunpack.c.l.b16 %v710
          %v941 = vunpack.c.l.b16 %v711
          %v942 = vunpack.c.h.b16 %v711
          %v943 = vunpack.c.l.b16 %v712
          %v944 = vunpack.c.l.b16 %v713
          %v945 = vunpack.c.h.b16 %v713
          %v946 = vunpack.c.l.b16 %v714
          %v947 = vunpack.c.l.b16 %v715
          %v948 = vunpack.c.h.b16 %v715
          %v949 = vunpack.c.l.b16 %v716
          %v950 = vunpack.c.l.b16 %v717
          %v951 = vunpack.c.h.b16 %v717
          %v952 = vunpack.c.l.b16 %v718
          %v953 = vunpack.c.l.b16 %v719
          %v954 = vunpack.c.h.b16 %v719
          %v955 = vunpack.c.l.b16 %v720
          %v956 = vunpack.c.l.b16 %v721
          %v957 = vunpack.c.h.b16 %v721
          %v958 = vunpack.c.l.b16 %v722
          %v959 = vunpack.c.l.b16 %v723
          %v960 = vunpack.c.h.b16 %v723
          %v961 = vunpack.c.l.b16 %v724
          %v962 = vunpack.c.l.b16 %v725
          %v963 = vunpack.c.h.b16 %v725
          %v964 = vunpack.c.l.b16 %v726
          %v965 = vunpack.c.l.b16 %v727
          %v966 = vunpack.c.h.b16 %v727
          %v967 = vunpack.c.l.b16 %v728
          %v968 = vunpack.c.l.b16 %v729
          %v969 = vunpack.c.h.b16 %v729
          %v970 = vunpack.c.l.b16 %v730
          %v971 = vpack.c.b16 %v830, %v827
          %v972 = vpack.c.b16 %v831, %v828
          %v973 = vpack.c.b16 %v832, %v829
          %v974 = vpack.c.b16 %v836, %v833
          %v975 = vpack.c.b16 %v837, %v834
          %v976 = vpack.c.b16 %v838, %v835
          %v977 = vpack.c.b16 %v842, %v839
          %v978 = vpack.c.b16 %v843, %v840
          %v979 = vpack.c.b16 %v844, %v841
          %v980 = vpack.c.b16 %v848, %v845
          %v981 = vpack.c.b16 %v849, %v846
          %v982 = vpack.c.b16 %v850, %v847
          %v983 = vpack.c.b16 %v854, %v851
          %v984 = vpack.c.b16 %v855, %v852
          %v985 = vpack.c.b16 %v856, %v853
          %v986 = vpack.c.b16 %v860, %v857
          %v987 = vpack.c.b16 %v861, %v858
          %v988 = vpack.c.b16 %v862, %v859
          %v989 = vpack.c.b16 %v866, %v863
          %v990 = vpack.c.b16 %v867, %v864
          %v991 = vpack.c.b16 %v868, %v865
          %v992 = vpack.c.b16 %v872, %v869
          %v993 = vpack.c.b16 %v873, %v870
          %v994 = vpack.c.b16 %v874, %v871
          %v995 = vpack.c.b16 %v878, %v875
          %v996 = vpack.c.b16 %v879, %v876
          %v997 = vpack.c.b16 %v880, %v877
          %v998 = vpack.c.b16 %v884, %v881
          %v999 = vpack.c.b16 %v885, %v882
          %v1000 = vpack.c.b16 %v886, %v883
          %v1001 = vpack.c.b16 %v890, %v887
          %v1002 = vpack.c.b16 %v891, %v888
          %v1003 = vpack.c.b16 %v892, %v889
          %v1004 = vpack.c.b16 %v896, %v893
          %v1005 = vpack.c.b16 %v897, %v894
          %v1006 = vpack.c.b16 %v898, %v895
          %v1007 = vpack.c.b16 %v902, %v899
          %v1008 = vpack.c.b16 %v903, %v900
          %v1009 = vpack.c.b16 %v904, %v901
          %v1010 = vpack.c.b16 %v908, %v905
          %v1011 = vpack.c.b16 %v909, %v906
          %v1012 = vpack.c.b16 %v910, %v907
          %v1013 = vpack.c.b16 %v914, %v911
          %v1014 = vpack.c.b16 %v915, %v912
          %v1015 = vpack.c.b16 %v916, %v913
          %v1016 = vpack.c.b16 %v920, %v917
          %v1017 = vpack.c.b16 %v921, %v918
          %v1018 = vpack.c.b16 %v922, %v919
          %v1019 = vpack.c.b16 %v926, %v923
          %v1020 = vpack.c.b16 %v927, %v924
          %v1021 = vpack.c.b16 %v928, %v925
          %v1022 = vpack.c.b16 %v932, %v929
          %v1023 = vpack.c.b16 %v933, %v930
          %v1024 = vpack.c.b16 %v934, %v931
          %v1025 = vpack.c.b16 %v938, %v935
          %v1026 = vpack.c.b16 %v939, %v936
          %v1027 = vpack.c.b16 %v940, %v937
          %v1028 = vpack.c.b16 %v944, %v941
          %v1029 = vpack.c.b16 %v945, %v942
          %v1030 = vpack.c.b16 %v946, %v943
          %v1031 = vpack.c.b16 %v950, %v947
          %v1032 = vpack.c.b16 %v951, %v948
          %v1033 = vpack.c.b16 %v952, %v949
          %v1034 = vpack.c.b16 %v956, %v953
          %v1035 = vpack.c.b16 %v957, %v954
          %v1036 = vpack.c.b16 %v958, %v955
          %v1037 = vpack.c.b16 %v962, %v959
          %v1038 = vpack.c.b16 %v963, %v960
          %v1039 = vpack.c.b16 %v964, %v961
          %v1040 = vpack.c.b16 %v968, %v965
          %v1041 = vpack.c.b16 %v969, %v966
          %v1042 = vpack.c.b16 %v970, %v967
          %1115 = vmatprep.subr.bf16.mxu0 %v972
          %1116 = vmatpush1.bf16.msra.mxu0 %v971
          %1117 = vmatprep.subr.bf16.mxu0 %v975
          %1118 = vmatpush1.bf16.msra.mxu0 %v974
          %1119 = vmatprep.subr.bf16.mxu0 %v978
          %1120 = vmatpush1.bf16.msra.mxu0 %v977
          %1121 = vmatprep.subr.bf16.mxu0 %v981
          %1122 = vmatpush1.bf16.msra.mxu0 %v980
          %1123 = vmatprep.subr.bf16.mxu0 %v984
          %1124 = vmatpush1.bf16.msra.mxu0 %v983
          %1125 = vmatprep.subr.bf16.mxu0 %v987
          %1126 = vmatpush1.bf16.msra.mxu0 %v986
          %1127 = vmatprep.subr.bf16.mxu0 %v990
          %1128 = vmatpush1.bf16.msra.mxu0 %v989
          %1129 = vmatprep.subr.bf16.mxu0 %v993
          %1130 = vmatpush1.bf16.msra.mxu0 %v992
          %1131 = vmatprep.subr.bf16.mxu0 %v996
          %1132 = vmatpush1.bf16.msra.mxu0 %v995
          %1133 = vmatprep.subr.bf16.mxu0 %v999
          %1134 = vmatpush1.bf16.msra.mxu0 %v998
          %1135 = vmatprep.subr.bf16.mxu0 %v1002
          %1136 = vmatpush1.bf16.msra.mxu0 %v1001
          %1137 = vmatprep.subr.bf16.mxu0 %v1005
          %1138 = vmatpush1.bf16.msra.mxu0 %v1004
          %1139 = vmatprep.subr.bf16.mxu0 %v1008
          %1140 = vmatpush1.bf16.msra.mxu0 %v1007
          %1141 = vmatprep.subr.bf16.mxu0 %v1011
          %1142 = vmatpush1.bf16.msra.mxu0 %v1010
          %1143 = vmatprep.subr.bf16.mxu0 %v1014
          %1144 = vmatpush1.bf16.msra.mxu0 %v1013
          %1145 = vmatprep.subr.bf16.mxu0 %v1017
          %1146 = vmatpush1.bf16.msra.mxu0 %v1016
          %1147 = vmatprep.mubr.bf16.mxu0 %v630
          %1148 = vmatmul.mubr.bf16.gmra.mrb[0].mxu0 %v629
          %v1149 = vpop.f32.mrb[0].mxu0
          %v1150 = vadd.f32 0.0, %v1149
          %v1151 = vpop.f32.mrb[0].mxu0
          %v1152 = vadd.f32 0.0, %v1151
          %v1153 = vpop.f32.mrb[0].mxu0
          %v1154 = vadd.f32 0.0, %v1153
          %v1155 = vpop.f32.mrb[0].mxu0
          %v1156 = vadd.f32 0.0, %v1155
          %1157 = vmatprep.mubr.bf16.mxu0 %v633
          %1158 = vmatmul.mubr.bf16.gmra.mrb[0].mxu0 %v632
          %v1159 = vpop.f32.mrb[0].mxu0
          %v1160 = vadd.f32 0.0, %v1159
          %v1161 = vpop.f32.mrb[0].mxu0
          %v1162 = vadd.f32 0.0, %v1161
          %v1163 = vpop.f32.mrb[0].mxu0
          %v1164 = vadd.f32 0.0, %v1163
          %v1165 = vpop.f32.mrb[0].mxu0
          %v1166 = vadd.f32 0.0, %v1165
          %1167 = vdwg.mxu0
          %1168 = vmatprep.subr.bf16.mxu0 %v1020
          %1169 = vmatpush1.bf16.msra.mxu0 %v1019
          %1170 = vmatprep.subr.bf16.mxu0 %v1023
          %1171 = vmatpush1.bf16.msra.mxu0 %v1022
          %1172 = vmatprep.subr.bf16.mxu0 %v1026
          %1173 = vmatpush1.bf16.msra.mxu0 %v1025
          %1174 = vmatprep.subr.bf16.mxu0 %v1029
          %1175 = vmatpush1.bf16.msra.mxu0 %v1028
          %1176 = vmatprep.subr.bf16.mxu0 %v1032
          %1177 = vmatpush1.bf16.msra.mxu0 %v1031
          %1178 = vmatprep.subr.bf16.mxu0 %v1035
          %1179 = vmatpush1.bf16.msra.mxu0 %v1034
          %1180 = vmatprep.subr.bf16.mxu0 %v1038
          %1181 = vmatpush1.bf16.msra.mxu0 %v1037
          %1182 = vmatprep.subr.bf16.mxu0 %v1041
          %1183 = vmatpush1.bf16.msra.mxu0 %v1040
          %1184 = vmatprep.subr.bf16.mxu0 0
          %1185 = vmatpush1.bf16.msra.mxu0 0
          %1186 = vmatprep.subr.bf16.mxu0 0
          %1187 = vmatpush1.bf16.msra.mxu0 0
          %1188 = vmatprep.subr.bf16.mxu0 0
          %1189 = vmatpush1.bf16.msra.mxu0 0
          %1190 = vmatprep.subr.bf16.mxu0 0
          %1191 = vmatpush1.bf16.msra.mxu0 0
          %1192 = vmatprep.subr.bf16.mxu0 0
          %1193 = vmatpush1.bf16.msra.mxu0 0
          %1194 = vmatprep.subr.bf16.mxu0 0
          %1195 = vmatpush1.bf16.msra.mxu0 0
          %1196 = vmatprep.subr.bf16.mxu0 0
          %1197 = vmatpush1.bf16.msra.mxu0 0
          %1198 = vmatprep.subr.bf16.mxu0 0
          %1199 = vmatpush1.bf16.msra.mxu0 0
          %1200 = vmatprep.mubr.bf16.mxu0 0
          %1201 = vmatmul.mubr.bf16.gmra.mrb[0].mxu0 %v631
          %v1202 = vpop.f32.mrb[0].mxu0
          %v1203 = vadd.f32 %v1150, %v1202
          %v1204 = vpop.f32.mrb[0].mxu0
          %v1205 = vadd.f32 %v1152, %v1204
          %v1206 = vpop.f32.mrb[0].mxu0
          %v1207 = vadd.f32 %v1154, %v1206
          %v1208 = vpop.f32.mrb[0].mxu0
          %v1209 = vadd.f32 %v1156, %v1208
          %1210 = vmatprep.mubr.bf16.mxu0 0
          %1211 = vmatmul.mubr.bf16.gmra.mrb[0].mxu0 %v634
          %v1212 = vpop.f32.mrb[0].mxu0
          %v1213 = vadd.f32 %v1160, %v1212
          %v1214 = vpop.f32.mrb[0].mxu0
          %v1215 = vadd.f32 %v1162, %v1214
          %v1216 = vpop.f32.mrb[0].mxu0
          %v1217 = vadd.f32 %v1164, %v1216
          %v1218 = vpop.f32.mrb[0].mxu0
          %v1219 = vadd.f32 %v1166, %v1218
          %1220 = vdwg.mxu0
          %1221 = vmatprep.subr.bf16.mxu0 0
          %1222 = vmatpush1.bf16.msra.mxu0 %v973
          %1223 = vmatprep.subr.bf16.mxu0 0
          %1224 = vmatpush1.bf16.msra.mxu0 %v976
          %1225 = vmatprep.subr.bf16.mxu0 0
          %1226 = vmatpush1.bf16.msra.mxu0 %v979
          %1227 = vmatprep.subr.bf16.mxu0 0
          %1228 = vmatpush1.bf16.msra.mxu0 %v982
          %1229 = vmatprep.subr.bf16.mxu0 0
          %1230 = vmatpush1.bf16.msra.mxu0 %v985
          %1231 = vmatprep.subr.bf16.mxu0 0
          %1232 = vmatpush1.bf16.msra.mxu0 %v988
          %1233 = vmatprep.subr.bf16.mxu0 0
          %1234 = vmatpush1.bf16.msra.mxu0 %v991
          %1235 = vmatprep.subr.bf16.mxu0 0
          %1236 = vmatpush1.bf16.msra.mxu0 %v994
          %1237 = vmatprep.subr.bf16.mxu0 0
          %1238 = vmatpush1.bf16.msra.mxu0 %v997
          %1239 = vmatprep.subr.bf16.mxu0 0
          %1240 = vmatpush1.bf16.msra.mxu0 %v1000
          %1241 = vmatprep.subr.bf16.mxu0 0
          %1242 = vmatpush1.bf16.msra.mxu0 %v1003
          %1243 = vmatprep.subr.bf16.mxu0 0
          %1244 = vmatpush1.bf16.msra.mxu0 %v1006
          %1245 = vmatprep.subr.bf16.mxu0 0
          %1246 = vmatpush1.bf16.msra.mxu0 %v1009
          %1247 = vmatprep.subr.bf16.mxu0 0
          %1248 = vmatpush1.bf16.msra.mxu0 %v1012
          %1249 = vmatprep.subr.bf16.mxu0 0
          %1250 = vmatpush1.bf16.msra.mxu0 %v1015
          %1251 = vmatprep.subr.bf16.mxu0 0
          %1252 = vmatpush1.bf16.msra.mxu0 %v1018
          %1253 = vmatprep.mubr.bf16.mxu0 %v630
          %1254 = vmatmul.mubr.bf16.gmra.mrb[0].mxu0 %v629
          %v1255 = vpop.f32.mrb[0].mxu0
          %v1256 = vadd.f32 0.0, %v1255
          %v1257 = vpop.f32.mrb[0].mxu0
          %v1258 = vpop.f32.mrb[0].mxu0
          %v1259 = vadd.f32 0.0, %v1258
          %v1260 = vpop.f32.mrb[0].mxu0
          %1261 = vmatprep.mubr.bf16.mxu0 %v633
          %1262 = vmatmul.mubr.bf16.gmra.mrb[0].mxu0 %v632
          %v1263 = vpop.f32.mrb[0].mxu0
          %v1264 = vadd.f32 0.0, %v1263
          %v1265 = vpop.f32.mrb[0].mxu0
          %v1266 = vpop.f32.mrb[0].mxu0
          %v1267 = vadd.f32 0.0, %v1266
          %v1268 = vpop.f32.mrb[0].mxu0
          %1269 = vdwg.mxu0
          %1270 = vmatprep.subr.bf16.mxu0 0
          %1271 = vmatpush1.bf16.msra.mxu0 %v1021
          %1272 = vmatprep.subr.bf16.mxu0 0
          %1273 = vmatpush1.bf16.msra.mxu0 %v1024
          %1274 = vmatprep.subr.bf16.mxu0 0
          %1275 = vmatpush1.bf16.msra.mxu0 %v1027
          %1276 = vmatprep.subr.bf16.mxu0 0
          %1277 = vmatpush1.bf16.msra.mxu0 %v1030
          %1278 = vmatprep.subr.bf16.mxu0 0
          %1279 = vmatpush1.bf16.msra.mxu0 %v1033
          %1280 = vmatprep.subr.bf16.mxu0 0
          %1281 = vmatpush1.bf16.msra.mxu0 %v1036
          %1282 = vmatprep.subr.bf16.mxu0 0
          %1283 = vmatpush1.bf16.msra.mxu0 %v1039
          %1284 = vmatprep.subr.bf16.mxu0 0
          %1285 = vmatpush1.bf16.msra.mxu0 %v1042
          %1286 = vmatprep.subr.bf16.mxu0 0
          %1287 = vmatpush1.bf16.msra.mxu0 0
          %1288 = vmatprep.subr.bf16.mxu0 0
          %1289 = vmatpush1.bf16.msra.mxu0 0
          %1290 = vmatprep.subr.bf16.mxu0 0
          %1291 = vmatpush1.bf16.msra.mxu0 0
          %1292 = vmatprep.subr.bf16.mxu0 0
          %1293 = vmatpush1.bf16.msra.mxu0 0
          %1294 = vmatprep.subr.bf16.mxu0 0
          %1295 = vmatpush1.bf16.msra.mxu0 0
          %1296 = vmatprep.subr.bf16.mxu0 0
          %1297 = vmatpush1.bf16.msra.mxu0 0
          %1298 = vmatprep.subr.bf16.mxu0 0
          %1299 = vmatpush1.bf16.msra.mxu0 0
          %1300 = vmatprep.subr.bf16.mxu0 0
          %1301 = vmatpush1.bf16.msra.mxu0 0
          %1302 = vmatprep.mubr.bf16.mxu0 0
          %1303 = vmatmul.mubr.bf16.gmra.mrb[0].mxu0 %v631
          %v1304 = vpop.f32.mrb[0].mxu0
          %v1305 = vadd.f32 %v1256, %v1304
          %v1306 = vpop.f32.mrb[0].mxu0
          %v1307 = vpop.f32.mrb[0].mxu0
          %v1308 = vadd.f32 %v1259, %v1307
          %v1309 = vpop.f32.mrb[0].mxu0
          %1310 = vmatprep.mubr.bf16.mxu0 0
          %1311 = vmatmul.mubr.bf16.gmra.mrb[0].mxu0 %v634
          %v1312 = vpop.f32.mrb[0].mxu0
          %v1313 = vadd.f32 %v1264, %v1312
          %v1314 = vpop.f32.mrb[0].mxu0
          %v1315 = vpop.f32.mrb[0].mxu0
          %v1316 = vadd.f32 %v1267, %v1315
          %v1317 = vpop.f32.mrb[0].mxu0
          %1318 = vdwg.mxu0
          %v1319 = vadd.f32 %v613, %v1203
          %v1320 = vadd.f32 %v614, %v1205
          %v1321 = vadd.f32 %v615, %v1305
          %v1322 = vadd.f32 %v616, %v1207
          %v1323 = vadd.f32 %v617, %v1209
          %v1324 = vadd.f32 %v618, %v1308
          %v1325 = vadd.f32 %v619, %v1213
          %v1326 = vadd.f32 %v620, %v1215
          %v1327 = vadd.f32 %v621, %v1313
          %v1328 = vadd.f32 %v622, %v1217
          %v1329 = vadd.f32 %v623, %v1219
          %v1330 = vadd.f32 %v624, %v1316
          %1331 = vst [vmem:[#allocation4] sm:$0xff] %v1319
          %1332 = vst [vmem:[#allocation4 + $0x8] sm:$0xff] %v1320
          %1333 = vst [vmem:[#allocation4 + $0x10] sm:$0xff] %v1321
          %1334 = vst [vmem:[#allocation4 + $0x18] sm:$0xff] %v1322
          %1335 = vst [vmem:[#allocation4 + $0x20] sm:$0xff] %v1323
          %1336 = vst [vmem:[#allocation4 + $0x28] sm:$0xff] %v1324
          %1337 = vst [vmem:[#allocation4 + $0x30] sm:$0xff] %v1325
          %1338 = vst [vmem:[#allocation4 + $0x38] sm:$0xff] %v1326
          %1339 = vst [vmem:[#allocation4 + $0x40] sm:$0xff] %v1327
          %1340 = vst [vmem:[#allocation4 + $0x48] sm:$0xff] %v1328
          %1341 = vst [vmem:[#allocation4 + $0x50] sm:$0xff] %v1329
          %1342 = vst [vmem:[#allocation4 + $0x58] sm:$0xff] %v1330
        $region68: #{gwnn_forward.2} parent=39 // pred_fallthru
          _
        %p1343 = pnand %p369, %p373
        %p1344 = pneg %p1343
        // Predicated region
        $region69: #{gwnn_forward.2} parent=39 // pred_check
          _
        $region70: #{gwnn_forward.2} parent=39 // pred_check_branch
          %1346 = sbr.rel (%p1343) target = $region72
        $region71: #{gwnn_forward.2} parent=39 // pred_region
          %s1347 = sshra.s32 %s609, 7
          %s1348 = sand.u32 %s609, 127
          %s1349 = scalar_lea.vmem %s4, %s1347
          %v1350 = vld [vmem:[%s1349] sm:$0x7]
          %v1351 = vld [vmem:[#allocation4] sm:$0xff]
          %v1352 = vld [vmem:[#allocation4 + $0x8] sm:$0xff]
          %v1353 = vld [vmem:[#allocation4 + $0x10] sm:$0xff]
          %v1354 = vld [vmem:[#allocation4 + $0x18] sm:$0xff]
          %v1355 = vld [vmem:[#allocation4 + $0x20] sm:$0xff]
          %v1356 = vld [vmem:[#allocation4 + $0x28] sm:$0xff]
          %v1357 = vld [vmem:[#allocation4 + $0x30] sm:$0xff]
          %v1358 = vld [vmem:[#allocation4 + $0x38] sm:$0xff]
          %v1359 = vld [vmem:[#allocation4 + $0x40] sm:$0xff]
          %v1360 = vld [vmem:[#allocation4 + $0x48] sm:$0xff]
          %v1361 = vld [vmem:[#allocation4 + $0x50] sm:$0xff]
          %v1362 = vld [vmem:[#allocation4 + $0x58] sm:$0xff]
          %v1364 = vlaneseq
          %v1365 = vshrl.u32 %v1364, 7
          %v1366 = vsub.s32 0, %v1365
          %v1367 = vrot.slane %v1350, %v1366
          %v1368 = vlaneseq
          %v1369 = vshrl.u32 %v1368, 7
          %v1370 = vsub.s32 1, %v1369
          %v1371 = vrot.slane %v1350, %v1370
          %v1372 = vlaneseq
          %v1373 = vshrl.u32 %v1372, 7
          %v1374 = vsub.s32 2, %v1373
          %v1375 = vrot.slane %v1350, %v1374
          %v1379 = vmul.f32 %v1367, %v1351
          %v1380 = vmul.f32 %v1371, %v1352
          %v1381 = vmul.f32 %v1375, %v1353
          %v1382 = vmul.f32 %v1367, %v1354
          %v1383 = vmul.f32 %v1371, %v1355
          %v1384 = vmul.f32 %v1375, %v1356
          %v1385 = vmul.f32 %v1367, %v1357
          %v1386 = vmul.f32 %v1371, %v1358
          %v1387 = vmul.f32 %v1375, %v1359
          %v1388 = vmul.f32 %v1367, %v1360
          %v1389 = vmul.f32 %v1371, %v1361
          %v1390 = vmul.f32 %v1375, %v1362
          %s1391 = smul.addr %s1347, 8
          %s1392 = scalar_lea.vmem [#allocation3], %s1391
          %1393 = vst [vmem:[%s1392] sm:$0xff] %v1379
          %1394 = vst [vmem:[%s1392 + $0x8] sm:$0xff] %v1380
          %1395 = vst [vmem:[%s1392 + $0x10] sm:$0xff] %v1381
          %1396 = vst [vmem:[%s1392 + $0x18] sm:$0xff] %v1382
          %1397 = vst [vmem:[%s1392 + $0x20] sm:$0xff] %v1383
          %1398 = vst [vmem:[%s1392 + $0x28] sm:$0xff] %v1384
          %1399 = vst [vmem:[%s1392 + $0x30] sm:$0xff] %v1385
          %1400 = vst [vmem:[%s1392 + $0x38] sm:$0xff] %v1386
          %1401 = vst [vmem:[%s1392 + $0x40] sm:$0xff] %v1387
          %1402 = vst [vmem:[%s1392 + $0x48] sm:$0xff] %v1388
          %1403 = vst [vmem:[%s1392 + $0x50] sm:$0xff] %v1389
          %1404 = vst [vmem:[%s1392 + $0x58] sm:$0xff] %v1390
        $region72: #{gwnn_forward.2} parent=39 // pred_fallthru
          _
        %p1405 = scmp.eq.s32.totalorder %s23, 1
        // Predicated region
        $region73: #{gwnn_forward.2} parent=39 // pred_check
          %p1406 = pneg %p1405
        $region74: #{gwnn_forward.2} parent=39 // pred_check_branch
          %1408 = sbr.rel (%p1406) target = $region76
        $region75: #{gwnn_forward.2} parent=39 // pred_region
          %s1409 = sshra.s32 %s608, 7
          %s1410 = sand.u32 %s608, 127
          %s1411 = smul.addr %s1409, 8
          %s1412 = scalar_lea.vmem [#allocation3], %s1411
          %v1413 = vld [vmem:[%s1412] sm:$0xff]
          %v1414 = vld [vmem:[%s1412 + $0x8] sm:$0xff]
          %v1415 = vld [vmem:[%s1412 + $0x10] sm:$0xff]
          %v1416 = vld [vmem:[%s1412 + $0x18] sm:$0xff]
          %v1417 = vld [vmem:[%s1412 + $0x20] sm:$0xff]
          %v1418 = vld [vmem:[%s1412 + $0x28] sm:$0xff]
          %v1419 = vld [vmem:[%s1412 + $0x30] sm:$0xff]
          %v1420 = vld [vmem:[%s1412 + $0x38] sm:$0xff]
          %v1421 = vld [vmem:[%s1412 + $0x40] sm:$0xff]
          %v1422 = vld [vmem:[%s1412 + $0x48] sm:$0xff]
          %v1423 = vld [vmem:[%s1412 + $0x50] sm:$0xff]
          %v1424 = vld [vmem:[%s1412 + $0x58] sm:$0xff]
          %v1425 = vpack.c.bf16 %v1416, %v1413
          %v1426 = vpack.c.bf16 %v1417, %v1414
          %v1427 = vpack.c.bf16 %v1418, %v1415
          %v1428 = vpack.c.bf16 %v1422, %v1419
          %v1429 = vpack.c.bf16 %v1423, %v1420
          %v1430 = vpack.c.bf16 %v1424, %v1421
          %v1431 = vld [vmem:[#allocation4] sm:$0xff]
          %v1432 = vld [vmem:[#allocation4 + $0x8] sm:$0xff]
          %v1433 = vld [vmem:[#allocation4 + $0x10] sm:$0xff]
          %v1434 = vld [vmem:[#allocation4 + $0x18] sm:$0xff]
          %v1435 = vld [vmem:[#allocation4 + $0x20] sm:$0xff]
          %v1436 = vld [vmem:[#allocation4 + $0x28] sm:$0xff]
          %v1437 = vld [vmem:[#allocation4 + $0x30] sm:$0xff]
          %v1438 = vld [vmem:[#allocation4 + $0x38] sm:$0xff]
          %v1439 = vld [vmem:[#allocation4 + $0x40] sm:$0xff]
          %v1440 = vld [vmem:[#allocation4 + $0x48] sm:$0xff]
          %v1441 = vld [vmem:[#allocation4 + $0x50] sm:$0xff]
          %v1442 = vld [vmem:[#allocation4 + $0x58] sm:$0xff]
          %v1443 = vld [vmem:[%s318] sm:$0xff]
          %v1444 = vld [vmem:[%s318 + $0x8] sm:$0xf]
          %v1445 = vld [vmem:[%s318 + $0xc] sm:$0xff]
          %v1446 = vld [vmem:[%s318 + $0x14] sm:$0xf]
          %v1447 = vld [vmem:[%s318 + $0x18] sm:$0xff]
          %v1448 = vld [vmem:[%s318 + $0x20] sm:$0xf]
          %v1449 = vld [vmem:[%s318 + $0x24] sm:$0xff]
          %v1450 = vld [vmem:[%s318 + $0x2c] sm:$0xf]
          %v1451 = vld [vmem:[%s318 + $0x30] sm:$0xff]
          %v1452 = vld [vmem:[%s318 + $0x38] sm:$0xf]
          %v1453 = vld [vmem:[%s318 + $0x3c] sm:$0xff]
          %v1454 = vld [vmem:[%s318 + $0x44] sm:$0xf]
          %v1455 = vld [vmem:[%s318 + $0x48] sm:$0xff]
          %v1456 = vld [vmem:[%s318 + $0x50] sm:$0xf]
          %v1457 = vld [vmem:[%s318 + $0x54] sm:$0xff]
          %v1458 = vld [vmem:[%s318 + $0x5c] sm:$0xf]
          %v1459 = vld [vmem:[%s318 + $0x60] sm:$0xff]
          %v1460 = vld [vmem:[%s318 + $0x68] sm:$0xf]
          %v1461 = vld [vmem:[%s318 + $0x6c] sm:$0xff]
          %v1462 = vld [vmem:[%s318 + $0x74] sm:$0xf]
          %v1463 = vld [vmem:[%s318 + $0x78] sm:$0xff]
          %v1464 = vld [vmem:[%s318 + $0x80] sm:$0xf]
          %v1465 = vld [vmem:[%s318 + $0x84] sm:$0xff]
          %v1466 = vld [vmem:[%s318 + $0x8c] sm:$0xf]
          %v1467 = vld [vmem:[%s318 + $0x90] sm:$0xff]
          %v1468 = vld [vmem:[%s318 + $0x98] sm:$0xf]
          %v1469 = vld [vmem:[%s318 + $0x9c] sm:$0xff]
          %v1470 = vld [vmem:[%s318 + $0xa4] sm:$0xf]
          %v1471 = vld [vmem:[%s318 + $0xa8] sm:$0xff]
          %v1472 = vld [vmem:[%s318 + $0xb0] sm:$0xf]
          %v1473 = vld [vmem:[%s318 + $0xb4] sm:$0xff]
          %v1474 = vld [vmem:[%s318 + $0xbc] sm:$0xf]
          %v1475 = vld [vmem:[%s318 + $0xc0] sm:$0xff]
          %v1476 = vld [vmem:[%s318 + $0xc8] sm:$0xf]
          %v1477 = vld [vmem:[%s318 + $0xcc] sm:$0xff]
          %v1478 = vld [vmem:[%s318 + $0xd4] sm:$0xf]
          %v1479 = vld [vmem:[%s318 + $0xd8] sm:$0xff]
          %v1480 = vld [vmem:[%s318 + $0xe0] sm:$0xf]
          %v1481 = vld [vmem:[%s318 + $0xe4] sm:$0xff]
          %v1482 = vld [vmem:[%s318 + $0xec] sm:$0xf]
          %v1483 = vld [vmem:[%s318 + $0xf0] sm:$0xff]
          %v1484 = vld [vmem:[%s318 + $0xf8] sm:$0xf]
          %v1485 = vld [vmem:[%s318 + $0xfc] sm:$0xff]
          %v1486 = vld [vmem:[%s318 + $0x104] sm:$0xf]
          %v1487 = vld [vmem:[%s318 + $0x108] sm:$0xff]
          %v1488 = vld [vmem:[%s318 + $0x110] sm:$0xf]
          %v1489 = vld [vmem:[%s318 + $0x114] sm:$0xff]
          %v1490 = vld [vmem:[%s318 + $0x11c] sm:$0xf]
          %v1491 = vld [vmem:[%s318 + $0x120] sm:$0xff]
          %v1492 = vld [vmem:[%s318 + $0x128] sm:$0xf]
          %v1493 = vld [vmem:[%s318 + $0x12c] sm:$0xff]
          %v1494 = vld [vmem:[%s318 + $0x134] sm:$0xf]
          %v1495 = vld [vmem:[%s318 + $0x138] sm:$0xff]
          %v1496 = vld [vmem:[%s318 + $0x140] sm:$0xf]
          %v1497 = vld [vmem:[%s318 + $0x144] sm:$0xff]
          %v1498 = vld [vmem:[%s318 + $0x14c] sm:$0xf]
          %v1499 = vld [vmem:[%s318 + $0x150] sm:$0xff]
          %v1500 = vld [vmem:[%s318 + $0x158] sm:$0xf]
          %v1501 = vld [vmem:[%s318 + $0x15c] sm:$0xff]
          %v1502 = vld [vmem:[%s318 + $0x164] sm:$0xf]
          %v1503 = vld [vmem:[%s318 + $0x168] sm:$0xff]
          %v1504 = vld [vmem:[%s318 + $0x170] sm:$0xf]
          %v1505 = vld [vmem:[%s318 + $0x174] sm:$0xff]
          %v1506 = vld [vmem:[%s318 + $0x17c] sm:$0xf]
          %v1507 = vld [vmem:[%s318 + $0x180] sm:$0xff]
          %v1508 = vld [vmem:[%s318 + $0x188] sm:$0xf]
          %v1509 = vld [vmem:[%s318 + $0x18c] sm:$0xff]
          %v1510 = vld [vmem:[%s318 + $0x194] sm:$0xf]
          %v1511 = vld [vmem:[%s318 + $0x198] sm:$0xff]
          %v1512 = vld [vmem:[%s318 + $0x1a0] sm:$0xf]
          %v1513 = vld [vmem:[%s318 + $0x1a4] sm:$0xff]
          %v1514 = vld [vmem:[%s318 + $0x1ac] sm:$0xf]
          %v1515 = vld [vmem:[%s318 + $0x1b0] sm:$0xff]
          %v1516 = vld [vmem:[%s318 + $0x1b8] sm:$0xf]
          %v1517 = vld [vmem:[%s318 + $0x1bc] sm:$0xff]
          %v1518 = vld [vmem:[%s318 + $0x1c4] sm:$0xf]
          %v1519 = vld [vmem:[%s318 + $0x1c8] sm:$0xff]
          %v1520 = vld [vmem:[%s318 + $0x1d0] sm:$0xf]
          %v1521 = vld [vmem:[%s318 + $0x1d4] sm:$0xff]
          %v1522 = vld [vmem:[%s318 + $0x1dc] sm:$0xf]
          %v1523 = vld [vmem:[%s318 + $0x1e0] sm:$0xff]
          %v1524 = vld [vmem:[%s318 + $0x1e8] sm:$0xf]
          %v1525 = vld [vmem:[%s318 + $0x1ec] sm:$0xff]
          %v1526 = vld [vmem:[%s318 + $0x1f4] sm:$0xf]
          %v1527 = vld [vmem:[%s318 + $0x1f8] sm:$0xff]
          %v1528 = vld [vmem:[%s318 + $0x200] sm:$0xf]
          %v1529 = vld [vmem:[%s318 + $0x204] sm:$0xff]
          %v1530 = vld [vmem:[%s318 + $0x20c] sm:$0xf]
          %v1531 = vld [vmem:[%s318 + $0x210] sm:$0xff]
          %v1532 = vld [vmem:[%s318 + $0x218] sm:$0xf]
          %v1533 = vld [vmem:[%s318 + $0x21c] sm:$0xff]
          %v1534 = vld [vmem:[%s318 + $0x224] sm:$0xf]
          %v1535 = vld [vmem:[%s318 + $0x228] sm:$0xff]
          %v1536 = vld [vmem:[%s318 + $0x230] sm:$0xf]
          %v1537 = vld [vmem:[%s318 + $0x234] sm:$0xff]
          %v1538 = vld [vmem:[%s318 + $0x23c] sm:$0xf]
          %v1635 = vunpack.c.l.b16 %v1443
          %v1636 = vunpack.c.h.b16 %v1443
          %v1637 = vunpack.c.l.b16 %v1444
          %v1638 = vunpack.c.l.b16 %v1445
          %v1639 = vunpack.c.h.b16 %v1445
          %v1640 = vunpack.c.l.b16 %v1446
          %v1641 = vunpack.c.l.b16 %v1447
          %v1642 = vunpack.c.h.b16 %v1447
          %v1643 = vunpack.c.l.b16 %v1448
          %v1644 = vunpack.c.l.b16 %v1449
          %v1645 = vunpack.c.h.b16 %v1449
          %v1646 = vunpack.c.l.b16 %v1450
          %v1647 = vunpack.c.l.b16 %v1451
          %v1648 = vunpack.c.h.b16 %v1451
          %v1649 = vunpack.c.l.b16 %v1452
          %v1650 = vunpack.c.l.b16 %v1453
          %v1651 = vunpack.c.h.b16 %v1453
          %v1652 = vunpack.c.l.b16 %v1454
          %v1653 = vunpack.c.l.b16 %v1455
          %v1654 = vunpack.c.h.b16 %v1455
          %v1655 = vunpack.c.l.b16 %v1456
          %v1656 = vunpack.c.l.b16 %v1457
          %v1657 = vunpack.c.h.b16 %v1457
          %v1658 = vunpack.c.l.b16 %v1458
          %v1659 = vunpack.c.l.b16 %v1459
          %v1660 = vunpack.c.h.b16 %v1459
          %v1661 = vunpack.c.l.b16 %v1460
          %v1662 = vunpack.c.l.b16 %v1461
          %v1663 = vunpack.c.h.b16 %v1461
          %v1664 = vunpack.c.l.b16 %v1462
          %v1665 = vunpack.c.l.b16 %v1463
          %v1666 = vunpack.c.h.b16 %v1463
          %v1667 = vunpack.c.l.b16 %v1464
          %v1668 = vunpack.c.l.b16 %v1465
          %v1669 = vunpack.c.h.b16 %v1465
          %v1670 = vunpack.c.l.b16 %v1466
          %v1671 = vunpack.c.l.b16 %v1467
          %v1672 = vunpack.c.h.b16 %v1467
          %v1673 = vunpack.c.l.b16 %v1468
          %v1674 = vunpack.c.l.b16 %v1469
          %v1675 = vunpack.c.h.b16 %v1469
          %v1676 = vunpack.c.l.b16 %v1470
          %v1677 = vunpack.c.l.b16 %v1471
          %v1678 = vunpack.c.h.b16 %v1471
          %v1679 = vunpack.c.l.b16 %v1472
          %v1680 = vunpack.c.l.b16 %v1473
          %v1681 = vunpack.c.h.b16 %v1473
          %v1682 = vunpack.c.l.b16 %v1474
          %v1683 = vunpack.c.l.b16 %v1475
          %v1684 = vunpack.c.h.b16 %v1475
          %v1685 = vunpack.c.l.b16 %v1476
          %v1686 = vunpack.c.l.b16 %v1477
          %v1687 = vunpack.c.h.b16 %v1477
          %v1688 = vunpack.c.l.b16 %v1478
          %v1689 = vunpack.c.l.b16 %v1479
          %v1690 = vunpack.c.h.b16 %v1479
          %v1691 = vunpack.c.l.b16 %v1480
          %v1692 = vunpack.c.l.b16 %v1481
          %v1693 = vunpack.c.h.b16 %v1481
          %v1694 = vunpack.c.l.b16 %v1482
          %v1695 = vunpack.c.l.b16 %v1483
          %v1696 = vunpack.c.h.b16 %v1483
          %v1697 = vunpack.c.l.b16 %v1484
          %v1698 = vunpack.c.l.b16 %v1485
          %v1699 = vunpack.c.h.b16 %v1485
          %v1700 = vunpack.c.l.b16 %v1486
          %v1701 = vunpack.c.l.b16 %v1487
          %v1702 = vunpack.c.h.b16 %v1487
          %v1703 = vunpack.c.l.b16 %v1488
          %v1704 = vunpack.c.l.b16 %v1489
          %v1705 = vunpack.c.h.b16 %v1489
          %v1706 = vunpack.c.l.b16 %v1490
          %v1707 = vunpack.c.l.b16 %v1491
          %v1708 = vunpack.c.h.b16 %v1491
          %v1709 = vunpack.c.l.b16 %v1492
          %v1710 = vunpack.c.l.b16 %v1493
          %v1711 = vunpack.c.h.b16 %v1493
          %v1712 = vunpack.c.l.b16 %v1494
          %v1713 = vunpack.c.l.b16 %v1495
          %v1714 = vunpack.c.h.b16 %v1495
          %v1715 = vunpack.c.l.b16 %v1496
          %v1716 = vunpack.c.l.b16 %v1497
          %v1717 = vunpack.c.h.b16 %v1497
          %v1718 = vunpack.c.l.b16 %v1498
          %v1719 = vunpack.c.l.b16 %v1499
          %v1720 = vunpack.c.h.b16 %v1499
          %v1721 = vunpack.c.l.b16 %v1500
          %v1722 = vunpack.c.l.b16 %v1501
          %v1723 = vunpack.c.h.b16 %v1501
          %v1724 = vunpack.c.l.b16 %v1502
          %v1725 = vunpack.c.l.b16 %v1503
          %v1726 = vunpack.c.h.b16 %v1503
          %v1727 = vunpack.c.l.b16 %v1504
          %v1728 = vunpack.c.l.b16 %v1505
          %v1729 = vunpack.c.h.b16 %v1505
          %v1730 = vunpack.c.l.b16 %v1506
          %v1731 = vunpack.c.l.b16 %v1507
          %v1732 = vunpack.c.h.b16 %v1507
          %v1733 = vunpack.c.l.b16 %v1508
          %v1734 = vunpack.c.l.b16 %v1509
          %v1735 = vunpack.c.h.b16 %v1509
          %v1736 = vunpack.c.l.b16 %v1510
          %v1737 = vunpack.c.l.b16 %v1511
          %v1738 = vunpack.c.h.b16 %v1511
          %v1739 = vunpack.c.l.b16 %v1512
          %v1740 = vunpack.c.l.b16 %v1513
          %v1741 = vunpack.c.h.b16 %v1513
          %v1742 = vunpack.c.l.b16 %v1514
          %v1743 = vunpack.c.l.b16 %v1515
          %v1744 = vunpack.c.h.b16 %v1515
          %v1745 = vunpack.c.l.b16 %v1516
          %v1746 = vunpack.c.l.b16 %v1517
          %v1747 = vunpack.c.h.b16 %v1517
          %v1748 = vunpack.c.l.b16 %v1518
          %v1749 = vunpack.c.l.b16 %v1519
          %v1750 = vunpack.c.h.b16 %v1519
          %v1751 = vunpack.c.l.b16 %v1520
          %v1752 = vunpack.c.l.b16 %v1521
          %v1753 = vunpack.c.h.b16 %v1521
          %v1754 = vunpack.c.l.b16 %v1522
          %v1755 = vunpack.c.l.b16 %v1523
          %v1756 = vunpack.c.h.b16 %v1523
          %v1757 = vunpack.c.l.b16 %v1524
          %v1758 = vunpack.c.l.b16 %v1525
          %v1759 = vunpack.c.h.b16 %v1525
          %v1760 = vunpack.c.l.b16 %v1526
          %v1761 = vunpack.c.l.b16 %v1527
          %v1762 = vunpack.c.h.b16 %v1527
          %v1763 = vunpack.c.l.b16 %v1528
          %v1764 = vunpack.c.l.b16 %v1529
          %v1765 = vunpack.c.h.b16 %v1529
          %v1766 = vunpack.c.l.b16 %v1530
          %v1767 = vunpack.c.l.b16 %v1531
          %v1768 = vunpack.c.h.b16 %v1531
          %v1769 = vunpack.c.l.b16 %v1532
          %v1770 = vunpack.c.l.b16 %v1533
          %v1771 = vunpack.c.h.b16 %v1533
          %v1772 = vunpack.c.l.b16 %v1534
          %v1773 = vunpack.c.l.b16 %v1535
          %v1774 = vunpack.c.h.b16 %v1535
          %v1775 = vunpack.c.l.b16 %v1536
          %v1776 = vunpack.c.l.b16 %v1537
          %v1777 = vunpack.c.h.b16 %v1537
          %v1778 = vunpack.c.l.b16 %v1538
          %v1779 = vpack.c.b16 %v1638, %v1635
          %v1780 = vpack.c.b16 %v1639, %v1636
          %v1781 = vpack.c.b16 %v1640, %v1637
          %v1782 = vpack.c.b16 %v1644, %v1641
          %v1783 = vpack.c.b16 %v1645, %v1642
          %v1784 = vpack.c.b16 %v1646, %v1643
          %v1785 = vpack.c.b16 %v1650, %v1647
          %v1786 = vpack.c.b16 %v1651, %v1648
          %v1787 = vpack.c.b16 %v1652, %v1649
          %v1788 = vpack.c.b16 %v1656, %v1653
          %v1789 = vpack.c.b16 %v1657, %v1654
          %v1790 = vpack.c.b16 %v1658, %v1655
          %v1791 = vpack.c.b16 %v1662, %v1659
          %v1792 = vpack.c.b16 %v1663, %v1660
          %v1793 = vpack.c.b16 %v1664, %v1661
          %v1794 = vpack.c.b16 %v1668, %v1665
          %v1795 = vpack.c.b16 %v1669, %v1666
          %v1796 = vpack.c.b16 %v1670, %v1667
          %v1797 = vpack.c.b16 %v1674, %v1671
          %v1798 = vpack.c.b16 %v1675, %v1672
          %v1799 = vpack.c.b16 %v1676, %v1673
          %v1800 = vpack.c.b16 %v1680, %v1677
          %v1801 = vpack.c.b16 %v1681, %v1678
          %v1802 = vpack.c.b16 %v1682, %v1679
          %v1803 = vpack.c.b16 %v1686, %v1683
          %v1804 = vpack.c.b16 %v1687, %v1684
          %v1805 = vpack.c.b16 %v1688, %v1685
          %v1806 = vpack.c.b16 %v1692, %v1689
          %v1807 = vpack.c.b16 %v1693, %v1690
          %v1808 = vpack.c.b16 %v1694, %v1691
          %v1809 = vpack.c.b16 %v1698, %v1695
          %v1810 = vpack.c.b16 %v1699, %v1696
          %v1811 = vpack.c.b16 %v1700, %v1697
          %v1812 = vpack.c.b16 %v1704, %v1701
          %v1813 = vpack.c.b16 %v1705, %v1702
          %v1814 = vpack.c.b16 %v1706, %v1703
          %v1815 = vpack.c.b16 %v1710, %v1707
          %v1816 = vpack.c.b16 %v1711, %v1708
          %v1817 = vpack.c.b16 %v1712, %v1709
          %v1818 = vpack.c.b16 %v1716, %v1713
          %v1819 = vpack.c.b16 %v1717, %v1714
          %v1820 = vpack.c.b16 %v1718, %v1715
          %v1821 = vpack.c.b16 %v1722, %v1719
          %v1822 = vpack.c.b16 %v1723, %v1720
          %v1823 = vpack.c.b16 %v1724, %v1721
          %v1824 = vpack.c.b16 %v1728, %v1725
          %v1825 = vpack.c.b16 %v1729, %v1726
          %v1826 = vpack.c.b16 %v1730, %v1727
          %v1827 = vpack.c.b16 %v1734, %v1731
          %v1828 = vpack.c.b16 %v1735, %v1732
          %v1829 = vpack.c.b16 %v1736, %v1733
          %v1830 = vpack.c.b16 %v1740, %v1737
          %v1831 = vpack.c.b16 %v1741, %v1738
          %v1832 = vpack.c.b16 %v1742, %v1739
          %v1833 = vpack.c.b16 %v1746, %v1743
          %v1834 = vpack.c.b16 %v1747, %v1744
          %v1835 = vpack.c.b16 %v1748, %v1745
          %v1836 = vpack.c.b16 %v1752, %v1749
          %v1837 = vpack.c.b16 %v1753, %v1750
          %v1838 = vpack.c.b16 %v1754, %v1751
          %v1839 = vpack.c.b16 %v1758, %v1755
          %v1840 = vpack.c.b16 %v1759, %v1756
          %v1841 = vpack.c.b16 %v1760, %v1757
          %v1842 = vpack.c.b16 %v1764, %v1761
          %v1843 = vpack.c.b16 %v1765, %v1762
          %v1844 = vpack.c.b16 %v1766, %v1763
          %v1845 = vpack.c.b16 %v1770, %v1767
          %v1846 = vpack.c.b16 %v1771, %v1768
          %v1847 = vpack.c.b16 %v1772, %v1769
          %v1848 = vpack.c.b16 %v1776, %v1773
          %v1849 = vpack.c.b16 %v1777, %v1774
          %v1850 = vpack.c.b16 %v1778, %v1775
          %1923 = vmatprep.subr.bf16.mxu0 %v1780
          %1924 = vmatpush1.bf16.msra.mxu0 %v1779
          %1925 = vmatprep.subr.bf16.mxu0 %v1783
          %1926 = vmatpush1.bf16.msra.mxu0 %v1782
          %1927 = vmatprep.subr.bf16.mxu0 %v1786
          %1928 = vmatpush1.bf16.msra.mxu0 %v1785
          %1929 = vmatprep.subr.bf16.mxu0 %v1789
          %1930 = vmatpush1.bf16.msra.mxu0 %v1788
          %1931 = vmatprep.subr.bf16.mxu0 %v1792
          %1932 = vmatpush1.bf16.msra.mxu0 %v1791
          %1933 = vmatprep.subr.bf16.mxu0 %v1795
          %1934 = vmatpush1.bf16.msra.mxu0 %v1794
          %1935 = vmatprep.subr.bf16.mxu0 %v1798
          %1936 = vmatpush1.bf16.msra.mxu0 %v1797
          %1937 = vmatprep.subr.bf16.mxu0 %v1801
          %1938 = vmatpush1.bf16.msra.mxu0 %v1800
          %1939 = vmatprep.subr.bf16.mxu0 %v1804
          %1940 = vmatpush1.bf16.msra.mxu0 %v1803
          %1941 = vmatprep.subr.bf16.mxu0 %v1807
          %1942 = vmatpush1.bf16.msra.mxu0 %v1806
          %1943 = vmatprep.subr.bf16.mxu0 %v1810
          %1944 = vmatpush1.bf16.msra.mxu0 %v1809
          %1945 = vmatprep.subr.bf16.mxu0 %v1813
          %1946 = vmatpush1.bf16.msra.mxu0 %v1812
          %1947 = vmatprep.subr.bf16.mxu0 %v1816
          %1948 = vmatpush1.bf16.msra.mxu0 %v1815
          %1949 = vmatprep.subr.bf16.mxu0 %v1819
          %1950 = vmatpush1.bf16.msra.mxu0 %v1818
          %1951 = vmatprep.subr.bf16.mxu0 %v1822
          %1952 = vmatpush1.bf16.msra.mxu0 %v1821
          %1953 = vmatprep.subr.bf16.mxu0 %v1825
          %1954 = vmatpush1.bf16.msra.mxu0 %v1824
          %1955 = vmatprep.mubr.bf16.mxu0 %v1426
          %1956 = vmatmul.mubr.bf16.gmra.mrb[0].mxu0 %v1425
          %v1957 = vpop.f32.mrb[0].mxu0
          %v1958 = vadd.f32 0.0, %v1957
          %v1959 = vpop.f32.mrb[0].mxu0
          %v1960 = vadd.f32 0.0, %v1959
          %v1961 = vpop.f32.mrb[0].mxu0
          %v1962 = vadd.f32 0.0, %v1961
          %v1963 = vpop.f32.mrb[0].mxu0
          %v1964 = vadd.f32 0.0, %v1963
          %1965 = vmatprep.mubr.bf16.mxu0 %v1429
          %1966 = vmatmul.mubr.bf16.gmra.mrb[0].mxu0 %v1428
          %v1967 = vpop.f32.mrb[0].mxu0
          %v1968 = vadd.f32 0.0, %v1967
          %v1969 = vpop.f32.mrb[0].mxu0
          %v1970 = vadd.f32 0.0, %v1969
          %v1971 = vpop.f32.mrb[0].mxu0
          %v1972 = vadd.f32 0.0, %v1971
          %v1973 = vpop.f32.mrb[0].mxu0
          %v1974 = vadd.f32 0.0, %v1973
          %1975 = vdwg.mxu0
          %1976 = vmatprep.subr.bf16.mxu0 %v1828
          %1977 = vmatpush1.bf16.msra.mxu0 %v1827
          %1978 = vmatprep.subr.bf16.mxu0 %v1831
          %1979 = vmatpush1.bf16.msra.mxu0 %v1830
          %1980 = vmatprep.subr.bf16.mxu0 %v1834
          %1981 = vmatpush1.bf16.msra.mxu0 %v1833
          %1982 = vmatprep.subr.bf16.mxu0 %v1837
          %1983 = vmatpush1.bf16.msra.mxu0 %v1836
          %1984 = vmatprep.subr.bf16.mxu0 %v1840
          %1985 = vmatpush1.bf16.msra.mxu0 %v1839
          %1986 = vmatprep.subr.bf16.mxu0 %v1843
          %1987 = vmatpush1.bf16.msra.mxu0 %v1842
          %1988 = vmatprep.subr.bf16.mxu0 %v1846
          %1989 = vmatpush1.bf16.msra.mxu0 %v1845
          %1990 = vmatprep.subr.bf16.mxu0 %v1849
          %1991 = vmatpush1.bf16.msra.mxu0 %v1848
          %1992 = vmatprep.subr.bf16.mxu0 0
          %1993 = vmatpush1.bf16.msra.mxu0 0
          %1994 = vmatprep.subr.bf16.mxu0 0
          %1995 = vmatpush1.bf16.msra.mxu0 0
          %1996 = vmatprep.subr.bf16.mxu0 0
          %1997 = vmatpush1.bf16.msra.mxu0 0
          %1998 = vmatprep.subr.bf16.mxu0 0
          %1999 = vmatpush1.bf16.msra.mxu0 0
          %2000 = vmatprep.subr.bf16.mxu0 0
          %2001 = vmatpush1.bf16.msra.mxu0 0
          %2002 = vmatprep.subr.bf16.mxu0 0
          %2003 = vmatpush1.bf16.msra.mxu0 0
          %2004 = vmatprep.subr.bf16.mxu0 0
          %2005 = vmatpush1.bf16.msra.mxu0 0
          %2006 = vmatprep.subr.bf16.mxu0 0
          %2007 = vmatpush1.bf16.msra.mxu0 0
          %2008 = vmatprep.mubr.bf16.mxu0 0
          %2009 = vmatmul.mubr.bf16.gmra.mrb[0].mxu0 %v1427
          %v2010 = vpop.f32.mrb[0].mxu0
          %v2011 = vadd.f32 %v1958, %v2010
          %v2012 = vpop.f32.mrb[0].mxu0
          %v2013 = vadd.f32 %v1960, %v2012
          %v2014 = vpop.f32.mrb[0].mxu0
          %v2015 = vadd.f32 %v1962, %v2014
          %v2016 = vpop.f32.mrb[0].mxu0
          %v2017 = vadd.f32 %v1964, %v2016
          %2018 = vmatprep.mubr.bf16.mxu0 0
          %2019 = vmatmul.mubr.bf16.gmra.mrb[0].mxu0 %v1430
          %v2020 = vpop.f32.mrb[0].mxu0
          %v2021 = vadd.f32 %v1968, %v2020
          %v2022 = vpop.f32.mrb[0].mxu0
          %v2023 = vadd.f32 %v1970, %v2022
          %v2024 = vpop.f32.mrb[0].mxu0
          %v2025 = vadd.f32 %v1972, %v2024
          %v2026 = vpop.f32.mrb[0].mxu0
          %v2027 = vadd.f32 %v1974, %v2026
          %2028 = vdwg.mxu0
          %2029 = vmatprep.subr.bf16.mxu0 0
          %2030 = vmatpush1.bf16.msra.mxu0 %v1781
          %2031 = vmatprep.subr.bf16.mxu0 0
          %2032 = vmatpush1.bf16.msra.mxu0 %v1784
          %2033 = vmatprep.subr.bf16.mxu0 0
          %2034 = vmatpush1.bf16.msra.mxu0 %v1787
          %2035 = vmatprep.subr.bf16.mxu0 0
          %2036 = vmatpush1.bf16.msra.mxu0 %v1790
          %2037 = vmatprep.subr.bf16.mxu0 0
          %2038 = vmatpush1.bf16.msra.mxu0 %v1793
          %2039 = vmatprep.subr.bf16.mxu0 0
          %2040 = vmatpush1.bf16.msra.mxu0 %v1796
          %2041 = vmatprep.subr.bf16.mxu0 0
          %2042 = vmatpush1.bf16.msra.mxu0 %v1799
          %2043 = vmatprep.subr.bf16.mxu0 0
          %2044 = vmatpush1.bf16.msra.mxu0 %v1802
          %2045 = vmatprep.subr.bf16.mxu0 0
          %2046 = vmatpush1.bf16.msra.mxu0 %v1805
          %2047 = vmatprep.subr.bf16.mxu0 0
          %2048 = vmatpush1.bf16.msra.mxu0 %v1808
          %2049 = vmatprep.subr.bf16.mxu0 0
          %2050 = vmatpush1.bf16.msra.mxu0 %v1811
          %2051 = vmatprep.subr.bf16.mxu0 0
          %2052 = vmatpush1.bf16.msra.mxu0 %v1814
          %2053 = vmatprep.subr.bf16.mxu0 0
          %2054 = vmatpush1.bf16.msra.mxu0 %v1817
          %2055 = vmatprep.subr.bf16.mxu0 0
          %2056 = vmatpush1.bf16.msra.mxu0 %v1820
          %2057 = vmatprep.subr.bf16.mxu0 0
          %2058 = vmatpush1.bf16.msra.mxu0 %v1823
          %2059 = vmatprep.subr.bf16.mxu0 0
          %2060 = vmatpush1.bf16.msra.mxu0 %v1826
          %2061 = vmatprep.mubr.bf16.mxu0 %v1426
          %2062 = vmatmul.mubr.bf16.gmra.mrb[0].mxu0 %v1425
          %v2063 = vpop.f32.mrb[0].mxu0
          %v2064 = vadd.f32 0.0, %v2063
          %v2065 = vpop.f32.mrb[0].mxu0
          %v2066 = vpop.f32.mrb[0].mxu0
          %v2067 = vadd.f32 0.0, %v2066
          %v2068 = vpop.f32.mrb[0].mxu0
          %2069 = vmatprep.mubr.bf16.mxu0 %v1429
          %2070 = vmatmul.mubr.bf16.gmra.mrb[0].mxu0 %v1428
          %v2071 = vpop.f32.mrb[0].mxu0
          %v2072 = vadd.f32 0.0, %v2071
          %v2073 = vpop.f32.mrb[0].mxu0
          %v2074 = vpop.f32.mrb[0].mxu0
          %v2075 = vadd.f32 0.0, %v2074
          %v2076 = vpop.f32.mrb[0].mxu0
          %2077 = vdwg.mxu0
          %2078 = vmatprep.subr.bf16.mxu0 0
          %2079 = vmatpush1.bf16.msra.mxu0 %v1829
          %2080 = vmatprep.subr.bf16.mxu0 0
          %2081 = vmatpush1.bf16.msra.mxu0 %v1832
          %2082 = vmatprep.subr.bf16.mxu0 0
          %2083 = vmatpush1.bf16.msra.mxu0 %v1835
          %2084 = vmatprep.subr.bf16.mxu0 0
          %2085 = vmatpush1.bf16.msra.mxu0 %v1838
          %2086 = vmatprep.subr.bf16.mxu0 0
          %2087 = vmatpush1.bf16.msra.mxu0 %v1841
          %2088 = vmatprep.subr.bf16.mxu0 0
          %2089 = vmatpush1.bf16.msra.mxu0 %v1844
          %2090 = vmatprep.subr.bf16.mxu0 0
          %2091 = vmatpush1.bf16.msra.mxu0 %v1847
          %2092 = vmatprep.subr.bf16.mxu0 0
          %2093 = vmatpush1.bf16.msra.mxu0 %v1850
          %2094 = vmatprep.subr.bf16.mxu0 0
          %2095 = vmatpush1.bf16.msra.mxu0 0
          %2096 = vmatprep.subr.bf16.mxu0 0
          %2097 = vmatpush1.bf16.msra.mxu0 0
          %2098 = vmatprep.subr.bf16.mxu0 0
          %2099 = vmatpush1.bf16.msra.mxu0 0
          %2100 = vmatprep.subr.bf16.mxu0 0
          %2101 = vmatpush1.bf16.msra.mxu0 0
          %2102 = vmatprep.subr.bf16.mxu0 0
          %2103 = vmatpush1.bf16.msra.mxu0 0
          %2104 = vmatprep.subr.bf16.mxu0 0
          %2105 = vmatpush1.bf16.msra.mxu0 0
          %2106 = vmatprep.subr.bf16.mxu0 0
          %2107 = vmatpush1.bf16.msra.mxu0 0
          %2108 = vmatprep.subr.bf16.mxu0 0
          %2109 = vmatpush1.bf16.msra.mxu0 0
          %2110 = vmatprep.mubr.bf16.mxu0 0
          %2111 = vmatmul.mubr.bf16.gmra.mrb[0].mxu0 %v1427
          %v2112 = vpop.f32.mrb[0].mxu0
          %v2113 = vadd.f32 %v2064, %v2112
          %v2114 = vpop.f32.mrb[0].mxu0
          %v2115 = vpop.f32.mrb[0].mxu0
          %v2116 = vadd.f32 %v2067, %v2115
          %v2117 = vpop.f32.mrb[0].mxu0
          %2118 = vmatprep.mubr.bf16.mxu0 0
          %2119 = vmatmul.mubr.bf16.gmra.mrb[0].mxu0 %v1430
          %v2120 = vpop.f32.mrb[0].mxu0
          %v2121 = vadd.f32 %v2072, %v2120
          %v2122 = vpop.f32.mrb[0].mxu0
          %v2123 = vpop.f32.mrb[0].mxu0
          %v2124 = vadd.f32 %v2075, %v2123
          %v2125 = vpop.f32.mrb[0].mxu0
          %2126 = vdwg.mxu0
          %v2127 = vadd.f32 %v1431, %v2011
          %v2128 = vadd.f32 %v1432, %v2013
          %v2129 = vadd.f32 %v1433, %v2113
          %v2130 = vadd.f32 %v1434, %v2015
          %v2131 = vadd.f32 %v1435, %v2017
          %v2132 = vadd.f32 %v1436, %v2116
          %v2133 = vadd.f32 %v1437, %v2021
          %v2134 = vadd.f32 %v1438, %v2023
          %v2135 = vadd.f32 %v1439, %v2121
          %v2136 = vadd.f32 %v1440, %v2025
          %v2137 = vadd.f32 %v1441, %v2027
          %v2138 = vadd.f32 %v1442, %v2124
          %2139 = vst [vmem:[#allocation4] sm:$0xff] %v2127
          %2140 = vst [vmem:[#allocation4 + $0x8] sm:$0xff] %v2128
          %2141 = vst [vmem:[#allocation4 + $0x10] sm:$0xff] %v2129
          %2142 = vst [vmem:[#allocation4 + $0x18] sm:$0xff] %v2130
          %2143 = vst [vmem:[#allocation4 + $0x20] sm:$0xff] %v2131
          %2144 = vst [vmem:[#allocation4 + $0x28] sm:$0xff] %v2132
          %2145 = vst [vmem:[#allocation4 + $0x30] sm:$0xff] %v2133
          %2146 = vst [vmem:[#allocation4 + $0x38] sm:$0xff] %v2134
          %2147 = vst [vmem:[#allocation4 + $0x40] sm:$0xff] %v2135
          %2148 = vst [vmem:[#allocation4 + $0x48] sm:$0xff] %v2136
          %2149 = vst [vmem:[#allocation4 + $0x50] sm:$0xff] %v2137
          %2150 = vst [vmem:[#allocation4 + $0x58] sm:$0xff] %v2138
        $region76: #{gwnn_forward.2} parent=39 // pred_fallthru
          _
        %p2151 = pnand %p1405, %p373
        %p2152 = pneg %p2151
        // Predicated region
        $region77: #{gwnn_forward.2} parent=39 // pred_check
          _
        $region78: #{gwnn_forward.2} parent=39 // pred_check_branch
          %2154 = sbr.rel (%p2151) target = $region80
        $region79: #{gwnn_forward.2} parent=39 // pred_region
          %v2155 = vld [vmem:[#allocation4] sm:$0xff]
          %v2156 = vld [vmem:[#allocation4 + $0x8] sm:$0xff]
          %v2157 = vld [vmem:[#allocation4 + $0x10] sm:$0xff]
          %v2158 = vld [vmem:[#allocation4 + $0x18] sm:$0xff]
          %v2159 = vld [vmem:[#allocation4 + $0x20] sm:$0xff]
          %v2160 = vld [vmem:[#allocation4 + $0x28] sm:$0xff]
          %v2161 = vld [vmem:[#allocation4 + $0x30] sm:$0xff]
          %v2162 = vld [vmem:[#allocation4 + $0x38] sm:$0xff]
          %v2163 = vld [vmem:[#allocation4 + $0x40] sm:$0xff]
          %v2164 = vld [vmem:[#allocation4 + $0x48] sm:$0xff]
          %v2165 = vld [vmem:[#allocation4 + $0x50] sm:$0xff]
          %v2166 = vld [vmem:[#allocation4 + $0x58] sm:$0xff]
          %v2167 = vmax.f32 %v2155, 0.0
          %v2168 = vmax.f32 %v2156, 0.0
          %v2169 = vmax.f32 %v2157, 0.0
          %v2170 = vmax.f32 %v2158, 0.0
          %v2171 = vmax.f32 %v2159, 0.0
          %v2172 = vmax.f32 %v2160, 0.0
          %v2173 = vmax.f32 %v2161, 0.0
          %v2174 = vmax.f32 %v2162, 0.0
          %v2175 = vmax.f32 %v2163, 0.0
          %v2176 = vmax.f32 %v2164, 0.0
          %v2177 = vmax.f32 %v2165, 0.0
          %v2178 = vmax.f32 %v2166, 0.0
          %v2179 = vpack.c.bf16 %v2170, %v2167
          %v2180 = vpack.c.bf16 %v2171, %v2168
          %v2181 = vpack.c.bf16 %v2172, %v2169
          %v2182 = vpack.c.bf16 %v2176, %v2173
          %v2183 = vpack.c.bf16 %v2177, %v2174
          %v2184 = vpack.c.bf16 %v2178, %v2175
          %v2191 = vunpack.c.l.b16 %v2179
          %v2192 = vunpack.c.l.b16 %v2180
          %v2193 = vunpack.c.l.b16 %v2181
          %v2194 = vunpack.c.h.b16 %v2179
          %v2195 = vunpack.c.h.b16 %v2180
          %v2196 = vunpack.c.h.b16 %v2181
          %v2197 = vunpack.c.l.b16 %v2182
          %v2198 = vunpack.c.l.b16 %v2183
          %v2199 = vunpack.c.l.b16 %v2184
          %v2200 = vunpack.c.h.b16 %v2182
          %v2201 = vunpack.c.h.b16 %v2183
          %v2202 = vunpack.c.h.b16 %v2184
          %v2203 = vpack.c.b16 %v2192, %v2191
          %v2204 = vpack.c.b16 %v2193, %v2193
          %v2205 = vpack.c.b16 %v2195, %v2194
          %v2206 = vpack.c.b16 %v2196, %v2196
          %v2207 = vpack.c.b16 %v2198, %v2197
          %v2208 = vpack.c.b16 %v2199, %v2199
          %v2209 = vpack.c.b16 %v2201, %v2200
          %v2210 = vpack.c.b16 %v2202, %v2202
          %2219 = vst [vmem:[%s365] sm:$0xff] %v2203
          %2220 = vst [vmem:[%s365 + $0x8] sm:$0xf] %v2204
          %2221 = vst [vmem:[%s365 + $0xc] sm:$0xff] %v2205
          %2222 = vst [vmem:[%s365 + $0x14] sm:$0xf] %v2206
          %2223 = vst [vmem:[%s365 + $0x18] sm:$0xff] %v2207
          %2224 = vst [vmem:[%s365 + $0x20] sm:$0xf] %v2208
          %2225 = vst [vmem:[%s365 + $0x24] sm:$0xff] %v2209
          %2226 = vst [vmem:[%s365 + $0x2c] sm:$0xf] %v2210
        $region80: #{gwnn_forward.2} parent=39 // pred_fallthru
          _
        %s2227 = smul.u32 %s24, %s23
        %s2228 = smul.u32 3, %s2227
        %p2229 = scmp.lt.s32.totalorder %s2228, 2
        %s2230 = scalar_select %p2229, %s2228, 2
        %s2231 = smul.addr %s2230, 4
        %s2232 = scalar_lea.vmem %s5, %s2231
        // Predicated region
        $region81: #{gwnn_forward.2} parent=39 // pred_check
          %p2233 = pneg %p186
        $region82: #{gwnn_forward.2} parent=39 // pred_check_branch
          %2235 = sbr.rel (%p2233) target = $region84
        $region83: #{gwnn_forward.2} parent=39 // pred_region
          %s2236 = smul.u32 %s24, %s23
          %s2237 = smul.u32 3, %s2236
        $region84: #{gwnn_forward.2} parent=39 // pred_fallthru
          _
      $region40: #{gwnn_forward.2} parent=5 // pred_fallthru
        _
      %p2238 = scmp.le.s32.totalorder 2, %s13
      // Predicated region
      $region85: #{gwnn_forward.2} parent=5 // pred_check
        %p2239 = pneg %p2238
      $region86: #{gwnn_forward.2} parent=5 // pred_check_branch
        %2241 = sbr.rel (%p2239) target = $region88
      $region87: #{gwnn_forward.2} parent=5 // pred_region
        %s2242 = ssub.s32 %s13, 2
        // Predicated region
        $region89: #{gwnn_forward.2} parent=87 // pred_check
          %p2243 = pneg %p192
        $region90: #{gwnn_forward.2} parent=87 // pred_check_branch
          %2245 = sbr.rel (%p2243) target = $region92
        $region91: #{gwnn_forward.2} parent=87 // pred_region
          %s2246 = smul.u32 %s27, %s26
          %s2247 = smul.u32 3, %s2246
          %p2248 = scmp.lt.s32.totalorder %s2247, 2
          %s2249 = scalar_select %p2248, %s2247, 2
          %s2250 = smul.addr %s2249, 4
          %s2251 = scalar_lea.vmem %s5, %s2250
        $region92: #{gwnn_forward.2} parent=87 // pred_fallthru
          _
      $region88: #{gwnn_forward.2} parent=5 // pred_fallthru
        _
    $region6: #{gwnn_forward.2} parent=1 // loop_footer
      %s17 = sadd.s32 1, %s13
    $region7: #{gwnn_forward.2} parent=1 // loop_footer_branch
      %12 = sbr.rel target = $region3
    $region8: #{gwnn_forward.2} parent=1 // loop_exit
      _
    %2252 = vsyncpa [#allocation6], 1
    %s2253 = scalar_lea.sflag [#allocation6], 1
    %2254 = vsyncpa %s2253, 1
    %2255 = vsyncpa [#allocation8], 1

</llo_original>
